<compile_context>
chip_gen: v6e
topology: v6e:2x2x1
jax: 0.10.0
libtpu: 0.0.40
codegen_flags: <defaults>
</compile_context>

<pallas_src>
import functools

import jax
import jax.numpy as jnp
from jax import lax
from jax.experimental import pallas as pl
from jax.experimental.pallas import tpu as pltpu


# --------------------------------------------------------------------------
# One bidirectional LSTM layer: grid=(2,) over direction, in-kernel time loop.
# --------------------------------------------------------------------------
def _bilstm_layer_kernel(x_ref, wih_ref, whh_ref, b_ref, out_ref, gates_scr,
                         *, hidden, seq_len):
    H = hidden
    T = seq_len
    d = pl.program_id(0)            # 0 = forward direction, 1 = backward

    # Hoisted input projection: one MXU GEMM over all timesteps, bias folded.
    gates_scr[...] = (
        lax.dot_general(x_ref[...], wih_ref[...],
                        (((2,), (0,)), ((), ())),
                        preferred_element_type=jnp.float32)
        + b_ref[...][None])         # (T, B, 4H)

    whh = whh_ref[...]              # (H, 4H)
    batch = x_ref.shape[1]

    def step(t, carry):
        h_prev, c_prev = carry
        row = jnp.where(d == 0, t, T - 1 - t)
        gates = gates_scr[row] + jnp.dot(h_prev, whh,
                                         preferred_element_type=jnp.float32)
        # PyTorch gate order: i, f, g, o (lane-aligned slices for H % 128 == 0).
        i = jax.nn.sigmoid(gates[:, 0:H])
        f = jax.nn.sigmoid(gates[:, H:2 * H])
        g = jnp.tanh(gates[:, 2 * H:3 * H])
        o = jax.nn.sigmoid(gates[:, 3 * H:4 * H])
        c = f * c_prev + i * g
        h = o * jnp.tanh(c)
        out_ref[row] = h.astype(out_ref.dtype)
        return h, c

    zeros = jnp.zeros((batch, H), jnp.float32)
    lax.fori_loop(0, T, step, (zeros, zeros))


def bilstm_layer(x_tbd, w_ih, w_hh, bias):
    """One bidirectional LSTM layer (time-major).

    x_tbd: (T, B, Din)
    w_ih:  (Din, 8H)  columns [0:4H] = forward gates i,f,g,o ; [4H:8H] = backward
    w_hh:  (H, 8H)    same column layout
    bias:  (1, 8H)    combined b_ih + b_hh, same layout
    Returns (T, B, 2H): [:, :, :H] = forward hidden, [:, :, H:] = backward.
    """
    T, B, D = x_tbd.shape
    H = w_hh.shape[0]
    assert w_ih.shape == (D, 8 * H) and bias.shape == (1, 8 * H)
    # Direction-blocked output halves must be lane-tile aligned.
    # TODO(synk): add a masked-store fallback for hidden_dim % 128 != 0.
    assert H % 128 == 0, "hidden_dim must be a multiple of 128"

    kernel = functools.partial(_bilstm_layer_kernel, hidden=H, seq_len=T)
    flops = int(4 * T * B * (D + H) * 4 * H + 20 * T * B * H)
    bytes_accessed = int(4 * (T * B * D + (D + H + 1) * 8 * H + T * B * 2 * H))
    return pl.pallas_call(
        kernel,
        out_shape=jax.ShapeDtypeStruct((T, B, 2 * H), jnp.float32),
        grid_spec=pltpu.PrefetchScalarGridSpec(
            num_scalar_prefetch=0,
            grid=(2,),                                    # fwd / bwd direction
            in_specs=[
                pl.BlockSpec((T, B, D), lambda d: (0, 0, 0)),
                pl.BlockSpec((D, 4 * H), lambda d: (0, d)),
                pl.BlockSpec((H, 4 * H), lambda d: (0, d)),
                pl.BlockSpec((1, 4 * H), lambda d: (0, d)),
            ],
            out_specs=pl.BlockSpec((T, B, H), lambda d: (0, 0, d)),
            scratch_shapes=[pltpu.VMEM((T, B, 4 * H), jnp.float32)],
        ),
        compiler_params=pltpu.CompilerParams(
            dimension_semantics=("parallel",)),           # 2 TCs on v7x
        cost_estimate=pl.CostEstimate(
            flops=flops,
            transcendentals=int(10 * T * B * H),
            bytes_accessed=bytes_accessed),
    )(x_tbd, w_ih, w_hh, bias)


# --------------------------------------------------------------------------
# Head: attention + mean/max pooling + final linear (time-major, batch-tiled).
# --------------------------------------------------------------------------
def _head_kernel(lstm_ref, wattn_ref, battn_ref, ctx_ref, wfc_ref, bfc_ref,
                 out_ref, *, hidden2, inv_t):
    H2 = hidden2
    lstm = lstm_ref[...]                          # (T, TB, 2H) time-major

    # energy = tanh(lstm @ W_attn + b_attn)       (MXU)
    energy = jnp.tanh(
        lax.dot_general(lstm, wattn_ref[...], (((2,), (0,)), ((), ())),
                        preferred_element_type=jnp.float32)
        + battn_ref[...][None])

    # scores = energy . context_vector            (MXU; keeps reduce off XLU)
    scores = lax.dot_general(energy, ctx_ref[...], (((2,), (0,)), ((), ())),
                             preferred_element_type=jnp.float32)  # (T, TB, 1)

    # softmax over time (leading axis -> pure VPU accumulation).
    m = jnp.max(scores, axis=0, keepdims=True)
    e = jnp.exp(scores - m)
    w = e / jnp.sum(e, axis=0, keepdims=True)     # (T, TB, 1)

    attended = jnp.sum(lstm * w, axis=0)          # (TB, 2H)
    mean_out = jnp.sum(lstm, axis=0) * inv_t      # (TB, 2H)
    max_out = jnp.max(lstm, axis=0)               # (TB, 2H)

    # fc on concat([attended, mean, max]) without materializing the concat.
    wfc = wfc_ref[...]                            # (6H, C)
    logits = (jnp.dot(attended, wfc[0:H2], preferred_element_type=jnp.float32)
              + jnp.dot(mean_out, wfc[H2:2 * H2],
                        preferred_element_type=jnp.float32)
              + jnp.dot(max_out, wfc[2 * H2:3 * H2],
                        preferred_element_type=jnp.float32)
              + bfc_ref[...])
    out_ref[...] = logits.astype(out_ref.dtype)


def attention_pool_fc(lstm_tm, attn_w, attn_b, ctx, fc_w, fc_b):
    """lstm_tm: (T, B, 2H) time-major; ctx: (2H, 1); fc_w: (6H, C)."""
    T, B, H2 = lstm_tm.shape
    C = fc_b.shape[-1]
    if B % 8 == 0:
        TB = next(t for t in (128, 64, 32, 16, 8) if B % t == 0)
    else:
        TB = B

    kernel = functools.partial(_head_kernel, hidden2=H2, inv_t=1.0 / T)
    flops = int(2 * B * T * H2 * (H2 + 1) + 8 * B * T * H2 + 6 * B * H2 * C)
    bytes_accessed = int(4 * (T * B * H2 + H2 * H2 + 2 * H2 + 3 * H2 * C
                              + C + B * C))
    return pl.pallas_call(
        kernel,
        out_shape=jax.ShapeDtypeStruct((B, C), jnp.float32),
        grid_spec=pltpu.PrefetchScalarGridSpec(
            num_scalar_prefetch=0,
            grid=(B // TB,),
            in_specs=[
                pl.BlockSpec((T, TB, H2), lambda b: (0, b, 0)),
                pl.BlockSpec((H2, H2), lambda b: (0, 0)),
                pl.BlockSpec((1, H2), lambda b: (0, 0)),
                pl.BlockSpec((H2, 1), lambda b: (0, 0)),
                pl.BlockSpec((3 * H2, C), lambda b: (0, 0)),
                pl.BlockSpec((1, C), lambda b: (0, 0)),
            ],
            out_specs=pl.BlockSpec((TB, C), lambda b: (b, 0)),
        ),
        compiler_params=pltpu.CompilerParams(
            dimension_semantics=("parallel",)),
        cost_estimate=pl.CostEstimate(
            flops=flops,
            transcendentals=int(B * T * (H2 + 1)),
            bytes_accessed=bytes_accessed),
    )(lstm_tm, attn_w, attn_b, ctx, fc_w, fc_b)


# --------------------------------------------------------------------------
# Full forward pass (embedding gather is plain-JAX glue, done time-major).
# --------------------------------------------------------------------------
def enhanced_bilstm_forward(x_ids, params):
    emb = params["embedding"][x_ids.T]            # (T, B, E) time-major gather
    h = emb
    for lp in params["lstm"]:
        h = bilstm_layer(h, lp["w_ih"], lp["w_hh"], lp["b"])
    return attention_pool_fc(h, params["attn_w"], params["attn_b"],
                             params["ctx"], params["fc_w"], params["fc_b"])


# --------------------------------------------------------------------------
# Deterministic parameter init (shapes match the PyTorch module, fwd|bwd
# direction weights stacked along the gate/column axis).
# --------------------------------------------------------------------------
def init_params(key, vocab_size, embed_dim, hidden_dim, num_layers,
                num_classes):
    keys = iter(jax.random.split(key, 8 + num_layers * 6))

    def uniform(k, shape, scale):
        return jax.random.uniform(k, shape, jnp.float32, -scale, scale)

    emb = jax.random.normal(next(keys), (vocab_size, embed_dim), jnp.float32)
    emb = emb.at[0].set(0.0)                      # padding_idx=0

    lstm_layers = []
    sc = 1.0 / float(hidden_dim) ** 0.5
    for layer in range(num_layers):
        d_in = embed_dim if layer == 0 else 2 * hidden_dim
        w_ih = jnp.concatenate(
            [uniform(next(keys), (d_in, 4 * hidden_dim), sc)
             for _ in range(2)], axis=1)          # (Din, 8H): [fwd | bwd]
        w_hh = jnp.concatenate(
            [uniform(next(keys), (hidden_dim, 4 * hidden_dim), sc)
             for _ in range(2)], axis=1)          # (H, 8H)
        b = jnp.concatenate(
            [uniform(next(keys), (1, 4 * hidden_dim), sc)
             for _ in range(2)], axis=1)          # (1, 8H): b_ih + b_hh folded
        lstm_layers.append({"w_ih": w_ih, "w_hh": w_hh, "b": b})

    h2 = 2 * hidden_dim
    sa = 1.0 / float(h2) ** 0.5
    attn_w = uniform(next(keys), (h2, h2), sa)    # Linear weight (transposed)
    attn_b = uniform(next(keys), (1, h2), sa)
    ctx = jax.random.normal(next(keys), (h2, 1), jnp.float32)

    sf = 1.0 / float(3 * h2) ** 0.5
    fc_w = uniform(next(keys), (3 * h2, num_classes), sf)
    fc_b = uniform(next(keys), (1, num_classes), sf)

    return {"embedding": emb, "lstm": lstm_layers, "attn_w": attn_w,
            "attn_b": attn_b, "ctx": ctx, "fc_w": fc_w, "fc_b": fc_b}


# --------------------------------------------------------------------------
# Pure-JAX reference (for correctness check).
# --------------------------------------------------------------------------
def _ref_lstm_dir(x, w_ih, w_hh, b, reverse):
    H = w_hh.shape[0]
    xs = x[::-1] if reverse else x

    def step(carry, xt):
        h, c = carry
        gates = xt @ w_ih + h @ w_hh + b
        i = jax.nn.sigmoid(gates[:, :H])
        f = jax.nn.sigmoid(gates[:, H:2 * H])
        g = jnp.tanh(gates[:, 2 * H:3 * H])
        o = jax.nn.sigmoid(gates[:, 3 * H:4 * H])
        c = f * c + i * g
        h = o * jnp.tanh(c)
        return (h, c), h

    B = x.shape[1]
    init = (jnp.zeros((B, H), jnp.float32), jnp.zeros((B, H), jnp.float32))
    _, hs = lax.scan(step, init, xs)
    return hs[::-1] if reverse else hs


def reference_forward(x_ids, params):
    h = params["embedding"][x_ids.T]              # (T, B, E)
    for lp in params["lstm"]:
        H4 = lp["w_hh"].shape[1] // 2
        fwd = _ref_lstm_dir(h, lp["w_ih"][:, :H4], lp["w_hh"][:, :H4],
                            lp["b"][:, :H4], reverse=False)
        bwd = _ref_lstm_dir(h, lp["w_ih"][:, H4:], lp["w_hh"][:, H4:],
                            lp["b"][:, H4:], reverse=True)
        h = jnp.concatenate([fwd, bwd], axis=-1)
    lstm_out = jnp.transpose(h, (1, 0, 2))        # (B, T, 2H)
    energy = jnp.tanh(lstm_out @ params["attn_w"] + params["attn_b"])
    scores = jnp.einsum("btd,d->bt", energy, params["ctx"][:, 0])
    w = jax.nn.softmax(scores, axis=1)
    attended = jnp.sum(lstm_out * w[:, :, None], axis=1)
    mean_out = jnp.mean(lstm_out, axis=1)
    max_out = jnp.max(lstm_out, axis=1)
    combined = jnp.concatenate([attended, mean_out, max_out], axis=1)
    return combined @ params["fc_w"] + params["fc_b"]


if __name__ == "__main__":
    B, T = 2, 8
    vocab_size, embed_dim, hidden_dim = 64, 32, 128
    num_layers, num_classes = 2, 2

    key = jax.random.PRNGKey(0)
    pkey, xkey = jax.random.split(key)
    params = init_params(pkey, vocab_size, embed_dim, hidden_dim,
                         num_layers, num_classes)
    x = jax.random.randint(xkey, (B, T), 0, vocab_size, dtype=jnp.int32)

    fwd_fn = jax.jit(enhanced_bilstm_forward)
    logits = jax.block_until_ready(fwd_fn(x, params))

    ref = reference_forward(x, params)
    assert logits.shape == (B, num_classes)
    assert jnp.allclose(logits, ref, atol=1e-3, rtol=1e-3), (logits, ref)
    print("KERNEL_OK")
</pallas_src>

<mosaic_0001>
module attributes {stable_mosaic.version = 11 : i64} {
  func.func @_bilstm_layer_kernel(%arg0: i32, %arg1: memref<8x2x256xf32, #tpu.memory_space<vmem>>, %arg2: memref<256x512xf32, #tpu.memory_space<vmem>>, %arg3: memref<128x512xf32, #tpu.memory_space<vmem>>, %arg4: memref<1x512xf32, #tpu.memory_space<vmem>>, %arg5: memref<8x2x128xf32, #tpu.memory_space<vmem>>, %arg6: memref<8x2x512xf32, #tpu.memory_space<vmem>>) attributes {dimension_semantics = [#tpu.dimension_semantics<parallel>], iteration_bounds = array<i64: 2>, scalar_prefetch = 0 : i64, scratch_operands = 1 : i64, tpu.core_type = #tpu.core_type<tc>, window_params = [{pipeline_mode = #tpu.pipeline_mode<synchronous>, transform_indices = @transform_0, window_bounds = array<i64: 8, 2, 256>}, {transform_indices = @transform_1, window_bounds = array<i64: 256, 512>}, {transform_indices = @transform_2, window_bounds = array<i64: 128, 512>}, {transform_indices = @transform_3, window_bounds = array<i64: 1, 512>}, {transform_indices = @transform_4, window_bounds = array<i64: 8, 2, 128>}]} {
    %c0 = arith.constant 0 : index
    %c0_0 = arith.constant 0 : index
    %c0_1 = arith.constant 0 : index
    %0 = vector.load %arg1[%c0, %c0_0, %c0_1] : memref<8x2x256xf32, #tpu.memory_space<vmem>>, vector<8x2x256xf32>
    %c0_2 = arith.constant 0 : index
    %c0_3 = arith.constant 0 : index
    %1 = vector.load %arg2[%c0_2, %c0_3] : memref<256x512xf32, #tpu.memory_space<vmem>>, vector<256x512xf32>
    %cst = arith.constant dense<0.000000e+00> : vector<8x2x512xf32>
    %2 = tpu.matmul %0, %1, %cst {dimension_numbers = #tpu.dot_dimension_numbers<[2], [0], [0, 1], [1], [0, 0, 0, 1, 1, 1], [], []>} : vector<8x2x256xf32>, vector<256x512xf32>, vector<8x2x512xf32> -> vector<8x2x512xf32>
    %c0_4 = arith.constant 0 : index
    %c0_5 = arith.constant 0 : index
    %3 = vector.load %arg4[%c0_4, %c0_5] : memref<1x512xf32, #tpu.memory_space<vmem>>, vector<1x512xf32>
    %4 = vector.shape_cast %3 : vector<1x512xf32> to vector<1x1x512xf32>
    %5 = vector.broadcast %4 : vector<1x1x512xf32> to vector<8x2x512xf32>
    %6 = arith.addf %2, %5 : vector<8x2x512xf32>
    %c0_6 = arith.constant 0 : index
    %c0_7 = arith.constant 0 : index
    %c0_8 = arith.constant 0 : index
    %7 = vector.load %arg6[%c0_6, %c0_7, %c0_8] : memref<8x2x512xf32, #tpu.memory_space<vmem>>, vector<8x2x512xf32>
    tpu.vector_store %arg6[%c0_6, %c0_7, %c0_8], %6 {strides = array<i32>} : memref<8x2x512xf32, #tpu.memory_space<vmem>>, vector<8x2x512xf32>,
    %c0_9 = arith.constant 0 : index
    %c0_10 = arith.constant 0 : index
    %8 = vector.load %arg3[%c0_9, %c0_10] : memref<128x512xf32, #tpu.memory_space<vmem>>, vector<128x512xf32>
    %cst_11 = arith.constant 0.000000e+00 : f32
    %9 = vector.broadcast %cst_11 : f32 to vector<2x128xf32>
    %c0_i32 = arith.constant 0 : i32
    %c8_i32 = arith.constant 8 : i32
    %10 = arith.addi %c0_i32, %c8_i32 : i32
    %c1_i32 = arith.constant 1 : i32
    %11:2 = scf.for %arg7 = %c0_i32 to %10 step %c1_i32 iter_args(%arg8 = %9, %arg9 = %9) -> (vector<2x128xf32>, vector<2x128xf32>)  : i32 {
      %c0_i32_13 = arith.constant 0 : i32
      %12 = arith.cmpi eq, %arg0, %c0_i32_13 : i32
      %c7_i32 = arith.constant 7 : i32
      %13 = arith.subi %c7_i32, %arg7 : i32
      %14 = arith.select %12, %arg7, %13 : i32
      %15 = arith.index_cast %14 : i32 to index
      %c0_14 = arith.constant 0 : index
      %c0_15 = arith.constant 0 : index
      %16 = vector.load %arg6[%15, %c0_14, %c0_15] : memref<8x2x512xf32, #tpu.memory_space<vmem>>, vector<1x2x512xf32>
      %17 = vector.shape_cast %16 : vector<1x2x512xf32> to vector<2x512xf32>
      %cst_16 = arith.constant dense<0.000000e+00> : vector<2x512xf32>
      %18 = tpu.matmul %arg8, %8, %cst_16 {dimension_numbers = #tpu.dot_dimension_numbers<[1], [0], [0], [1], [0, 0, 1, 1], [], []>} : vector<2x128xf32>, vector<128x512xf32>, vector<2x512xf32> -> vector<2x512xf32>
      %19 = arith.addf %17, %18 : vector<2x512xf32>
      %20 = vector.extract_strided_slice %19 {offsets = [0, 0], sizes = [2, 128], strides = [1, 1]} : vector<2x512xf32> to vector<2x128xf32>
      %21 = arith.negf %20 : vector<2x128xf32>
      %22 = math.exp %21 : vector<2x128xf32>
      %cst_17 = arith.constant 1.000000e+00 : f32
      %23 = vector.broadcast %cst_17 : f32 to vector<2x128xf32>
      %24 = arith.addf %23, %22 : vector<2x128xf32>
      %25 = arith.divf %23, %24 : vector<2x128xf32>
      %26 = vector.extract_strided_slice %19 {offsets = [0, 128], sizes = [2, 128], strides = [1, 1]} : vector<2x512xf32> to vector<2x128xf32>
      %27 = arith.negf %26 : vector<2x128xf32>
      %28 = math.exp %27 : vector<2x128xf32>
      %cst_18 = arith.constant 1.000000e+00 : f32
      %29 = vector.broadcast %cst_18 : f32 to vector<2x128xf32>
      %30 = arith.addf %29, %28 : vector<2x128xf32>
      %31 = arith.divf %29, %30 : vector<2x128xf32>
      %32 = vector.extract_strided_slice %19 {offsets = [0, 256], sizes = [2, 128], strides = [1, 1]} : vector<2x512xf32> to vector<2x128xf32>
      %33 = math.tanh %32 : vector<2x128xf32>
      %34 = vector.extract_strided_slice %19 {offsets = [0, 384], sizes = [2, 128], strides = [1, 1]} : vector<2x512xf32> to vector<2x128xf32>
      %35 = arith.negf %34 : vector<2x128xf32>
      %36 = math.exp %35 : vector<2x128xf32>
      %cst_19 = arith.constant 1.000000e+00 : f32
      %37 = vector.broadcast %cst_19 : f32 to vector<2x128xf32>
      %38 = arith.addf %37, %36 : vector<2x128xf32>
      %39 = arith.divf %37, %38 : vector<2x128xf32>
      %40 = arith.mulf %31, %arg9 : vector<2x128xf32>
      %41 = arith.mulf %25, %33 : vector<2x128xf32>
      %42 = arith.addf %40, %41 : vector<2x128xf32>
      %43 = math.tanh %42 : vector<2x128xf32>
      %44 = arith.mulf %39, %43 : vector<2x128xf32>
      %45 = arith.index_cast %14 : i32 to index
      %c0_20 = arith.constant 0 : index
      %c0_21 = arith.constant 0 : index
      %46 = vector.load %arg5[%45, %c0_20, %c0_21] : memref<8x2x128xf32, #tpu.memory_space<vmem>>, vector<1x2x128xf32>
      %47 = vector.shape_cast %46 : vector<1x2x128xf32> to vector<2x128xf32>
      %48 = vector.shape_cast %44 : vector<2x128xf32> to vector<1x2x128xf32>
      tpu.vector_store %arg5[%45, %c0_20, %c0_21], %48 {strides = array<i32>} : memref<8x2x128xf32, #tpu.memory_space<vmem>>, vector<1x2x128xf32>,
      scf.yield %44, %42 : vector<2x128xf32>, vector<2x128xf32>
    }
    %c8_i32_12 = arith.constant 8 : i32
    return
  }
  func.func @transform_0(%arg0: i32) -> (i32, i32, i32) {
    %c0_i32 = arith.constant 0 : i32
    %c0_i32_0 = arith.constant 0 : i32
    %c0_i32_1 = arith.constant 0 : i32
    %c0_i32_2 = arith.constant 0 : i32
    return %c0_i32, %c0_i32_0, %c0_i32_1 : i32, i32, i32
  }
  func.func @transform_1(%arg0: i32) -> (i32, i32) {
    %c0_i32 = arith.constant 0 : i32
    %c0_i32_0 = arith.constant 0 : i32
    return %c0_i32, %arg0 : i32, i32
  }
  func.func @transform_2(%arg0: i32) -> (i32, i32) {
    %c0_i32 = arith.constant 0 : i32
    %c0_i32_0 = arith.constant 0 : i32
    return %c0_i32, %arg0 : i32, i32
  }
  func.func @transform_3(%arg0: i32) -> (i32, i32) {
    %c0_i32 = arith.constant 0 : i32
    %c0_i32_0 = arith.constant 0 : i32
    return %c0_i32, %arg0 : i32, i32
  }
  func.func @transform_4(%arg0: i32) -> (i32, i32, i32) {
    %c0_i32 = arith.constant 0 : i32
    %c0_i32_0 = arith.constant 0 : i32
    %c0_i32_1 = arith.constant 0 : i32
    return %c0_i32, %c0_i32_0, %arg0 : i32, i32, i32
  }
}

module attributes {stable_mosaic.version = 11 : i64} {
  func.func @_bilstm_layer_kernel(%arg0: i32, %arg1: memref<8x2x32xf32, #tpu.memory_space<vmem>>, %arg2: memref<32x512xf32, #tpu.memory_space<vmem>>, %arg3: memref<128x512xf32, #tpu.memory_space<vmem>>, %arg4: memref<1x512xf32, #tpu.memory_space<vmem>>, %arg5: memref<8x2x128xf32, #tpu.memory_space<vmem>>, %arg6: memref<8x2x512xf32, #tpu.memory_space<vmem>>) attributes {dimension_semantics = [#tpu.dimension_semantics<parallel>], iteration_bounds = array<i64: 2>, scalar_prefetch = 0 : i64, scratch_operands = 1 : i64, tpu.core_type = #tpu.core_type<tc>, window_params = [{pipeline_mode = #tpu.pipeline_mode<synchronous>, transform_indices = @transform_0, window_bounds = array<i64: 8, 2, 32>}, {transform_indices = @transform_1, window_bounds = array<i64: 32, 512>}, {transform_indices = @transform_2, window_bounds = array<i64: 128, 512>}, {transform_indices = @transform_3, window_bounds = array<i64: 1, 512>}, {transform_indices = @transform_4, window_bounds = array<i64: 8, 2, 128>}]} {
    %c0 = arith.constant 0 : index
    %c0_0 = arith.constant 0 : index
    %c0_1 = arith.constant 0 : index
    %0 = vector.load %arg1[%c0, %c0_0, %c0_1] : memref<8x2x32xf32, #tpu.memory_space<vmem>>, vector<8x2x32xf32>
    %c0_2 = arith.constant 0 : index
    %c0_3 = arith.constant 0 : index
    %1 = vector.load %arg2[%c0_2, %c0_3] : memref<32x512xf32, #tpu.memory_space<vmem>>, vector<32x512xf32>
    %cst = arith.constant dense<0.000000e+00> : vector<8x2x512xf32>
    %2 = tpu.matmul %0, %1, %cst {dimension_numbers = #tpu.dot_dimension_numbers<[2], [0], [0, 1], [1], [0, 0, 0, 1, 1, 1], [], []>} : vector<8x2x32xf32>, vector<32x512xf32>, vector<8x2x512xf32> -> vector<8x2x512xf32>
    %c0_4 = arith.constant 0 : index
    %c0_5 = arith.constant 0 : index
    %3 = vector.load %arg4[%c0_4, %c0_5] : memref<1x512xf32, #tpu.memory_space<vmem>>, vector<1x512xf32>
    %4 = vector.shape_cast %3 : vector<1x512xf32> to vector<1x1x512xf32>
    %5 = vector.broadcast %4 : vector<1x1x512xf32> to vector<8x2x512xf32>
    %6 = arith.addf %2, %5 : vector<8x2x512xf32>
    %c0_6 = arith.constant 0 : index
    %c0_7 = arith.constant 0 : index
    %c0_8 = arith.constant 0 : index
    %7 = vector.load %arg6[%c0_6, %c0_7, %c0_8] : memref<8x2x512xf32, #tpu.memory_space<vmem>>, vector<8x2x512xf32>
    tpu.vector_store %arg6[%c0_6, %c0_7, %c0_8], %6 {strides = array<i32>} : memref<8x2x512xf32, #tpu.memory_space<vmem>>, vector<8x2x512xf32>,
    %c0_9 = arith.constant 0 : index
    %c0_10 = arith.constant 0 : index
    %8 = vector.load %arg3[%c0_9, %c0_10] : memref<128x512xf32, #tpu.memory_space<vmem>>, vector<128x512xf32>
    %cst_11 = arith.constant 0.000000e+00 : f32
    %9 = vector.broadcast %cst_11 : f32 to vector<2x128xf32>
    %c0_i32 = arith.constant 0 : i32
    %c8_i32 = arith.constant 8 : i32
    %10 = arith.addi %c0_i32, %c8_i32 : i32
    %c1_i32 = arith.constant 1 : i32
    %11:2 = scf.for %arg7 = %c0_i32 to %10 step %c1_i32 iter_args(%arg8 = %9, %arg9 = %9) -> (vector<2x128xf32>, vector<2x128xf32>)  : i32 {
      %c0_i32_13 = arith.constant 0 : i32
      %12 = arith.cmpi eq, %arg0, %c0_i32_13 : i32
      %c7_i32 = arith.constant 7 : i32
      %13 = arith.subi %c7_i32, %arg7 : i32
      %14 = arith.select %12, %arg7, %13 : i32
      %15 = arith.index_cast %14 : i32 to index
      %c0_14 = arith.constant 0 : index
      %c0_15 = arith.constant 0 : index
      %16 = vector.load %arg6[%15, %c0_14, %c0_15] : memref<8x2x512xf32, #tpu.memory_space<vmem>>, vector<1x2x512xf32>
      %17 = vector.shape_cast %16 : vector<1x2x512xf32> to vector<2x512xf32>
      %cst_16 = arith.constant dense<0.000000e+00> : vector<2x512xf32>
      %18 = tpu.matmul %arg8, %8, %cst_16 {dimension_numbers = #tpu.dot_dimension_numbers<[1], [0], [0], [1], [0, 0, 1, 1], [], []>} : vector<2x128xf32>, vector<128x512xf32>, vector<2x512xf32> -> vector<2x512xf32>
      %19 = arith.addf %17, %18 : vector<2x512xf32>
      %20 = vector.extract_strided_slice %19 {offsets = [0, 0], sizes = [2, 128], strides = [1, 1]} : vector<2x512xf32> to vector<2x128xf32>
      %21 = arith.negf %20 : vector<2x128xf32>
      %22 = math.exp %21 : vector<2x128xf32>
      %cst_17 = arith.constant 1.000000e+00 : f32
      %23 = vector.broadcast %cst_17 : f32 to vector<2x128xf32>
      %24 = arith.addf %23, %22 : vector<2x128xf32>
      %25 = arith.divf %23, %24 : vector<2x128xf32>
      %26 = vector.extract_strided_slice %19 {offsets = [0, 128], sizes = [2, 128], strides = [1, 1]} : vector<2x512xf32> to vector<2x128xf32>
      %27 = arith.negf %26 : vector<2x128xf32>
      %28 = math.exp %27 : vector<2x128xf32>
      %cst_18 = arith.constant 1.000000e+00 : f32
      %29 = vector.broadcast %cst_18 : f32 to vector<2x128xf32>
      %30 = arith.addf %29, %28 : vector<2x128xf32>
      %31 = arith.divf %29, %30 : vector<2x128xf32>
      %32 = vector.extract_strided_slice %19 {offsets = [0, 256], sizes = [2, 128], strides = [1, 1]} : vector<2x512xf32> to vector<2x128xf32>
      %33 = math.tanh %32 : vector<2x128xf32>
      %34 = vector.extract_strided_slice %19 {offsets = [0, 384], sizes = [2, 128], strides = [1, 1]} : vector<2x512xf32> to vector<2x128xf32>
      %35 = arith.negf %34 : vector<2x128xf32>
      %36 = math.exp %35 : vector<2x128xf32>
      %cst_19 = arith.constant 1.000000e+00 : f32
      %37 = vector.broadcast %cst_19 : f32 to vector<2x128xf32>
      %38 = arith.addf %37, %36 : vector<2x128xf32>
      %39 = arith.divf %37, %38 : vector<2x128xf32>
      %40 = arith.mulf %31, %arg9 : vector<2x128xf32>
      %41 = arith.mulf %25, %33 : vector<2x128xf32>
      %42 = arith.addf %40, %41 : vector<2x128xf32>
      %43 = math.tanh %42 : vector<2x128xf32>
      %44 = arith.mulf %39, %43 : vector<2x128xf32>
      %45 = arith.index_cast %14 : i32 to index
      %c0_20 = arith.constant 0 : index
      %c0_21 = arith.constant 0 : index
      %46 = vector.load %arg5[%45, %c0_20, %c0_21] : memref<8x2x128xf32, #tpu.memory_space<vmem>>, vector<1x2x128xf32>
      %47 = vector.shape_cast %46 : vector<1x2x128xf32> to vector<2x128xf32>
      %48 = vector.shape_cast %44 : vector<2x128xf32> to vector<1x2x128xf32>
      tpu.vector_store %arg5[%45, %c0_20, %c0_21], %48 {strides = array<i32>} : memref<8x2x128xf32, #tpu.memory_space<vmem>>, vector<1x2x128xf32>,
      scf.yield %44, %42 : vector<2x128xf32>, vector<2x128xf32>
    }
    %c8_i32_12 = arith.constant 8 : i32
    return
  }
  func.func @transform_0(%arg0: i32) -> (i32, i32, i32) {
    %c0_i32 = arith.constant 0 : i32
    %c0_i32_0 = arith.constant 0 : i32
    %c0_i32_1 = arith.constant 0 : i32
    %c0_i32_2 = arith.constant 0 : i32
    return %c0_i32, %c0_i32_0, %c0_i32_1 : i32, i32, i32
  }
  func.func @transform_1(%arg0: i32) -> (i32, i32) {
    %c0_i32 = arith.constant 0 : i32
    %c0_i32_0 = arith.constant 0 : i32
    return %c0_i32, %arg0 : i32, i32
  }
  func.func @transform_2(%arg0: i32) -> (i32, i32) {
    %c0_i32 = arith.constant 0 : i32
    %c0_i32_0 = arith.constant 0 : i32
    return %c0_i32, %arg0 : i32, i32
  }
  func.func @transform_3(%arg0: i32) -> (i32, i32) {
    %c0_i32 = arith.constant 0 : i32
    %c0_i32_0 = arith.constant 0 : i32
    return %c0_i32, %arg0 : i32, i32
  }
  func.func @transform_4(%arg0: i32) -> (i32, i32, i32) {
    %c0_i32 = arith.constant 0 : i32
    %c0_i32_0 = arith.constant 0 : i32
    %c0_i32_1 = arith.constant 0 : i32
    return %c0_i32, %c0_i32_0, %arg0 : i32, i32, i32
  }
}

module attributes {stable_mosaic.version = 11 : i64} {
  func.func @_head_kernel(%arg0: i32, %arg1: memref<8x2x256xf32, #tpu.memory_space<vmem>>, %arg2: memref<256x256xf32, #tpu.memory_space<vmem>>, %arg3: memref<1x256xf32, #tpu.memory_space<vmem>>, %arg4: memref<256x1xf32, #tpu.memory_space<vmem>>, %arg5: memref<768x2xf32, #tpu.memory_space<vmem>>, %arg6: memref<1x2xf32, #tpu.memory_space<vmem>>, %arg7: memref<2x2xf32, #tpu.memory_space<vmem>>) attributes {dimension_semantics = [#tpu.dimension_semantics<parallel>], iteration_bounds = array<i64: 1>, scalar_prefetch = 0 : i64, scratch_operands = 0 : i64, tpu.core_type = #tpu.core_type<tc>, window_params = [{transform_indices = @transform_0, window_bounds = array<i64: 8, 2, 256>}, {pipeline_mode = #tpu.pipeline_mode<synchronous>, transform_indices = @transform_1, window_bounds = array<i64: 256, 256>}, {pipeline_mode = #tpu.pipeline_mode<synchronous>, transform_indices = @transform_2, window_bounds = array<i64: 1, 256>}, {pipeline_mode = #tpu.pipeline_mode<synchronous>, transform_indices = @transform_3, window_bounds = array<i64: 256, 1>}, {pipeline_mode = #tpu.pipeline_mode<synchronous>, transform_indices = @transform_4, window_bounds = array<i64: 768, 2>}, {pipeline_mode = #tpu.pipeline_mode<synchronous>, transform_indices = @transform_5, window_bounds = array<i64: 1, 2>}, {transform_indices = @transform_6, window_bounds = array<i64: 2, 2>}]} {
    %c0 = arith.constant 0 : index
    %c0_0 = arith.constant 0 : index
    %c0_1 = arith.constant 0 : index
    %0 = vector.load %arg1[%c0, %c0_0, %c0_1] : memref<8x2x256xf32, #tpu.memory_space<vmem>>, vector<8x2x256xf32>
    %c0_2 = arith.constant 0 : index
    %c0_3 = arith.constant 0 : index
    %1 = vector.load %arg2[%c0_2, %c0_3] : memref<256x256xf32, #tpu.memory_space<vmem>>, vector<256x256xf32>
    %cst = arith.constant dense<0.000000e+00> : vector<8x2x256xf32>
    %2 = tpu.matmul %0, %1, %cst {dimension_numbers = #tpu.dot_dimension_numbers<[2], [0], [0, 1], [1], [0, 0, 0, 1, 1, 1], [], []>} : vector<8x2x256xf32>, vector<256x256xf32>, vector<8x2x256xf32> -> vector<8x2x256xf32>
    %c0_4 = arith.constant 0 : index
    %c0_5 = arith.constant 0 : index
    %3 = vector.load %arg3[%c0_4, %c0_5] : memref<1x256xf32, #tpu.memory_space<vmem>>, vector<1x256xf32>
    %4 = vector.shape_cast %3 : vector<1x256xf32> to vector<1x1x256xf32>
    %5 = vector.broadcast %4 : vector<1x1x256xf32> to vector<8x2x256xf32>
    %6 = arith.addf %2, %5 : vector<8x2x256xf32>
    %7 = math.tanh %6 : vector<8x2x256xf32>
    %c0_6 = arith.constant 0 : index
    %c0_7 = arith.constant 0 : index
    %8 = vector.load %arg4[%c0_6, %c0_7] : memref<256x1xf32, #tpu.memory_space<vmem>>, vector<256x1xf32>
    %cst_8 = arith.constant dense<0.000000e+00> : vector<8x2x1xf32>
    %9 = tpu.matmul %7, %8, %cst_8 {dimension_numbers = #tpu.dot_dimension_numbers<[2], [0], [0, 1], [1], [0, 0, 0, 1, 1, 1], [], []>} : vector<8x2x256xf32>, vector<256x1xf32>, vector<8x2x1xf32> -> vector<8x2x1xf32>
    %cst_9 = arith.constant dense<0xFF800000> : vector<2x1xf32>
    %10 = vector.multi_reduction <maximumf>, %9, %cst_9 [0] : vector<8x2x1xf32> to vector<2x1xf32>
    %11 = vector.shape_cast %10 : vector<2x1xf32> to vector<1x2x1xf32>
    %12 = vector.broadcast %11 : vector<1x2x1xf32> to vector<8x2x1xf32>
    %13 = arith.subf %9, %12 : vector<8x2x1xf32>
    %14 = math.exp %13 : vector<8x2x1xf32>
    %cst_10 = arith.constant dense<0.000000e+00> : vector<2x1xf32>
    %15 = vector.multi_reduction <add>, %14, %cst_10 [0] : vector<8x2x1xf32> to vector<2x1xf32>
    %16 = vector.shape_cast %15 : vector<2x1xf32> to vector<1x2x1xf32>
    %17 = vector.broadcast %16 : vector<1x2x1xf32> to vector<8x2x1xf32>
    %18 = arith.divf %14, %17 : vector<8x2x1xf32>
    %19 = vector.broadcast %18 : vector<8x2x1xf32> to vector<8x2x256xf32>
    %20 = arith.mulf %0, %19 : vector<8x2x256xf32>
    %cst_11 = arith.constant dense<0.000000e+00> : vector<2x256xf32>
    %21 = vector.multi_reduction <add>, %20, %cst_11 [0] : vector<8x2x256xf32> to vector<2x256xf32>
    %cst_12 = arith.constant dense<0.000000e+00> : vector<2x256xf32>
    %22 = vector.multi_reduction <add>, %0, %cst_12 [0] : vector<8x2x256xf32> to vector<2x256xf32>
    %cst_13 = arith.constant 1.250000e-01 : f32
    %23 = vector.broadcast %cst_13 : f32 to vector<2x256xf32>
    %24 = arith.mulf %22, %23 : vector<2x256xf32>
    %cst_14 = arith.constant dense<0xFF800000> : vector<2x256xf32>
    %25 = vector.multi_reduction <maximumf>, %0, %cst_14 [0] : vector<8x2x256xf32> to vector<2x256xf32>
    %c0_15 = arith.constant 0 : index
    %c0_16 = arith.constant 0 : index
    %26 = vector.load %arg5[%c0_15, %c0_16] : memref<768x2xf32, #tpu.memory_space<vmem>>, vector<768x2xf32>
    %27 = vector.extract_strided_slice %26 {offsets = [0, 0], sizes = [256, 2], strides = [1, 1]} : vector<768x2xf32> to vector<256x2xf32>
    %cst_17 = arith.constant dense<0.000000e+00> : vector<2x2xf32>
    %28 = tpu.matmul %21, %27, %cst_17 {dimension_numbers = #tpu.dot_dimension_numbers<[1], [0], [0], [1], [0, 0, 1, 1], [], []>} : vector<2x256xf32>, vector<256x2xf32>, vector<2x2xf32> -> vector<2x2xf32>
    %29 = vector.extract_strided_slice %26 {offsets = [256, 0], sizes = [256, 2], strides = [1, 1]} : vector<768x2xf32> to vector<256x2xf32>
    %cst_18 = arith.constant dense<0.000000e+00> : vector<2x2xf32>
    %30 = tpu.matmul %24, %29, %cst_18 {dimension_numbers = #tpu.dot_dimension_numbers<[1], [0], [0], [1], [0, 0, 1, 1], [], []>} : vector<2x256xf32>, vector<256x2xf32>, vector<2x2xf32> -> vector<2x2xf32>
    %31 = arith.addf %28, %30 : vector<2x2xf32>
    %32 = vector.extract_strided_slice %26 {offsets = [512, 0], sizes = [256, 2], strides = [1, 1]} : vector<768x2xf32> to vector<256x2xf32>
    %cst_19 = arith.constant dense<0.000000e+00> : vector<2x2xf32>
    %33 = tpu.matmul %25, %32, %cst_19 {dimension_numbers = #tpu.dot_dimension_numbers<[1], [0], [0], [1], [0, 0, 1, 1], [], []>} : vector<2x256xf32>, vector<256x2xf32>, vector<2x2xf32> -> vector<2x2xf32>
    %34 = arith.addf %31, %33 : vector<2x2xf32>
    %c0_20 = arith.constant 0 : index
    %c0_21 = arith.constant 0 : index
    %35 = vector.load %arg6[%c0_20, %c0_21] : memref<1x2xf32, #tpu.memory_space<vmem>>, vector<1x2xf32>
    %36 = vector.broadcast %35 : vector<1x2xf32> to vector<2x2xf32>
    %37 = arith.addf %34, %36 : vector<2x2xf32>
    %c0_22 = arith.constant 0 : index
    %c0_23 = arith.constant 0 : index
    %38 = vector.load %arg7[%c0_22, %c0_23] : memref<2x2xf32, #tpu.memory_space<vmem>>, vector<2x2xf32>
    tpu.vector_store %arg7[%c0_22, %c0_23], %37 {strides = array<i32>} : memref<2x2xf32, #tpu.memory_space<vmem>>, vector<2x2xf32>,
    return
  }
  func.func @transform_0(%arg0: i32) -> (i32, i32, i32) {
    %c0_i32 = arith.constant 0 : i32
    %c0_i32_0 = arith.constant 0 : i32
    %c0_i32_1 = arith.constant 0 : i32
    return %c0_i32, %arg0, %c0_i32_0 : i32, i32, i32
  }
  func.func @transform_1(%arg0: i32) -> (i32, i32) {
    %c0_i32 = arith.constant 0 : i32
    %c0_i32_0 = arith.constant 0 : i32
    %c0_i32_1 = arith.constant 0 : i32
    return %c0_i32, %c0_i32_0 : i32, i32
  }
  func.func @transform_2(%arg0: i32) -> (i32, i32) {
    %c0_i32 = arith.constant 0 : i32
    %c0_i32_0 = arith.constant 0 : i32
    %c0_i32_1 = arith.constant 0 : i32
    return %c0_i32, %c0_i32_0 : i32, i32
  }
  func.func @transform_3(%arg0: i32) -> (i32, i32) {
    %c0_i32 = arith.constant 0 : i32
    %c0_i32_0 = arith.constant 0 : i32
    %c0_i32_1 = arith.constant 0 : i32
    return %c0_i32, %c0_i32_0 : i32, i32
  }
  func.func @transform_4(%arg0: i32) -> (i32, i32) {
    %c0_i32 = arith.constant 0 : i32
    %c0_i32_0 = arith.constant 0 : i32
    %c0_i32_1 = arith.constant 0 : i32
    return %c0_i32, %c0_i32_0 : i32, i32
  }
  func.func @transform_5(%arg0: i32) -> (i32, i32) {
    %c0_i32 = arith.constant 0 : i32
    %c0_i32_0 = arith.constant 0 : i32
    %c0_i32_1 = arith.constant 0 : i32
    return %c0_i32, %c0_i32_0 : i32, i32
  }
  func.func @transform_6(%arg0: i32) -> (i32, i32) {
    %c0_i32 = arith.constant 0 : i32
    %c0_i32_0 = arith.constant 0 : i32
    return %arg0, %c0_i32 : i32, i32
  }
}

</mosaic_0001>

<llo_original>
// kernel: enhanced_bilstm_forward.3
$region0: #{enhanced_bilstm_forward.3}
  #allocation0 [shape = 'u32[]', space=smem, size = 0x4, offset = 0x4, fixed_abs, tag = 'smem constant byte address 0x4 - core index']
  #allocation1 [shape = 'u32[144,128]{1,0:T(1,128)}', space=vmem, size = 0x12000, scoped, tag = 'internal scratch']
  #allocation2 [shape = 'f32[8,2,512]{2,1,0:T(2,128)}', space=vmem, size = 0x8000, scoped, tag = 'scratch operand']
  %s0 = inlined_call_operand.vmem [shape: f32[8,2,32], index: 0, kind: input, shape index: {}]
  %s1 = inlined_call_operand.hbm [shape: f32[32,1024], index: 1, kind: input, shape index: {}]
  %s2 = inlined_call_operand.hbm [shape: f32[128,1024], index: 2, kind: input, shape index: {}]
  %s3 = inlined_call_operand.hbm [shape: f32[1,1024], index: 3, kind: input, shape index: {}]
  %s4 = inlined_call_operand.vmem [shape: f32[8,2,256], index: 4, kind: output, shape index: {}]
  %s5 = sld [smem:[#allocation0]]
  $region105: #{enhanced_bilstm_forward.3} parent=0
    _
  %s7 = ssub.s32 1, %s5
  %s8 = scalar_select 0, %s7, %s5
  $region1: #{enhanced_bilstm_forward.3} parent=0
    #allocation3 [shape = 'u8[131072]{0}', space=vmem, size = 0x20000, scoped, tag = 'input window, operand 1']
    #allocation4 [shape = 's32[2]{0}', space=sflag, size = 0x8, scoped, tag = 'scoped memory for enhanced_bilstm_forward.3']
    #allocation5 [shape = 'u8[524288]{0}', space=vmem, size = 0x80000, scoped, tag = 'input window, operand 2']
    #allocation6 [shape = 's32[2]{0}', space=sflag, size = 0x8, scoped, tag = 'scoped memory for enhanced_bilstm_forward.3']
    #allocation7 [shape = 'u8[4096]{0}', space=vmem, size = 0x1000, scoped, tag = 'input window, operand 3']
    #allocation8 [shape = 'u8[16384]{0}', space=vmem, size = 0x4000, scoped, tag = 'output window, operand 0']
    %9 = vsyncpa [#allocation4], 0
    %s10 = scalar_lea.sflag [#allocation4], 1
    %11 = vsyncpa %s10, 0
    %12 = vsyncpa [#allocation6], 0
    %s13 = scalar_lea.sflag [#allocation6], 1
    %14 = vsyncpa %s13, 0
    loop: start=0, step=1, limit=4
    $region2: #{enhanced_bilstm_forward.3} parent=1 // loop_pre_header
      _
    $region3: #{enhanced_bilstm_forward.3} parent=1 // loop_header
      %s16 = sphi 0, %s20
      %p17 = scmp.ge.s32.totalorder %s16, 4
      %s24 = sphi 0, %s24
      %s26 = sphi 0, %s24
      %s27 = sphi 0, %s26
      %s41 = sphi 0, %s27
      %s47 = sphi 0, %s49
      %s50 = sphi 0, %s47
      %s51 = sphi 0, %s50
      %s67 = sphi 0, %s51
      %s73 = sphi 0, %s75
      %s76 = sphi 0, %s73
      %s77 = sphi 0, %s76
      %s93 = sphi 0, %s77
      %s99 = sphi 0, %s101
      %s102 = sphi 0, %s99
      %s103 = sphi 0, %s102
      %s119 = sphi 0, %s103
      %s125 = sphi 0, %s127
      %s128 = sphi 0, %s125
      %s129 = sphi 0, %s128
      %s145 = sphi 0, %s129
    $region4: #{enhanced_bilstm_forward.3} parent=1 // loop_header_branch
      %19 = sbr.rel (%p17) target = $region8
    $region5: #{enhanced_bilstm_forward.3} parent=1 // loop_body
      %s21 = ssub.s32 %s16, 1
      %s22 = ssub.s32 %s16, 2
      %s23 = sadd.s32 %s16, 1
      %s25 = sadd.s32 %s24, 1
      %p28 = scmp.eq.s32.totalorder %s16, 1
      %p29 = scmp.ne.s32.totalorder %s24, %s26
      %p30 = scmp.eq.s32.totalorder %s16, 0
      %p31 = por %p29, %p30
      %p32 = scmp.ne.s32.totalorder %s24, %s26
      %p33 = scmp.eq.s32.totalorder %s21, 1
      %p34 = por %p32, %p33
      %p35 = scmp.ne.s32.totalorder %s26, %s27
      %p36 = scmp.eq.s32.totalorder %s21, 0
      %p37 = por %p35, %p36
      %p38 = scmp.ne.s32.totalorder %s26, %s27
      %p39 = scmp.eq.s32.totalorder %s22, 1
      %p40 = por %p38, %p39
      %p42 = scmp.ne.s32.totalorder %s27, %s41
      %p43 = scmp.eq.s32.totalorder %s22, 0
      %p44 = por %p42, %p43
      %s45 = ssub.s32 %s16, %s23
      %p46 = scmp.eq.s32.totalorder %s45, 0
      %s48 = sadd.s32 %s47, 1
      %s49 = scalar_select %p46, %s47, %s48
      %p52 = pneg %p46
      %p53 = scmp.eq.s32.totalorder %s16, 1
      %p54 = por %p52, %p53
      %p55 = scmp.ne.s32.totalorder %s47, %s50
      %p56 = scmp.eq.s32.totalorder %s16, 0
      %p57 = por %p55, %p56
      %p58 = scmp.ne.s32.totalorder %s47, %s50
      %p59 = scmp.eq.s32.totalorder %s21, 1
      %p60 = por %p58, %p59
      %p61 = scmp.ne.s32.totalorder %s50, %s51
      %p62 = scmp.eq.s32.totalorder %s21, 0
      %p63 = por %p61, %p62
      %p64 = scmp.ne.s32.totalorder %s50, %s51
      %p65 = scmp.eq.s32.totalorder %s22, 1
      %p66 = por %p64, %p65
      %p68 = scmp.ne.s32.totalorder %s51, %s67
      %p69 = scmp.eq.s32.totalorder %s22, 0
      %p70 = por %p68, %p69
      %s71 = ssub.s32 %s16, %s23
      %p72 = scmp.eq.s32.totalorder %s71, 0
      %s74 = sadd.s32 %s73, 1
      %s75 = scalar_select %p72, %s73, %s74
      %p78 = pneg %p72
      %p79 = scmp.eq.s32.totalorder %s16, 1
      %p80 = por %p78, %p79
      %p81 = scmp.ne.s32.totalorder %s73, %s76
      %p82 = scmp.eq.s32.totalorder %s16, 0
      %p83 = por %p81, %p82
      %p84 = scmp.ne.s32.totalorder %s73, %s76
      %p85 = scmp.eq.s32.totalorder %s21, 1
      %p86 = por %p84, %p85
      %p87 = scmp.ne.s32.totalorder %s76, %s77
      %p88 = scmp.eq.s32.totalorder %s21, 0
      %p89 = por %p87, %p88
      %p90 = scmp.ne.s32.totalorder %s76, %s77
      %p91 = scmp.eq.s32.totalorder %s22, 1
      %p92 = por %p90, %p91
      %p94 = scmp.ne.s32.totalorder %s77, %s93
      %p95 = scmp.eq.s32.totalorder %s22, 0
      %p96 = por %p94, %p95
      %s97 = ssub.s32 %s16, %s23
      %p98 = scmp.eq.s32.totalorder %s97, 0
      %s100 = sadd.s32 %s99, 1
      %s101 = scalar_select %p98, %s99, %s100
      %p104 = pneg %p98
      %p105 = scmp.eq.s32.totalorder %s16, 1
      %p106 = por %p104, %p105
      %p107 = scmp.ne.s32.totalorder %s99, %s102
      %p108 = scmp.eq.s32.totalorder %s16, 0
      %p109 = por %p107, %p108
      %p110 = scmp.ne.s32.totalorder %s99, %s102
      %p111 = scmp.eq.s32.totalorder %s21, 1
      %p112 = por %p110, %p111
      %p113 = scmp.ne.s32.totalorder %s102, %s103
      %p114 = scmp.eq.s32.totalorder %s21, 0
      %p115 = por %p113, %p114
      %p116 = scmp.ne.s32.totalorder %s102, %s103
      %p117 = scmp.eq.s32.totalorder %s22, 1
      %p118 = por %p116, %p117
      %p120 = scmp.ne.s32.totalorder %s103, %s119
      %p121 = scmp.eq.s32.totalorder %s22, 0
      %p122 = por %p120, %p121
      %s123 = ssub.s32 %s16, %s23
      %p124 = scmp.eq.s32.totalorder %s123, 0
      %s126 = sadd.s32 %s125, 1
      %s127 = scalar_select %p124, %s125, %s126
      %p130 = pneg %p124
      %p131 = scmp.eq.s32.totalorder %s16, 1
      %p132 = por %p130, %p131
      %p133 = scmp.ne.s32.totalorder %s125, %s128
      %p134 = scmp.eq.s32.totalorder %s16, 0
      %p135 = por %p133, %p134
      %p136 = scmp.ne.s32.totalorder %s125, %s128
      %p137 = scmp.eq.s32.totalorder %s21, 1
      %p138 = por %p136, %p137
      %p139 = scmp.ne.s32.totalorder %s128, %s129
      %p140 = scmp.eq.s32.totalorder %s21, 0
      %p141 = por %p139, %p140
      %p142 = scmp.ne.s32.totalorder %s128, %s129
      %p143 = scmp.eq.s32.totalorder %s22, 1
      %p144 = por %p142, %p143
      %p146 = scmp.ne.s32.totalorder %s129, %s145
      %p147 = scmp.eq.s32.totalorder %s22, 0
      %p148 = por %p146, %p147
      %p149 = scmp.le.s32.totalorder 1, %s16
      %p150 = scmp.lt.s32.totalorder %s16, 3
      %p151 = pnand %p149, %p150
      %p152 = pneg %p151
      // Predicated region
      $region9: #{enhanced_bilstm_forward.3} parent=5 // pred_check
        _
      $region10: #{enhanced_bilstm_forward.3} parent=5 // pred_check_branch
        %154 = sbr.rel (%p151) target = $region12
      $region11: #{enhanced_bilstm_forward.3} parent=5 // pred_region
        %s155 = ssub.s32 %s16, 1
        // Predicated region
        $region13: #{enhanced_bilstm_forward.3} parent=11 // pred_check
          %p156 = pneg %p37
        $region14: #{enhanced_bilstm_forward.3} parent=11 // pred_check_branch
          %158 = sbr.rel (%p156) target = $region16
        $region15: #{enhanced_bilstm_forward.3} parent=11 // pred_region
          _
        $region16: #{enhanced_bilstm_forward.3} parent=11 // pred_fallthru
          _
      $region12: #{enhanced_bilstm_forward.3} parent=5 // pred_fallthru
        _
      %p159 = scmp.lt.s32.totalorder %s16, 2
      // Predicated region
      $region17: #{enhanced_bilstm_forward.3} parent=5 // pred_check
        %p160 = pneg %p159
      $region18: #{enhanced_bilstm_forward.3} parent=5 // pred_check_branch
        %162 = sbr.rel (%p160) target = $region20
      $region19: #{enhanced_bilstm_forward.3} parent=5 // pred_region
        // Predicated region
        $region21: #{enhanced_bilstm_forward.3} parent=19 // pred_check
          %p163 = pneg %p57
        $region22: #{enhanced_bilstm_forward.3} parent=19 // pred_check_branch
          %165 = sbr.rel (%p163) target = $region24
        $region23: #{enhanced_bilstm_forward.3} parent=19 // pred_region
          %s166 = sand.u32 %s47, 1
          %s167 = scalar_lea.sflag [#allocation4], %s166
          %s168 = sand.u32 %s47, 1
          %s169 = smul.addr %s168, 128
          %s170 = scalar_lea.vmem [#allocation3], %s169
          %s171 = smul.u32 4, %s16
          %s173 = ssub.s32 2048, 2048
          %174 = vsyncadd %s167, %s173
          %s175 = smul.addr %s171, 128
          %s176 = scalar_lea.hbm %s1, %s175
          %s177 = sshll.u32 %s170, 4
          %s178 = int_to_ptr.vmem [resolvable:$true] %s177
          %183 = dma.hbm_to_vmem [thread:$0]  %s176, 2048, %s178, %s167, 1024, 512, 32
        $region24: #{enhanced_bilstm_forward.3} parent=19 // pred_fallthru
          _
        // Predicated region
        $region25: #{enhanced_bilstm_forward.3} parent=19 // pred_check
          %p184 = pneg %p83
        $region26: #{enhanced_bilstm_forward.3} parent=19 // pred_check_branch
          %186 = sbr.rel (%p184) target = $region28
        $region27: #{enhanced_bilstm_forward.3} parent=19 // pred_region
          %s187 = sand.u32 %s16, 1
          %s188 = scalar_lea.sflag [#allocation6], %s187
          %s189 = sand.u32 %s73, 1
          %s190 = smul.addr %s189, 512
          %s191 = scalar_lea.vmem [#allocation5], %s190
          %s192 = smul.u32 4, %s16
          %s194 = ssub.s32 8192, 8192
          %195 = vsyncadd %s188, %s194
          %s196 = smul.addr %s192, 128
          %s197 = scalar_lea.hbm %s2, %s196
          %s198 = sshll.u32 %s191, 4
          %s199 = int_to_ptr.vmem [resolvable:$true] %s198
          %204 = dma.hbm_to_vmem [thread:$0]  %s197, 8192, %s199, %s188, 1024, 512, 32
        $region28: #{enhanced_bilstm_forward.3} parent=19 // pred_fallthru
          _
        // Predicated region
        $region29: #{enhanced_bilstm_forward.3} parent=19 // pred_check
          %p205 = pneg %p109
        $region30: #{enhanced_bilstm_forward.3} parent=19 // pred_check_branch
          %207 = sbr.rel (%p205) target = $region32
        $region31: #{enhanced_bilstm_forward.3} parent=19 // pred_region
          %s208 = sand.u32 %s16, 1
          %s209 = scalar_lea.sflag [#allocation6], %s208
          %s210 = sand.u32 %s99, 1
          %s211 = smul.addr %s210, 4
          %s212 = scalar_lea.vmem [#allocation7], %s211
          %s213 = smul.u32 4, %s16
          %s215 = ssub.s32 64, 64
          %216 = vsyncadd %s209, %s215
          %s217 = smul.addr %s213, 16
          %s218 = scalar_lea.hbm %s3, %s217
          %s220 = sshll.u32 %s212, 4
          %s221 = int_to_ptr.vmem [resolvable:$true] %s220
          %223 = dma.hbm_to_vmem [thread:$0]  %s218, 64, %s221, %s209
        $region32: #{enhanced_bilstm_forward.3} parent=19 // pred_fallthru
          _
      $region20: #{enhanced_bilstm_forward.3} parent=5 // pred_fallthru
        _
      %p224 = scmp.le.s32.totalorder 1, %s16
      %p225 = scmp.lt.s32.totalorder %s16, 3
      %p226 = pnand %p224, %p225
      %p227 = pneg %p226
      // Predicated region
      $region33: #{enhanced_bilstm_forward.3} parent=5 // pred_check
        _
      $region34: #{enhanced_bilstm_forward.3} parent=5 // pred_check_branch
        %229 = sbr.rel (%p226) target = $region36
      $region35: #{enhanced_bilstm_forward.3} parent=5 // pred_region
        %s230 = ssub.s32 %s16, 1
        %s231 = sand.u32 %s50, 1
        %s232 = scalar_lea.sflag [#allocation4], %s231
        %s233 = sand.u32 %s50, 1
        %s234 = smul.addr %s233, 128
        %s235 = scalar_lea.vmem [#allocation3], %s234
        // Predicated region
        $region37: #{enhanced_bilstm_forward.3} parent=35 // pred_check
          %p236 = pneg %p63
        $region38: #{enhanced_bilstm_forward.3} parent=35 // pred_check_branch
          %238 = sbr.rel (%p236) target = $region40
        $region39: #{enhanced_bilstm_forward.3} parent=35 // pred_region
          %239 = dma.done %s232, 2048
        $region40: #{enhanced_bilstm_forward.3} parent=35 // pred_fallthru
          _
        %s240 = sand.u32 %s21, 1
        %s241 = scalar_lea.sflag [#allocation6], %s240
        %s242 = sand.u32 %s76, 1
        %s243 = smul.addr %s242, 512
        %s244 = scalar_lea.vmem [#allocation5], %s243
        // Predicated region
        $region41: #{enhanced_bilstm_forward.3} parent=35 // pred_check
          %p245 = pneg %p89
        $region42: #{enhanced_bilstm_forward.3} parent=35 // pred_check_branch
          %247 = sbr.rel (%p245) target = $region44
        $region43: #{enhanced_bilstm_forward.3} parent=35 // pred_region
          %248 = dma.done %s241, 8192
        $region44: #{enhanced_bilstm_forward.3} parent=35 // pred_fallthru
          _
        %s249 = sand.u32 %s21, 1
        %s250 = scalar_lea.sflag [#allocation6], %s249
        %s251 = sand.u32 %s102, 1
        %s252 = smul.addr %s251, 4
        %s253 = scalar_lea.vmem [#allocation7], %s252
        // Predicated region
        $region45: #{enhanced_bilstm_forward.3} parent=35 // pred_check
          %p254 = pneg %p115
        $region46: #{enhanced_bilstm_forward.3} parent=35 // pred_check_branch
          %256 = sbr.rel (%p254) target = $region48
        $region47: #{enhanced_bilstm_forward.3} parent=35 // pred_region
          %257 = dma.done %s250, 64
        $region48: #{enhanced_bilstm_forward.3} parent=35 // pred_fallthru
          _
        %p258 = pneg %p37
        %p259 = pneg %p34
        %s260 = sand.u32 %s50, 1
        %s261 = scalar_lea.sflag [#allocation4], %s260
        %s262 = sand.u32 %s50, 1
        %s263 = smul.addr %s262, 128
        %s264 = scalar_lea.vmem [#allocation3], %s263
        %p265 = pneg %p63
        %p266 = pneg %p60
        %s267 = sand.u32 %s21, 1
        %s268 = scalar_lea.sflag [#allocation6], %s267
        %s269 = sand.u32 %s76, 1
        %s270 = smul.addr %s269, 512
        %s271 = scalar_lea.vmem [#allocation5], %s270
        %p272 = pneg %p89
        %p273 = pneg %p86
        %s274 = sand.u32 %s21, 1
        %s275 = scalar_lea.sflag [#allocation6], %s274
        %s276 = sand.u32 %s102, 1
        %s277 = smul.addr %s276, 4
        %s278 = scalar_lea.vmem [#allocation7], %s277
        %p279 = pneg %p115
        %p280 = pneg %p112
        %p281 = pneg %p141
        %p282 = pneg %p138
        %s283 = sand.u32 %s128, 1
        %s284 = sand.u32 %s128, 1
        %s285 = smul.addr %s284, 16
        %s286 = scalar_lea.vmem [#allocation8], %s285
        %s287 = smul.u32 4, %s21
        %s288 = smul.u32 4, %s21
        %s289 = smul.u32 4, %s21
        %v290 = vld [vmem:[%s0] sm:$0x3]
        %v291 = vld [vmem:[%s0 + $0x2] sm:$0x3]
        %v292 = vld [vmem:[%s0 + $0x4] sm:$0x3]
        %v293 = vld [vmem:[%s0 + $0x6] sm:$0x3]
        %v294 = vld [vmem:[%s0 + $0x8] sm:$0x3]
        %v295 = vld [vmem:[%s0 + $0xa] sm:$0x3]
        %v296 = vld [vmem:[%s0 + $0xc] sm:$0x3]
        %v297 = vld [vmem:[%s0 + $0xe] sm:$0x3]
        %v298 = vld [vmem:[%s235] sm:$0xff]
        %v299 = vld [vmem:[%s235 + $0x8] sm:$0xff]
        %v300 = vld [vmem:[%s235 + $0x10] sm:$0xff]
        %v301 = vld [vmem:[%s235 + $0x18] sm:$0xff]
        %v302 = vld [vmem:[%s235 + $0x20] sm:$0xff]
        %v303 = vld [vmem:[%s235 + $0x28] sm:$0xff]
        %v304 = vld [vmem:[%s235 + $0x30] sm:$0xff]
        %v305 = vld [vmem:[%s235 + $0x38] sm:$0xff]
        %v306 = vld [vmem:[%s235 + $0x40] sm:$0xff]
        %v307 = vld [vmem:[%s235 + $0x48] sm:$0xff]
        %v308 = vld [vmem:[%s235 + $0x50] sm:$0xff]
        %v309 = vld [vmem:[%s235 + $0x58] sm:$0xff]
        %v310 = vld [vmem:[%s235 + $0x60] sm:$0xff]
        %v311 = vld [vmem:[%s235 + $0x68] sm:$0xff]
        %v312 = vld [vmem:[%s235 + $0x70] sm:$0xff]
        %v313 = vld [vmem:[%s235 + $0x78] sm:$0xff]
        %v314 = vld [vmem:[%s253] sm:$0xf]
        %v316 = vlaneseq
        %v317 = vshrl.u32 %v316, 7
        %v318 = vsub.s32 0, %v317
        %v319 = vrot.slane %v314, %v318
        %v320 = vlaneseq
        %v321 = vshrl.u32 %v320, 7
        %v322 = vsub.s32 1, %v321
        %v323 = vrot.slane %v314, %v322
        %v324 = vlaneseq
        %v325 = vshrl.u32 %v324, 7
        %v326 = vsub.s32 2, %v325
        %v327 = vrot.slane %v314, %v326
        %v328 = vlaneseq
        %v329 = vshrl.u32 %v328, 7
        %v330 = vsub.s32 3, %v329
        %v331 = vrot.slane %v314, %v330
        %v332 = vcombine.low %v319, %v323
        %v333 = vcombine.low %v327, %v331
        %v335 = vunpack.c.l.s4 1983009808
        %v336 = vunpack.c.0.s8 %v335
        %v337 = vlaneseq
        %v338 = vshrl.u32 %v337, 7
        %v339 = vsub.s32 %v336, %v338
        %v340 = vrot.slane %v332, %v339
        %v342 = vunpack.c.l.s4 1983009808
        %v343 = vunpack.c.0.s8 %v342
        %v344 = vlaneseq
        %v345 = vshrl.u32 %v344, 7
        %v346 = vsub.s32 %v343, %v345
        %v347 = vrot.slane %v333, %v346
        %v348 = vcombine.low %v340, %v347
        %v357 = vcombine.low %v290, %v291
        %v358 = vcombine.low %v292, %v293
        %v360 = vunpack.c.l.s4 1983009808
        %v361 = vunpack.c.0.s8 %v360
        %v362 = vlaneseq
        %v363 = vshrl.u32 %v362, 7
        %v364 = vsub.s32 %v361, %v363
        %v365 = vrot.slane %v357, %v364
        %v367 = vunpack.c.l.s4 1983009808
        %v368 = vunpack.c.0.s8 %v367
        %v369 = vlaneseq
        %v370 = vshrl.u32 %v369, 7
        %v371 = vsub.s32 %v368, %v370
        %v372 = vrot.slane %v358, %v371
        %v373 = vcombine.low %v365, %v372
        %v374 = vcombine.low %v294, %v295
        %v375 = vcombine.low %v296, %v297
        %v377 = vunpack.c.l.s4 1983009808
        %v378 = vunpack.c.0.s8 %v377
        %v379 = vlaneseq
        %v380 = vshrl.u32 %v379, 7
        %v381 = vsub.s32 %v378, %v380
        %v382 = vrot.slane %v374, %v381
        %v384 = vunpack.c.l.s4 1983009808
        %v385 = vunpack.c.0.s8 %v384
        %v386 = vlaneseq
        %v387 = vshrl.u32 %v386, 7
        %v388 = vsub.s32 %v385, %v387
        %v389 = vrot.slane %v375, %v388
        %v390 = vcombine.low %v382, %v389
        %v391 = vcombine.low %v348, %v348
        %v392 = vcombine.high %v348, %v348
        %v394 = vunpack.c.l.s4 1983009808
        %v395 = vunpack.c.0.s8 %v394
        %v396 = vlaneseq
        %v397 = vshrl.u32 %v396, 7
        %v398 = vsub.s32 %v395, %v397
        %v399 = vrot.slane %v391, %v398
        %v401 = vunpack.c.l.s4 1983009808
        %v402 = vunpack.c.0.s8 %v401
        %v403 = vlaneseq
        %v404 = vshrl.u32 %v403, 7
        %v405 = vsub.s32 %v402, %v404
        %v406 = vrot.slane %v392, %v405
        %v407 = vcombine.low %v399, %v399
        %v408 = vcombine.high %v399, %v399
        %v409 = vcombine.low %v406, %v406
        %v410 = vcombine.high %v406, %v406
        %vm415 = vcmask 261120
        %v416 = vsel %vm415, %v373, 0
        %v418 = vsel %vm415, %v390, 0
        %420 = vmatprep.subr.mxu0 0.0
        %421 = vmatpush1.msra.mxu0 0.0
        %422 = vmatprep.subr.mxu0 0.0
        %423 = vmatpush1.msra.mxu0 0.0
        %424 = vmatprep.subr.mxu0 0.0
        %425 = vmatpush1.msra.mxu0 0.0
        %426 = vmatprep.subr.mxu0 0.0
        %427 = vmatpush1.msra.mxu0 0.0
        %428 = vmatprep.subr.mxu0 0.0
        %429 = vmatpush1.msra.mxu0 0.0
        %430 = vmatprep.subr.mxu0 0.0
        %431 = vmatpush1.msra.mxu0 0.0
        %432 = vmatprep.subr.mxu0 0.0
        %433 = vmatpush1.msra.mxu0 0.0
        %434 = vmatprep.subr.mxu0 0.0
        %435 = vmatpush1.msra.mxu0 0.0
        %436 = vmatprep.subr.mxu0 0.0
        %437 = vmatpush1.msra.mxu0 0.0
        %438 = vmatprep.subr.mxu0 0.0
        %439 = vmatpush1.msra.mxu0 0.0
        %440 = vmatprep.subr.mxu0 0.0
        %441 = vmatpush1.msra.mxu0 0.0
        %442 = vmatprep.subr.mxu0 0.0
        %443 = vmatpush1.msra.mxu0 0.0
        %444 = vmatprep.subr.mxu0 %v311
        %445 = vmatpush1.msra.mxu0 %v310
        %446 = vmatprep.subr.mxu0 %v307
        %447 = vmatpush1.msra.mxu0 %v306
        %448 = vmatprep.subr.mxu0 %v303
        %449 = vmatpush1.msra.mxu0 %v302
        %450 = vmatprep.subr.mxu0 %v299
        %451 = vmatpush1.msra.mxu0 %v298
        %452 = vmatprep.subr.mxu0 0.0
        %453 = vmatpush2.msra.mxu0 0.0
        %454 = vmatprep.subr.mxu0 0.0
        %455 = vmatpush2.msra.mxu0 0.0
        %456 = vmatprep.subr.mxu0 0.0
        %457 = vmatpush2.msra.mxu0 0.0
        %458 = vmatprep.subr.mxu0 0.0
        %459 = vmatpush2.msra.mxu0 0.0
        %460 = vmatprep.subr.mxu0 0.0
        %461 = vmatpush2.msra.mxu0 0.0
        %462 = vmatprep.subr.mxu0 0.0
        %463 = vmatpush2.msra.mxu0 0.0
        %464 = vmatprep.subr.mxu0 0.0
        %465 = vmatpush2.msra.mxu0 0.0
        %466 = vmatprep.subr.mxu0 0.0
        %467 = vmatpush2.msra.mxu0 0.0
        %468 = vmatprep.subr.mxu0 0.0
        %469 = vmatpush2.msra.mxu0 0.0
        %470 = vmatprep.subr.mxu0 0.0
        %471 = vmatpush2.msra.mxu0 0.0
        %472 = vmatprep.subr.mxu0 0.0
        %473 = vmatpush2.msra.mxu0 0.0
        %474 = vmatprep.subr.mxu0 0.0
        %475 = vmatpush2.msra.mxu0 0.0
        %476 = vmatprep.subr.mxu0 0.0
        %477 = vmatpush2.msra.mxu0 0.0
        %478 = vmatprep.subr.mxu0 0.0
        %479 = vmatpush2.msra.mxu0 0.0
        %480 = vmatprep.subr.mxu0 0.0
        %481 = vmatpush2.msra.mxu0 0.0
        %482 = vmatprep.subr.mxu0 0.0
        %483 = vmatpush2.msra.mxu0 0.0
        %484 = vmatprep.mubr.f32.mxu0 0.0
        %485 = vmatmul.mubr.f32.gmra.mxu0 %v416
        %v486 = vpop.f32.mrf.mxu0
        %v487 = vadd.f32 %v407, %v486
        %v488 = vpop.f32.mrf.mxu0
        %v489 = vadd.f32 %v408, %v488
        %490 = vmatprep.mubr.f32.mxu0 0.0
        %491 = vmatmul.mubr.f32.gmra.mxu0 %v418
        %v492 = vpop.f32.mrf.mxu0
        %v493 = vadd.f32 %v407, %v492
        %v494 = vpop.f32.mrf.mxu0
        %v495 = vadd.f32 %v408, %v494
        %496 = vdwg.mxu0
        %497 = vmatprep.subr.mxu0 0.0
        %498 = vmatpush1.msra.mxu0 0.0
        %499 = vmatprep.subr.mxu0 0.0
        %500 = vmatpush1.msra.mxu0 0.0
        %501 = vmatprep.subr.mxu0 0.0
        %502 = vmatpush1.msra.mxu0 0.0
        %503 = vmatprep.subr.mxu0 0.0
        %504 = vmatpush1.msra.mxu0 0.0
        %505 = vmatprep.subr.mxu0 0.0
        %506 = vmatpush1.msra.mxu0 0.0
        %507 = vmatprep.subr.mxu0 0.0
        %508 = vmatpush1.msra.mxu0 0.0
        %509 = vmatprep.subr.mxu0 0.0
        %510 = vmatpush1.msra.mxu0 0.0
        %511 = vmatprep.subr.mxu0 0.0
        %512 = vmatpush1.msra.mxu0 0.0
        %513 = vmatprep.subr.mxu0 0.0
        %514 = vmatpush1.msra.mxu0 0.0
        %515 = vmatprep.subr.mxu0 0.0
        %516 = vmatpush1.msra.mxu0 0.0
        %517 = vmatprep.subr.mxu0 0.0
        %518 = vmatpush1.msra.mxu0 0.0
        %519 = vmatprep.subr.mxu0 0.0
        %520 = vmatpush1.msra.mxu0 0.0
        %521 = vmatprep.subr.mxu0 %v313
        %522 = vmatpush1.msra.mxu0 %v312
        %523 = vmatprep.subr.mxu0 %v309
        %524 = vmatpush1.msra.mxu0 %v308
        %525 = vmatprep.subr.mxu0 %v305
        %526 = vmatpush1.msra.mxu0 %v304
        %527 = vmatprep.subr.mxu0 %v301
        %528 = vmatpush1.msra.mxu0 %v300
        %529 = vmatprep.subr.mxu0 0.0
        %530 = vmatpush2.msra.mxu0 0.0
        %531 = vmatprep.subr.mxu0 0.0
        %532 = vmatpush2.msra.mxu0 0.0
        %533 = vmatprep.subr.mxu0 0.0
        %534 = vmatpush2.msra.mxu0 0.0
        %535 = vmatprep.subr.mxu0 0.0
        %536 = vmatpush2.msra.mxu0 0.0
        %537 = vmatprep.subr.mxu0 0.0
        %538 = vmatpush2.msra.mxu0 0.0
        %539 = vmatprep.subr.mxu0 0.0
        %540 = vmatpush2.msra.mxu0 0.0
        %541 = vmatprep.subr.mxu0 0.0
        %542 = vmatpush2.msra.mxu0 0.0
        %543 = vmatprep.subr.mxu0 0.0
        %544 = vmatpush2.msra.mxu0 0.0
        %545 = vmatprep.subr.mxu0 0.0
        %546 = vmatpush2.msra.mxu0 0.0
        %547 = vmatprep.subr.mxu0 0.0
        %548 = vmatpush2.msra.mxu0 0.0
        %549 = vmatprep.subr.mxu0 0.0
        %550 = vmatpush2.msra.mxu0 0.0
        %551 = vmatprep.subr.mxu0 0.0
        %552 = vmatpush2.msra.mxu0 0.0
        %553 = vmatprep.subr.mxu0 0.0
        %554 = vmatpush2.msra.mxu0 0.0
        %555 = vmatprep.subr.mxu0 0.0
        %556 = vmatpush2.msra.mxu0 0.0
        %557 = vmatprep.subr.mxu0 0.0
        %558 = vmatpush2.msra.mxu0 0.0
        %559 = vmatprep.subr.mxu0 0.0
        %560 = vmatpush2.msra.mxu0 0.0
        %561 = vmatprep.mubr.f32.mxu0 0.0
        %562 = vmatmul.mubr.f32.gmra.mxu0 %v416
        %v563 = vpop.f32.mrf.mxu0
        %v564 = vadd.f32 %v409, %v563
        %v565 = vpop.f32.mrf.mxu0
        %v566 = vadd.f32 %v410, %v565
        %567 = vmatprep.mubr.f32.mxu0 0.0
        %568 = vmatmul.mubr.f32.gmra.mxu0 %v418
        %v569 = vpop.f32.mrf.mxu0
        %v570 = vadd.f32 %v409, %v569
        %v571 = vpop.f32.mrf.mxu0
        %v572 = vadd.f32 %v410, %v571
        %573 = vdwg.mxu0
        %v582 = vcombine.low %v487, %v489
        %v583 = vcombine.high %v487, %v489
        %v584 = vcombine.low %v564, %v566
        %v585 = vcombine.high %v564, %v566
        %v587 = vunpack.c.l.s4 1983009808
        %v588 = vunpack.c.0.s8 %v587
        %v589 = vlaneseq
        %v590 = vshrl.u32 %v589, 7
        %v591 = vsub.s32 %v588, %v590
        %v592 = vrot.slane %v582, %v591
        %v594 = vunpack.c.l.s4 1983009808
        %v595 = vunpack.c.0.s8 %v594
        %v596 = vlaneseq
        %v597 = vshrl.u32 %v596, 7
        %v598 = vsub.s32 %v595, %v597
        %v599 = vrot.slane %v583, %v598
        %v601 = vunpack.c.l.s4 1983009808
        %v602 = vunpack.c.0.s8 %v601
        %v603 = vlaneseq
        %v604 = vshrl.u32 %v603, 7
        %v605 = vsub.s32 %v602, %v604
        %v606 = vrot.slane %v584, %v605
        %v608 = vunpack.c.l.s4 1983009808
        %v609 = vunpack.c.0.s8 %v608
        %v610 = vlaneseq
        %v611 = vshrl.u32 %v610, 7
        %v612 = vsub.s32 %v609, %v611
        %v613 = vrot.slane %v585, %v612
        %v614 = vcombine.low %v592, %v606
        %v615 = vcombine.high %v592, %v606
        %v616 = vcombine.low %v599, %v613
        %v617 = vcombine.high %v599, %v613
        %v618 = vcombine.low %v493, %v495
        %v619 = vcombine.high %v493, %v495
        %v620 = vcombine.low %v570, %v572
        %v621 = vcombine.high %v570, %v572
        %v623 = vunpack.c.l.s4 1983009808
        %v624 = vunpack.c.0.s8 %v623
        %v625 = vlaneseq
        %v626 = vshrl.u32 %v625, 7
        %v627 = vsub.s32 %v624, %v626
        %v628 = vrot.slane %v618, %v627
        %v630 = vunpack.c.l.s4 1983009808
        %v631 = vunpack.c.0.s8 %v630
        %v632 = vlaneseq
        %v633 = vshrl.u32 %v632, 7
        %v634 = vsub.s32 %v631, %v633
        %v635 = vrot.slane %v619, %v634
        %v637 = vunpack.c.l.s4 1983009808
        %v638 = vunpack.c.0.s8 %v637
        %v639 = vlaneseq
        %v640 = vshrl.u32 %v639, 7
        %v641 = vsub.s32 %v638, %v640
        %v642 = vrot.slane %v620, %v641
        %v644 = vunpack.c.l.s4 1983009808
        %v645 = vunpack.c.0.s8 %v644
        %v646 = vlaneseq
        %v647 = vshrl.u32 %v646, 7
        %v648 = vsub.s32 %v645, %v647
        %v649 = vrot.slane %v621, %v648
        %v650 = vcombine.low %v628, %v642
        %v651 = vcombine.high %v628, %v642
        %v652 = vcombine.low %v635, %v649
        %v653 = vcombine.high %v635, %v649
        %662 = vst [vmem:[#allocation2] sm:$0xff] %v614
        %663 = vst [vmem:[#allocation2 + $0x8] sm:$0xff] %v615
        %664 = vst [vmem:[#allocation2 + $0x10] sm:$0xff] %v616
        %665 = vst [vmem:[#allocation2 + $0x18] sm:$0xff] %v617
        %666 = vst [vmem:[#allocation2 + $0x20] sm:$0xff] %v650
        %667 = vst [vmem:[#allocation2 + $0x28] sm:$0xff] %v651
        %668 = vst [vmem:[#allocation2 + $0x30] sm:$0xff] %v652
        %669 = vst [vmem:[#allocation2 + $0x38] sm:$0xff] %v653
        %v670 = vld [vmem:[%s244] sm:$0xff]
        %v671 = vld [vmem:[%s244 + $0x8] sm:$0xff]
        %v672 = vld [vmem:[%s244 + $0x10] sm:$0xff]
        %v673 = vld [vmem:[%s244 + $0x18] sm:$0xff]
        %v674 = vld [vmem:[%s244 + $0x20] sm:$0xff]
        %v675 = vld [vmem:[%s244 + $0x28] sm:$0xff]
        %v676 = vld [vmem:[%s244 + $0x30] sm:$0xff]
        %v677 = vld [vmem:[%s244 + $0x38] sm:$0xff]
        %v678 = vld [vmem:[%s244 + $0x40] sm:$0xff]
        %v679 = vld [vmem:[%s244 + $0x48] sm:$0xff]
        %v680 = vld [vmem:[%s244 + $0x50] sm:$0xff]
        %v681 = vld [vmem:[%s244 + $0x58] sm:$0xff]
        %v682 = vld [vmem:[%s244 + $0x60] sm:$0xff]
        %v683 = vld [vmem:[%s244 + $0x68] sm:$0xff]
        %v684 = vld [vmem:[%s244 + $0x70] sm:$0xff]
        %v685 = vld [vmem:[%s244 + $0x78] sm:$0xff]
        %v686 = vld [vmem:[%s244 + $0x80] sm:$0xff]
        %v687 = vld [vmem:[%s244 + $0x88] sm:$0xff]
        %v688 = vld [vmem:[%s244 + $0x90] sm:$0xff]
        %v689 = vld [vmem:[%s244 + $0x98] sm:$0xff]
        %v690 = vld [vmem:[%s244 + $0xa0] sm:$0xff]
        %v691 = vld [vmem:[%s244 + $0xa8] sm:$0xff]
        %v692 = vld [vmem:[%s244 + $0xb0] sm:$0xff]
        %v693 = vld [vmem:[%s244 + $0xb8] sm:$0xff]
        %v694 = vld [vmem:[%s244 + $0xc0] sm:$0xff]
        %v695 = vld [vmem:[%s244 + $0xc8] sm:$0xff]
        %v696 = vld [vmem:[%s244 + $0xd0] sm:$0xff]
        %v697 = vld [vmem:[%s244 + $0xd8] sm:$0xff]
        %v698 = vld [vmem:[%s244 + $0xe0] sm:$0xff]
        %v699 = vld [vmem:[%s244 + $0xe8] sm:$0xff]
        %v700 = vld [vmem:[%s244 + $0xf0] sm:$0xff]
        %v701 = vld [vmem:[%s244 + $0xf8] sm:$0xff]
        %v702 = vld [vmem:[%s244 + $0x100] sm:$0xff]
        %v703 = vld [vmem:[%s244 + $0x108] sm:$0xff]
        %v704 = vld [vmem:[%s244 + $0x110] sm:$0xff]
        %v705 = vld [vmem:[%s244 + $0x118] sm:$0xff]
        %v706 = vld [vmem:[%s244 + $0x120] sm:$0xff]
        %v707 = vld [vmem:[%s244 + $0x128] sm:$0xff]
        %v708 = vld [vmem:[%s244 + $0x130] sm:$0xff]
        %v709 = vld [vmem:[%s244 + $0x138] sm:$0xff]
        %v710 = vld [vmem:[%s244 + $0x140] sm:$0xff]
        %v711 = vld [vmem:[%s244 + $0x148] sm:$0xff]
        %v712 = vld [vmem:[%s244 + $0x150] sm:$0xff]
        %v713 = vld [vmem:[%s244 + $0x158] sm:$0xff]
        %v714 = vld [vmem:[%s244 + $0x160] sm:$0xff]
        %v715 = vld [vmem:[%s244 + $0x168] sm:$0xff]
        %v716 = vld [vmem:[%s244 + $0x170] sm:$0xff]
        %v717 = vld [vmem:[%s244 + $0x178] sm:$0xff]
        %v718 = vld [vmem:[%s244 + $0x180] sm:$0xff]
        %v719 = vld [vmem:[%s244 + $0x188] sm:$0xff]
        %v720 = vld [vmem:[%s244 + $0x190] sm:$0xff]
        %v721 = vld [vmem:[%s244 + $0x198] sm:$0xff]
        %v722 = vld [vmem:[%s244 + $0x1a0] sm:$0xff]
        %v723 = vld [vmem:[%s244 + $0x1a8] sm:$0xff]
        %v724 = vld [vmem:[%s244 + $0x1b0] sm:$0xff]
        %v725 = vld [vmem:[%s244 + $0x1b8] sm:$0xff]
        %v726 = vld [vmem:[%s244 + $0x1c0] sm:$0xff]
        %v727 = vld [vmem:[%s244 + $0x1c8] sm:$0xff]
        %v728 = vld [vmem:[%s244 + $0x1d0] sm:$0xff]
        %v729 = vld [vmem:[%s244 + $0x1d8] sm:$0xff]
        %v730 = vld [vmem:[%s244 + $0x1e0] sm:$0xff]
        %v731 = vld [vmem:[%s244 + $0x1e8] sm:$0xff]
        %v732 = vld [vmem:[%s244 + $0x1f0] sm:$0xff]
        %v733 = vld [vmem:[%s244 + $0x1f8] sm:$0xff]
        loop: start=0, step=1, limit=8
        $region49: #{enhanced_bilstm_forward.3} parent=35 // loop_pre_header
          _
        $region50: #{enhanced_bilstm_forward.3} parent=35 // loop_header
          %s735 = sphi 0, %s739
          %p736 = scmp.ge.s32.totalorder %s735, 8
          %v740 = vphi 0.0, %v944
          %v741 = vphi 0.0, %v942
        $region51: #{enhanced_bilstm_forward.3} parent=35 // loop_header_branch
          %738 = sbr.rel (%p736) target = $region55
        $region52: #{enhanced_bilstm_forward.3} parent=35 // loop_body
          %p742 = scmp.eq.s32.totalorder %s21, 0
          %s743 = ssub.s32 7, %s735
          %s744 = scalar_select %p742, %s735, %s743
          %s745 = smul.u32 %s744, 4
          %s746 = smul.addr %s745, 2
          %s747 = scalar_lea.vmem [#allocation2], %s746
          %v748 = vld [vmem:[%s747] sm:$0xff]
          %749 = vmatprep.subr.mxu0 %v731
          %750 = vmatpush1.msra.mxu0 %v730
          %751 = vmatprep.subr.mxu0 %v727
          %752 = vmatpush1.msra.mxu0 %v726
          %753 = vmatprep.subr.mxu0 %v723
          %754 = vmatpush1.msra.mxu0 %v722
          %755 = vmatprep.subr.mxu0 %v719
          %756 = vmatpush1.msra.mxu0 %v718
          %757 = vmatprep.subr.mxu0 %v715
          %758 = vmatpush1.msra.mxu0 %v714
          %759 = vmatprep.subr.mxu0 %v711
          %760 = vmatpush1.msra.mxu0 %v710
          %761 = vmatprep.subr.mxu0 %v707
          %762 = vmatpush1.msra.mxu0 %v706
          %763 = vmatprep.subr.mxu0 %v703
          %764 = vmatpush1.msra.mxu0 %v702
          %765 = vmatprep.subr.mxu0 %v699
          %766 = vmatpush1.msra.mxu0 %v698
          %767 = vmatprep.subr.mxu0 %v695
          %768 = vmatpush1.msra.mxu0 %v694
          %769 = vmatprep.subr.mxu0 %v691
          %770 = vmatpush1.msra.mxu0 %v690
          %771 = vmatprep.subr.mxu0 %v687
          %772 = vmatpush1.msra.mxu0 %v686
          %773 = vmatprep.subr.mxu0 %v683
          %774 = vmatpush1.msra.mxu0 %v682
          %775 = vmatprep.subr.mxu0 %v679
          %776 = vmatpush1.msra.mxu0 %v678
          %777 = vmatprep.subr.mxu0 %v675
          %778 = vmatpush1.msra.mxu0 %v674
          %779 = vmatprep.subr.mxu0 %v671
          %780 = vmatpush1.msra.mxu0 %v670
          %781 = vmatprep.subr.mxu0 0.0
          %782 = vmatpush2.msra.mxu0 0.0
          %783 = vmatprep.subr.mxu0 0.0
          %784 = vmatpush2.msra.mxu0 0.0
          %785 = vmatprep.subr.mxu0 0.0
          %786 = vmatpush2.msra.mxu0 0.0
          %787 = vmatprep.subr.mxu0 0.0
          %788 = vmatpush2.msra.mxu0 0.0
          %789 = vmatprep.subr.mxu0 0.0
          %790 = vmatpush2.msra.mxu0 0.0
          %791 = vmatprep.subr.mxu0 0.0
          %792 = vmatpush2.msra.mxu0 0.0
          %793 = vmatprep.subr.mxu0 0.0
          %794 = vmatpush2.msra.mxu0 0.0
          %795 = vmatprep.subr.mxu0 0.0
          %796 = vmatpush2.msra.mxu0 0.0
          %797 = vmatprep.subr.mxu0 0.0
          %798 = vmatpush2.msra.mxu0 0.0
          %799 = vmatprep.subr.mxu0 0.0
          %800 = vmatpush2.msra.mxu0 0.0
          %801 = vmatprep.subr.mxu0 0.0
          %802 = vmatpush2.msra.mxu0 0.0
          %803 = vmatprep.subr.mxu0 0.0
          %804 = vmatpush2.msra.mxu0 0.0
          %805 = vmatprep.subr.mxu0 0.0
          %806 = vmatpush2.msra.mxu0 0.0
          %807 = vmatprep.subr.mxu0 0.0
          %808 = vmatpush2.msra.mxu0 0.0
          %809 = vmatprep.subr.mxu0 0.0
          %810 = vmatpush2.msra.mxu0 0.0
          %811 = vmatprep.subr.mxu0 0.0
          %812 = vmatpush2.msra.mxu0 0.0
          %813 = vmatprep.mubr.f32.mxu0 0.0
          %814 = vmatmul.mubr.f32.gmra.mxu0 %v740
          %v815 = vpop.f32.mrf.mxu0
          %v816 = vadd.f32 0.0, %v815
          %v817 = vpop.f32.mrf.mxu0
          %v818 = vadd.f32 0.0, %v817
          %819 = vdwg.mxu0
          %820 = vmatprep.subr.mxu0 %v733
          %821 = vmatpush1.msra.mxu0 %v732
          %822 = vmatprep.subr.mxu0 %v729
          %823 = vmatpush1.msra.mxu0 %v728
          %824 = vmatprep.subr.mxu0 %v725
          %825 = vmatpush1.msra.mxu0 %v724
          %826 = vmatprep.subr.mxu0 %v721
          %827 = vmatpush1.msra.mxu0 %v720
          %828 = vmatprep.subr.mxu0 %v717
          %829 = vmatpush1.msra.mxu0 %v716
          %830 = vmatprep.subr.mxu0 %v713
          %831 = vmatpush1.msra.mxu0 %v712
          %832 = vmatprep.subr.mxu0 %v709
          %833 = vmatpush1.msra.mxu0 %v708
          %834 = vmatprep.subr.mxu0 %v705
          %835 = vmatpush1.msra.mxu0 %v704
          %836 = vmatprep.subr.mxu0 %v701
          %837 = vmatpush1.msra.mxu0 %v700
          %838 = vmatprep.subr.mxu0 %v697
          %839 = vmatpush1.msra.mxu0 %v696
          %840 = vmatprep.subr.mxu0 %v693
          %841 = vmatpush1.msra.mxu0 %v692
          %842 = vmatprep.subr.mxu0 %v689
          %843 = vmatpush1.msra.mxu0 %v688
          %844 = vmatprep.subr.mxu0 %v685
          %845 = vmatpush1.msra.mxu0 %v684
          %846 = vmatprep.subr.mxu0 %v681
          %847 = vmatpush1.msra.mxu0 %v680
          %848 = vmatprep.subr.mxu0 %v677
          %849 = vmatpush1.msra.mxu0 %v676
          %850 = vmatprep.subr.mxu0 %v673
          %851 = vmatpush1.msra.mxu0 %v672
          %852 = vmatprep.subr.mxu0 0.0
          %853 = vmatpush2.msra.mxu0 0.0
          %854 = vmatprep.subr.mxu0 0.0
          %855 = vmatpush2.msra.mxu0 0.0
          %856 = vmatprep.subr.mxu0 0.0
          %857 = vmatpush2.msra.mxu0 0.0
          %858 = vmatprep.subr.mxu0 0.0
          %859 = vmatpush2.msra.mxu0 0.0
          %860 = vmatprep.subr.mxu0 0.0
          %861 = vmatpush2.msra.mxu0 0.0
          %862 = vmatprep.subr.mxu0 0.0
          %863 = vmatpush2.msra.mxu0 0.0
          %864 = vmatprep.subr.mxu0 0.0
          %865 = vmatpush2.msra.mxu0 0.0
          %866 = vmatprep.subr.mxu0 0.0
          %867 = vmatpush2.msra.mxu0 0.0
          %868 = vmatprep.subr.mxu0 0.0
          %869 = vmatpush2.msra.mxu0 0.0
          %870 = vmatprep.subr.mxu0 0.0
          %871 = vmatpush2.msra.mxu0 0.0
          %872 = vmatprep.subr.mxu0 0.0
          %873 = vmatpush2.msra.mxu0 0.0
          %874 = vmatprep.subr.mxu0 0.0
          %875 = vmatpush2.msra.mxu0 0.0
          %876 = vmatprep.subr.mxu0 0.0
          %877 = vmatpush2.msra.mxu0 0.0
          %878 = vmatprep.subr.mxu0 0.0
          %879 = vmatpush2.msra.mxu0 0.0
          %880 = vmatprep.subr.mxu0 0.0
          %881 = vmatpush2.msra.mxu0 0.0
          %882 = vmatprep.subr.mxu0 0.0
          %883 = vmatpush2.msra.mxu0 0.0
          %884 = vmatprep.mubr.f32.mxu0 0.0
          %885 = vmatmul.mubr.f32.gmra.mxu0 %v740
          %v886 = vpop.f32.mrf.mxu0
          %v887 = vadd.f32 0.0, %v886
          %v888 = vpop.f32.mrf.mxu0
          %v889 = vadd.f32 0.0, %v888
          %890 = vdwg.mxu0
          %v895 = vcombine.low %v816, %v818
          %v896 = vcombine.low %v887, %v889
          %v898 = vunpack.c.l.s4 1983009808
          %v899 = vunpack.c.0.s8 %v898
          %v900 = vlaneseq
          %v901 = vshrl.u32 %v900, 7
          %v902 = vsub.s32 %v899, %v901
          %v903 = vrot.slane %v895, %v902
          %v905 = vunpack.c.l.s4 1983009808
          %v906 = vunpack.c.0.s8 %v905
          %v907 = vlaneseq
          %v908 = vshrl.u32 %v907, 7
          %v909 = vsub.s32 %v906, %v908
          %v910 = vrot.slane %v896, %v909
          %v911 = vcombine.low %v903, %v910
          %v913 = vadd.f32 %v748, %v911
          %v914 = vxor.u32 %v913, 2147483648
          %v915 = vmul.f32 %v914, 1.442695
          %v916 = vpow.pop %v915
          %v917 = vadd.f32 %v916, 1.0
          %v918 = vrcp.pop %v917
          %v919 = vmul.f32 1.0, %v918
          %v921 = vrot.slane %v913, 2
          %v923 = vxor.u32 %v921, 2147483648
          %v924 = vmul.f32 %v923, 1.442695
          %v925 = vpow.pop %v924
          %v926 = vadd.f32 %v925, 1.0
          %v927 = vrcp.pop %v926
          %v928 = vmul.f32 1.0, %v927
          %v929 = vrot.slane %v913, 4
          %v931 = vtanh.pop %v929
          %v932 = vrot.slane %v913, 6
          %v934 = vxor.u32 %v932, 2147483648
          %v935 = vmul.f32 %v934, 1.442695
          %v936 = vpow.pop %v935
          %v937 = vadd.f32 %v936, 1.0
          %v938 = vrcp.pop %v937
          %v939 = vmul.f32 1.0, %v938
          %v940 = vmul.f32 %v928, %v741
          %v941 = vmul.f32 %v919, %v931
          %v942 = vadd.f32 %v940, %v941
          %v943 = vtanh.pop %v942
          %v944 = vmul.f32 %v939, %v943
          %s945 = smul.u32 %s744, 2
          %s946 = scalar_lea.vmem %s286, %s945 [#allocation8]
          %947 = vst [vmem:[%s946] sm:$0x3] %v944
        $region53: #{enhanced_bilstm_forward.3} parent=35 // loop_footer
          %s739 = sadd.s32 1, %s735
        $region54: #{enhanced_bilstm_forward.3} parent=35 // loop_footer_branch
          %734 = sbr.rel target = $region50
        $region55: #{enhanced_bilstm_forward.3} parent=35 // loop_exit
          _
        %s948 = sand.u32 %s128, 1
        %s949 = sand.u32 %s128, 1
        %s950 = smul.addr %s949, 16
        %s951 = scalar_lea.vmem [#allocation8], %s950
        // Predicated region
        $region56: #{enhanced_bilstm_forward.3} parent=35 // pred_check
          %p952 = pneg %p138
        $region57: #{enhanced_bilstm_forward.3} parent=35 // pred_check_branch
          %954 = sbr.rel (%p952) target = $region59
        $region58: #{enhanced_bilstm_forward.3} parent=35 // pred_region
          %s955 = smul.addr %s21, 2
          %s956 = scalar_lea.vmem %s4, %s955
          // Predicated region
          $region60: #{enhanced_bilstm_forward.3} parent=58 // pred_check
            _
          $region61: #{enhanced_bilstm_forward.3} parent=58 // pred_check_branch
            %958 = sbr.rel (0) target = $region63
          $region62: #{enhanced_bilstm_forward.3} parent=58 // pred_region
            // Predicated region
            $region64: #{enhanced_bilstm_forward.3} parent=62 // pred_check
              _
            $region65: #{enhanced_bilstm_forward.3} parent=62 // pred_check_branch
              %960 = sbr.rel target = $region67
            $region66: #{enhanced_bilstm_forward.3} parent=62 // pred_region
              // Predicated region
              $region79: #{enhanced_bilstm_forward.3} parent=66 // pred_check
                _
              $region80: #{enhanced_bilstm_forward.3} parent=66 // pred_check_branch
                %990 = sbr.rel (0) target = $region82
              $region81: #{enhanced_bilstm_forward.3} parent=66 // pred_region
                loop: start=0, step=1, limit=1
                $region83: #{enhanced_bilstm_forward.3} parent=81 // loop_pre_header
                  _
                $region84: #{enhanced_bilstm_forward.3} parent=81 // loop_header
                  %s992 = sphi 0, %s996
                  %p993 = scmp.ge.s32.totalorder %s992, 1
                  %s997 = sphi %s951, %s951
                  %s998 = sphi %s956, %s956
                $region85: #{enhanced_bilstm_forward.3} parent=81 // loop_header_branch
                  %995 = sbr.rel (%p993) target = $region89
                $region86: #{enhanced_bilstm_forward.3} parent=81 // loop_body
                  _
                $region87: #{enhanced_bilstm_forward.3} parent=81 // loop_footer
                  %s996 = sadd.s32 1, %s992
                $region88: #{enhanced_bilstm_forward.3} parent=81 // loop_footer_branch
                  %991 = sbr.rel target = $region84
                $region89: #{enhanced_bilstm_forward.3} parent=81 // loop_exit
                  _
                %s1000 = ssub.s32 4, 1
                loop: start=0, step=1, limit=1
                $region90: #{enhanced_bilstm_forward.3} parent=81 // loop_pre_header
                  _
                $region91: #{enhanced_bilstm_forward.3} parent=81 // loop_header
                  %s1002 = sphi 0, %s1006
                  %p1003 = scmp.ge.s32.totalorder %s1002, 1
                  %s1007 = sphi %s951, %s951
                  %s1008 = sphi %s956, %s956
                $region92: #{enhanced_bilstm_forward.3} parent=81 // loop_header_branch
                  %1005 = sbr.rel (%p1003) target = $region96
                $region93: #{enhanced_bilstm_forward.3} parent=81 // loop_body
                  %v1009 = vld [vmem:[%s1007] sm:%s1000]
                  %1010 = vst [vmem:[%s1008] sm:%s1000] %v1009
                  %v1011 = vld [vmem:[%s1007 + $0x2] sm:%s1000]
                  %1012 = vst [vmem:[%s1008 + $0x4] sm:%s1000] %v1011
                  %v1013 = vld [vmem:[%s1007 + $0x4] sm:%s1000]
                  %1014 = vst [vmem:[%s1008 + $0x8] sm:%s1000] %v1013
                  %v1015 = vld [vmem:[%s1007 + $0x6] sm:%s1000]
                  %1016 = vst [vmem:[%s1008 + $0xc] sm:%s1000] %v1015
                  %v1017 = vld [vmem:[%s1007 + $0x8] sm:%s1000]
                  %1018 = vst [vmem:[%s1008 + $0x10] sm:%s1000] %v1017
                  %v1019 = vld [vmem:[%s1007 + $0xa] sm:%s1000]
                  %1020 = vst [vmem:[%s1008 + $0x14] sm:%s1000] %v1019
                  %v1021 = vld [vmem:[%s1007 + $0xc] sm:%s1000]
                  %1022 = vst [vmem:[%s1008 + $0x18] sm:%s1000] %v1021
                  %v1023 = vld [vmem:[%s1007 + $0xe] sm:%s1000]
                  %1024 = vst [vmem:[%s1008 + $0x1c] sm:%s1000] %v1023
                $region94: #{enhanced_bilstm_forward.3} parent=81 // loop_footer
                  %s1006 = sadd.s32 1, %s1002
                $region95: #{enhanced_bilstm_forward.3} parent=81 // loop_footer_branch
                  %1001 = sbr.rel target = $region91
                $region96: #{enhanced_bilstm_forward.3} parent=81 // loop_exit
                  _
              $region82: #{enhanced_bilstm_forward.3} parent=66 // pred_fallthru
                _
            $region67: #{enhanced_bilstm_forward.3} parent=62 // pred_fallthru
              _
            // Predicated region
            $region68: #{enhanced_bilstm_forward.3} parent=62 // pred_check
              _
            $region69: #{enhanced_bilstm_forward.3} parent=62 // pred_check_branch
              %962 = sbr.rel (0) target = $region71
            $region70: #{enhanced_bilstm_forward.3} parent=62 // pred_region
              %s964 = ssub.s32 4, 1
              loop: start=0, step=1, limit=1
              $region72: #{enhanced_bilstm_forward.3} parent=70 // loop_pre_header
                _
              $region73: #{enhanced_bilstm_forward.3} parent=70 // loop_header
                %s966 = sphi 0, %s970
                %p967 = scmp.ge.s32.totalorder %s966, 1
                %s971 = sphi %s951, %s951
                %s972 = sphi %s956, %s956
              $region74: #{enhanced_bilstm_forward.3} parent=70 // loop_header_branch
                %969 = sbr.rel (%p967) target = $region78
              $region75: #{enhanced_bilstm_forward.3} parent=70 // loop_body
                %v973 = vld [vmem:[%s971] sm:%s964]
                %974 = vst [vmem:[%s972] sm:%s964] %v973
                %v975 = vld [vmem:[%s971 + $0x2] sm:%s964]
                %976 = vst [vmem:[%s972 + $0x4] sm:%s964] %v975
                %v977 = vld [vmem:[%s971 + $0x4] sm:%s964]
                %978 = vst [vmem:[%s972 + $0x8] sm:%s964] %v977
                %v979 = vld [vmem:[%s971 + $0x6] sm:%s964]
                %980 = vst [vmem:[%s972 + $0xc] sm:%s964] %v979
                %v981 = vld [vmem:[%s971 + $0x8] sm:%s964]
                %982 = vst [vmem:[%s972 + $0x10] sm:%s964] %v981
                %v983 = vld [vmem:[%s971 + $0xa] sm:%s964]
                %984 = vst [vmem:[%s972 + $0x14] sm:%s964] %v983
                %v985 = vld [vmem:[%s971 + $0xc] sm:%s964]
                %986 = vst [vmem:[%s972 + $0x18] sm:%s964] %v985
                %v987 = vld [vmem:[%s971 + $0xe] sm:%s964]
                %988 = vst [vmem:[%s972 + $0x1c] sm:%s964] %v987
              $region76: #{enhanced_bilstm_forward.3} parent=70 // loop_footer
                %s970 = sadd.s32 1, %s966
              $region77: #{enhanced_bilstm_forward.3} parent=70 // loop_footer_branch
                %965 = sbr.rel target = $region73
              $region78: #{enhanced_bilstm_forward.3} parent=70 // loop_exit
                _
            $region71: #{enhanced_bilstm_forward.3} parent=62 // pred_fallthru
              _
          $region63: #{enhanced_bilstm_forward.3} parent=58 // pred_fallthru
            _
          %1025 = vnop
        $region59: #{enhanced_bilstm_forward.3} parent=35 // pred_fallthru
          _
      $region36: #{enhanced_bilstm_forward.3} parent=5 // pred_fallthru
        _
      %p1026 = scmp.le.s32.totalorder 2, %s16
      // Predicated region
      $region97: #{enhanced_bilstm_forward.3} parent=5 // pred_check
        %p1027 = pneg %p1026
      $region98: #{enhanced_bilstm_forward.3} parent=5 // pred_check_branch
        %1029 = sbr.rel (%p1027) target = $region100
      $region99: #{enhanced_bilstm_forward.3} parent=5 // pred_region
        %s1030 = ssub.s32 %s16, 2
        // Predicated region
        $region101: #{enhanced_bilstm_forward.3} parent=99 // pred_check
          %p1031 = pneg %p144
        $region102: #{enhanced_bilstm_forward.3} parent=99 // pred_check_branch
          %1033 = sbr.rel (%p1031) target = $region104
        $region103: #{enhanced_bilstm_forward.3} parent=99 // pred_region
          %s1034 = sand.u32 %s129, 1
          %s1035 = sand.u32 %s129, 1
          %s1036 = smul.addr %s1035, 16
          %s1037 = scalar_lea.vmem [#allocation8], %s1036
        $region104: #{enhanced_bilstm_forward.3} parent=99 // pred_fallthru
          _
      $region100: #{enhanced_bilstm_forward.3} parent=5 // pred_fallthru
        _
    $region6: #{enhanced_bilstm_forward.3} parent=1 // loop_footer
      %s20 = sadd.s32 1, %s16
    $region7: #{enhanced_bilstm_forward.3} parent=1 // loop_footer_branch
      %15 = sbr.rel target = $region3
    $region8: #{enhanced_bilstm_forward.3} parent=1 // loop_exit
      _
    %1038 = vsyncpa [#allocation4], 1
    %s1039 = scalar_lea.sflag [#allocation4], 1
    %1040 = vsyncpa %s1039, 1
    %1041 = vsyncpa [#allocation6], 1
    %s1042 = scalar_lea.sflag [#allocation6], 1
    %1043 = vsyncpa %s1042, 1

// kernel: enhanced_bilstm_forward.4
$region0: #{enhanced_bilstm_forward.4}
  #allocation0 [shape = 'u32[]', space=smem, size = 0x4, offset = 0x4, fixed_abs, tag = 'smem constant byte address 0x4 - core index']
  #allocation1 [shape = 'u32[144,128]{1,0:T(1,128)}', space=vmem, size = 0x12000, scoped, tag = 'internal scratch']
  #allocation2 [shape = 'f32[8,2,512]{2,1,0:T(2,128)}', space=vmem, size = 0x8000, scoped, tag = 'scratch operand']
  %s0 = inlined_call_operand.vmem [shape: f32[8,2,256], index: 0, kind: input, shape index: {}]
  %s1 = inlined_call_operand.hbm [shape: f32[256,1024], index: 1, kind: input, shape index: {}]
  %s2 = inlined_call_operand.vmem [shape: f32[128,1024], index: 2, kind: input, shape index: {}]
  %s3 = inlined_call_operand.vmem [shape: f32[1,1024], index: 3, kind: input, shape index: {}]
  %s4 = inlined_call_operand.vmem [shape: f32[8,2,256], index: 4, kind: output, shape index: {}]
  %s5 = sld [smem:[#allocation0]]
  $region120: #{enhanced_bilstm_forward.4} parent=0
    _
  %s7 = ssub.s32 1, %s5
  %s8 = scalar_select 0, %s7, %s5
  $region1: #{enhanced_bilstm_forward.4} parent=0
    #allocation3 [shape = 'u8[1048576]{0}', space=vmem, size = 0x100000, scoped, tag = 'input window, operand 1']
    #allocation4 [shape = 's32[2]{0}', space=sflag, size = 0x8, scoped, tag = 'scoped memory for enhanced_bilstm_forward.4']
    #allocation5 [shape = 'u8[524288]{0}', space=vmem, size = 0x80000, scoped, tag = 'input window, operand 2']
    #allocation6 [shape = 'u8[16384]{0}', space=vmem, size = 0x4000, scoped, tag = 'output window, operand 0']
    %9 = vsyncpa [#allocation4], 0
    %s10 = scalar_lea.sflag [#allocation4], 1
    %11 = vsyncpa %s10, 0
    loop: start=0, step=1, limit=4
    $region2: #{enhanced_bilstm_forward.4} parent=1 // loop_pre_header
      _
    $region3: #{enhanced_bilstm_forward.4} parent=1 // loop_header
      %s13 = sphi 0, %s17
      %p14 = scmp.ge.s32.totalorder %s13, 4
      %s21 = sphi 0, %s21
      %s23 = sphi 0, %s21
      %s24 = sphi 0, %s23
      %s38 = sphi 0, %s24
      %s44 = sphi 0, %s46
      %s47 = sphi 0, %s44
      %s48 = sphi 0, %s47
      %s64 = sphi 0, %s48
      %s70 = sphi 0, %s72
      %s73 = sphi 0, %s70
      %s74 = sphi 0, %s73
      %s90 = sphi 0, %s74
      %s96 = sphi 0, %s98
      %s99 = sphi 0, %s96
      %s100 = sphi 0, %s99
      %s116 = sphi 0, %s100
      %s122 = sphi 0, %s124
      %s125 = sphi 0, %s122
      %s126 = sphi 0, %s125
      %s142 = sphi 0, %s126
    $region4: #{enhanced_bilstm_forward.4} parent=1 // loop_header_branch
      %16 = sbr.rel (%p14) target = $region8
    $region5: #{enhanced_bilstm_forward.4} parent=1 // loop_body
      %s18 = ssub.s32 %s13, 1
      %s19 = ssub.s32 %s13, 2
      %s20 = sadd.s32 %s13, 1
      %s22 = sadd.s32 %s21, 1
      %p25 = scmp.eq.s32.totalorder %s13, 1
      %p26 = scmp.ne.s32.totalorder %s21, %s23
      %p27 = scmp.eq.s32.totalorder %s13, 0
      %p28 = por %p26, %p27
      %p29 = scmp.ne.s32.totalorder %s21, %s23
      %p30 = scmp.eq.s32.totalorder %s18, 1
      %p31 = por %p29, %p30
      %p32 = scmp.ne.s32.totalorder %s23, %s24
      %p33 = scmp.eq.s32.totalorder %s18, 0
      %p34 = por %p32, %p33
      %p35 = scmp.ne.s32.totalorder %s23, %s24
      %p36 = scmp.eq.s32.totalorder %s19, 1
      %p37 = por %p35, %p36
      %p39 = scmp.ne.s32.totalorder %s24, %s38
      %p40 = scmp.eq.s32.totalorder %s19, 0
      %p41 = por %p39, %p40
      %s42 = ssub.s32 %s13, %s20
      %p43 = scmp.eq.s32.totalorder %s42, 0
      %s45 = sadd.s32 %s44, 1
      %s46 = scalar_select %p43, %s44, %s45
      %p49 = pneg %p43
      %p50 = scmp.eq.s32.totalorder %s13, 1
      %p51 = por %p49, %p50
      %p52 = scmp.ne.s32.totalorder %s44, %s47
      %p53 = scmp.eq.s32.totalorder %s13, 0
      %p54 = por %p52, %p53
      %p55 = scmp.ne.s32.totalorder %s44, %s47
      %p56 = scmp.eq.s32.totalorder %s18, 1
      %p57 = por %p55, %p56
      %p58 = scmp.ne.s32.totalorder %s47, %s48
      %p59 = scmp.eq.s32.totalorder %s18, 0
      %p60 = por %p58, %p59
      %p61 = scmp.ne.s32.totalorder %s47, %s48
      %p62 = scmp.eq.s32.totalorder %s19, 1
      %p63 = por %p61, %p62
      %p65 = scmp.ne.s32.totalorder %s48, %s64
      %p66 = scmp.eq.s32.totalorder %s19, 0
      %p67 = por %p65, %p66
      %s68 = ssub.s32 %s13, %s20
      %p69 = scmp.eq.s32.totalorder %s68, 0
      %s71 = sadd.s32 %s70, 1
      %s72 = scalar_select %p69, %s70, %s71
      %p75 = pneg %p69
      %p76 = scmp.eq.s32.totalorder %s13, 1
      %p77 = por %p75, %p76
      %p78 = scmp.ne.s32.totalorder %s70, %s73
      %p79 = scmp.eq.s32.totalorder %s13, 0
      %p80 = por %p78, %p79
      %p81 = scmp.ne.s32.totalorder %s70, %s73
      %p82 = scmp.eq.s32.totalorder %s18, 1
      %p83 = por %p81, %p82
      %p84 = scmp.ne.s32.totalorder %s73, %s74
      %p85 = scmp.eq.s32.totalorder %s18, 0
      %p86 = por %p84, %p85
      %p87 = scmp.ne.s32.totalorder %s73, %s74
      %p88 = scmp.eq.s32.totalorder %s19, 1
      %p89 = por %p87, %p88
      %p91 = scmp.ne.s32.totalorder %s74, %s90
      %p92 = scmp.eq.s32.totalorder %s19, 0
      %p93 = por %p91, %p92
      %s94 = ssub.s32 %s13, %s20
      %p95 = scmp.eq.s32.totalorder %s94, 0
      %s97 = sadd.s32 %s96, 1
      %s98 = scalar_select %p95, %s96, %s97
      %p101 = pneg %p95
      %p102 = scmp.eq.s32.totalorder %s13, 1
      %p103 = por %p101, %p102
      %p104 = scmp.ne.s32.totalorder %s96, %s99
      %p105 = scmp.eq.s32.totalorder %s13, 0
      %p106 = por %p104, %p105
      %p107 = scmp.ne.s32.totalorder %s96, %s99
      %p108 = scmp.eq.s32.totalorder %s18, 1
      %p109 = por %p107, %p108
      %p110 = scmp.ne.s32.totalorder %s99, %s100
      %p111 = scmp.eq.s32.totalorder %s18, 0
      %p112 = por %p110, %p111
      %p113 = scmp.ne.s32.totalorder %s99, %s100
      %p114 = scmp.eq.s32.totalorder %s19, 1
      %p115 = por %p113, %p114
      %p117 = scmp.ne.s32.totalorder %s100, %s116
      %p118 = scmp.eq.s32.totalorder %s19, 0
      %p119 = por %p117, %p118
      %s120 = ssub.s32 %s13, %s20
      %p121 = scmp.eq.s32.totalorder %s120, 0
      %s123 = sadd.s32 %s122, 1
      %s124 = scalar_select %p121, %s122, %s123
      %p127 = pneg %p121
      %p128 = scmp.eq.s32.totalorder %s13, 1
      %p129 = por %p127, %p128
      %p130 = scmp.ne.s32.totalorder %s122, %s125
      %p131 = scmp.eq.s32.totalorder %s13, 0
      %p132 = por %p130, %p131
      %p133 = scmp.ne.s32.totalorder %s122, %s125
      %p134 = scmp.eq.s32.totalorder %s18, 1
      %p135 = por %p133, %p134
      %p136 = scmp.ne.s32.totalorder %s125, %s126
      %p137 = scmp.eq.s32.totalorder %s18, 0
      %p138 = por %p136, %p137
      %p139 = scmp.ne.s32.totalorder %s125, %s126
      %p140 = scmp.eq.s32.totalorder %s19, 1
      %p141 = por %p139, %p140
      %p143 = scmp.ne.s32.totalorder %s126, %s142
      %p144 = scmp.eq.s32.totalorder %s19, 0
      %p145 = por %p143, %p144
      %p146 = scmp.le.s32.totalorder 1, %s13
      %p147 = scmp.lt.s32.totalorder %s13, 3
      %p148 = pnand %p146, %p147
      %p149 = pneg %p148
      // Predicated region
      $region9: #{enhanced_bilstm_forward.4} parent=5 // pred_check
        _
      $region10: #{enhanced_bilstm_forward.4} parent=5 // pred_check_branch
        %151 = sbr.rel (%p148) target = $region12
      $region11: #{enhanced_bilstm_forward.4} parent=5 // pred_region
        %s152 = ssub.s32 %s13, 1
        // Predicated region
        $region13: #{enhanced_bilstm_forward.4} parent=11 // pred_check
          %p153 = pneg %p34
        $region14: #{enhanced_bilstm_forward.4} parent=11 // pred_check_branch
          %155 = sbr.rel (%p153) target = $region16
        $region15: #{enhanced_bilstm_forward.4} parent=11 // pred_region
          _
        $region16: #{enhanced_bilstm_forward.4} parent=11 // pred_fallthru
          _
      $region12: #{enhanced_bilstm_forward.4} parent=5 // pred_fallthru
        _
      %p156 = scmp.lt.s32.totalorder %s13, 2
      // Predicated region
      $region17: #{enhanced_bilstm_forward.4} parent=5 // pred_check
        %p157 = pneg %p156
      $region18: #{enhanced_bilstm_forward.4} parent=5 // pred_check_branch
        %159 = sbr.rel (%p157) target = $region20
      $region19: #{enhanced_bilstm_forward.4} parent=5 // pred_region
        // Predicated region
        $region21: #{enhanced_bilstm_forward.4} parent=19 // pred_check
          %p160 = pneg %p54
        $region22: #{enhanced_bilstm_forward.4} parent=19 // pred_check_branch
          %162 = sbr.rel (%p160) target = $region24
        $region23: #{enhanced_bilstm_forward.4} parent=19 // pred_region
          %s163 = sand.u32 %s44, 1
          %s164 = scalar_lea.sflag [#allocation4], %s163
          %s165 = sand.u32 %s44, 1
          %s166 = smul.addr %s165, 1024
          %s167 = scalar_lea.vmem [#allocation3], %s166
          %s168 = smul.u32 4, %s13
          %s170 = ssub.s32 16384, 16384
          %171 = vsyncadd %s164, %s170
          %s172 = smul.addr %s168, 128
          %s173 = scalar_lea.hbm %s1, %s172
          %s174 = sshll.u32 %s167, 4
          %s175 = int_to_ptr.vmem [resolvable:$true] %s174
          %180 = dma.hbm_to_vmem [thread:$0]  %s173, 16384, %s175, %s164, 1024, 512, 32
        $region24: #{enhanced_bilstm_forward.4} parent=19 // pred_fallthru
          _
        // Predicated region
        $region25: #{enhanced_bilstm_forward.4} parent=19 // pred_check
          %p181 = pneg %p80
        $region26: #{enhanced_bilstm_forward.4} parent=19 // pred_check_branch
          %183 = sbr.rel (%p181) target = $region28
        $region27: #{enhanced_bilstm_forward.4} parent=19 // pred_region
          %s184 = sand.u32 %s70, 1
          %s185 = sand.u32 %s70, 1
          %s186 = smul.addr %s185, 512
          %s187 = scalar_lea.vmem [#allocation5], %s186
          %s188 = smul.u32 4, %s13
          %s189 = smul.addr %s188, 8
          %s190 = scalar_lea.vmem %s2, %s189
          // Predicated region
          $region29: #{enhanced_bilstm_forward.4} parent=27 // pred_check
            _
          $region30: #{enhanced_bilstm_forward.4} parent=27 // pred_check_branch
            %192 = sbr.rel (0) target = $region32
          $region31: #{enhanced_bilstm_forward.4} parent=27 // pred_region
            // Predicated region
            $region33: #{enhanced_bilstm_forward.4} parent=31 // pred_check
              _
            $region34: #{enhanced_bilstm_forward.4} parent=31 // pred_check_branch
              %194 = sbr.rel (0) target = $region36
            $region35: #{enhanced_bilstm_forward.4} parent=31 // pred_region
              loop: start=0, step=1, limit=1
              $region37: #{enhanced_bilstm_forward.4} parent=35 // loop_pre_header
                _
              $region38: #{enhanced_bilstm_forward.4} parent=35 // loop_header
                %s196 = sphi 0, %s200
                %p197 = scmp.ge.s32.totalorder %s196, 1
                %s201 = sphi %s190, %s190
                %s202 = sphi %s187, %s187
              $region39: #{enhanced_bilstm_forward.4} parent=35 // loop_header_branch
                %199 = sbr.rel (%p197) target = $region43
              $region40: #{enhanced_bilstm_forward.4} parent=35 // loop_body
                %v203 = vld [vmem:[%s201] sm:$0xff]
                %204 = vst [vmem:[%s202] sm:$0xff] %v203
                %v205 = vld [vmem:[%s201 + $0x8] sm:$0xff]
                %206 = vst [vmem:[%s202 + $0x8] sm:$0xff] %v205
                %v207 = vld [vmem:[%s201 + $0x10] sm:$0xff]
                %208 = vst [vmem:[%s202 + $0x10] sm:$0xff] %v207
                %v209 = vld [vmem:[%s201 + $0x18] sm:$0xff]
                %210 = vst [vmem:[%s202 + $0x18] sm:$0xff] %v209
                %v211 = vld [vmem:[%s201 + $0x40] sm:$0xff]
                %212 = vst [vmem:[%s202 + $0x20] sm:$0xff] %v211
                %v213 = vld [vmem:[%s201 + $0x48] sm:$0xff]
                %214 = vst [vmem:[%s202 + $0x28] sm:$0xff] %v213
                %v215 = vld [vmem:[%s201 + $0x50] sm:$0xff]
                %216 = vst [vmem:[%s202 + $0x30] sm:$0xff] %v215
                %v217 = vld [vmem:[%s201 + $0x58] sm:$0xff]
                %218 = vst [vmem:[%s202 + $0x38] sm:$0xff] %v217
                %v219 = vld [vmem:[%s201 + $0x80] sm:$0xff]
                %220 = vst [vmem:[%s202 + $0x40] sm:$0xff] %v219
                %v221 = vld [vmem:[%s201 + $0x88] sm:$0xff]
                %222 = vst [vmem:[%s202 + $0x48] sm:$0xff] %v221
                %v223 = vld [vmem:[%s201 + $0x90] sm:$0xff]
                %224 = vst [vmem:[%s202 + $0x50] sm:$0xff] %v223
                %v225 = vld [vmem:[%s201 + $0x98] sm:$0xff]
                %226 = vst [vmem:[%s202 + $0x58] sm:$0xff] %v225
                %v227 = vld [vmem:[%s201 + $0xc0] sm:$0xff]
                %228 = vst [vmem:[%s202 + $0x60] sm:$0xff] %v227
                %v229 = vld [vmem:[%s201 + $0xc8] sm:$0xff]
                %230 = vst [vmem:[%s202 + $0x68] sm:$0xff] %v229
                %v231 = vld [vmem:[%s201 + $0xd0] sm:$0xff]
                %232 = vst [vmem:[%s202 + $0x70] sm:$0xff] %v231
                %v233 = vld [vmem:[%s201 + $0xd8] sm:$0xff]
                %234 = vst [vmem:[%s202 + $0x78] sm:$0xff] %v233
                %v235 = vld [vmem:[%s201 + $0x100] sm:$0xff]
                %236 = vst [vmem:[%s202 + $0x80] sm:$0xff] %v235
                %v237 = vld [vmem:[%s201 + $0x108] sm:$0xff]
                %238 = vst [vmem:[%s202 + $0x88] sm:$0xff] %v237
                %v239 = vld [vmem:[%s201 + $0x110] sm:$0xff]
                %240 = vst [vmem:[%s202 + $0x90] sm:$0xff] %v239
                %v241 = vld [vmem:[%s201 + $0x118] sm:$0xff]
                %242 = vst [vmem:[%s202 + $0x98] sm:$0xff] %v241
                %v243 = vld [vmem:[%s201 + $0x140] sm:$0xff]
                %244 = vst [vmem:[%s202 + $0xa0] sm:$0xff] %v243
                %v245 = vld [vmem:[%s201 + $0x148] sm:$0xff]
                %246 = vst [vmem:[%s202 + $0xa8] sm:$0xff] %v245
                %v247 = vld [vmem:[%s201 + $0x150] sm:$0xff]
                %248 = vst [vmem:[%s202 + $0xb0] sm:$0xff] %v247
                %v249 = vld [vmem:[%s201 + $0x158] sm:$0xff]
                %250 = vst [vmem:[%s202 + $0xb8] sm:$0xff] %v249
                %v251 = vld [vmem:[%s201 + $0x180] sm:$0xff]
                %252 = vst [vmem:[%s202 + $0xc0] sm:$0xff] %v251
                %v253 = vld [vmem:[%s201 + $0x188] sm:$0xff]
                %254 = vst [vmem:[%s202 + $0xc8] sm:$0xff] %v253
                %v255 = vld [vmem:[%s201 + $0x190] sm:$0xff]
                %256 = vst [vmem:[%s202 + $0xd0] sm:$0xff] %v255
                %v257 = vld [vmem:[%s201 + $0x198] sm:$0xff]
                %258 = vst [vmem:[%s202 + $0xd8] sm:$0xff] %v257
                %v259 = vld [vmem:[%s201 + $0x1c0] sm:$0xff]
                %260 = vst [vmem:[%s202 + $0xe0] sm:$0xff] %v259
                %v261 = vld [vmem:[%s201 + $0x1c8] sm:$0xff]
                %262 = vst [vmem:[%s202 + $0xe8] sm:$0xff] %v261
                %v263 = vld [vmem:[%s201 + $0x1d0] sm:$0xff]
                %264 = vst [vmem:[%s202 + $0xf0] sm:$0xff] %v263
                %v265 = vld [vmem:[%s201 + $0x1d8] sm:$0xff]
                %266 = vst [vmem:[%s202 + $0xf8] sm:$0xff] %v265
                %v267 = vld [vmem:[%s201 + $0x200] sm:$0xff]
                %268 = vst [vmem:[%s202 + $0x100] sm:$0xff] %v267
                %v269 = vld [vmem:[%s201 + $0x208] sm:$0xff]
                %270 = vst [vmem:[%s202 + $0x108] sm:$0xff] %v269
                %v271 = vld [vmem:[%s201 + $0x210] sm:$0xff]
                %272 = vst [vmem:[%s202 + $0x110] sm:$0xff] %v271
                %v273 = vld [vmem:[%s201 + $0x218] sm:$0xff]
                %274 = vst [vmem:[%s202 + $0x118] sm:$0xff] %v273
                %v275 = vld [vmem:[%s201 + $0x240] sm:$0xff]
                %276 = vst [vmem:[%s202 + $0x120] sm:$0xff] %v275
                %v277 = vld [vmem:[%s201 + $0x248] sm:$0xff]
                %278 = vst [vmem:[%s202 + $0x128] sm:$0xff] %v277
                %v279 = vld [vmem:[%s201 + $0x250] sm:$0xff]
                %280 = vst [vmem:[%s202 + $0x130] sm:$0xff] %v279
                %v281 = vld [vmem:[%s201 + $0x258] sm:$0xff]
                %282 = vst [vmem:[%s202 + $0x138] sm:$0xff] %v281
                %v283 = vld [vmem:[%s201 + $0x280] sm:$0xff]
                %284 = vst [vmem:[%s202 + $0x140] sm:$0xff] %v283
                %v285 = vld [vmem:[%s201 + $0x288] sm:$0xff]
                %286 = vst [vmem:[%s202 + $0x148] sm:$0xff] %v285
                %v287 = vld [vmem:[%s201 + $0x290] sm:$0xff]
                %288 = vst [vmem:[%s202 + $0x150] sm:$0xff] %v287
                %v289 = vld [vmem:[%s201 + $0x298] sm:$0xff]
                %290 = vst [vmem:[%s202 + $0x158] sm:$0xff] %v289
                %v291 = vld [vmem:[%s201 + $0x2c0] sm:$0xff]
                %292 = vst [vmem:[%s202 + $0x160] sm:$0xff] %v291
                %v293 = vld [vmem:[%s201 + $0x2c8] sm:$0xff]
                %294 = vst [vmem:[%s202 + $0x168] sm:$0xff] %v293
                %v295 = vld [vmem:[%s201 + $0x2d0] sm:$0xff]
                %296 = vst [vmem:[%s202 + $0x170] sm:$0xff] %v295
                %v297 = vld [vmem:[%s201 + $0x2d8] sm:$0xff]
                %298 = vst [vmem:[%s202 + $0x178] sm:$0xff] %v297
                %v299 = vld [vmem:[%s201 + $0x300] sm:$0xff]
                %300 = vst [vmem:[%s202 + $0x180] sm:$0xff] %v299
                %v301 = vld [vmem:[%s201 + $0x308] sm:$0xff]
                %302 = vst [vmem:[%s202 + $0x188] sm:$0xff] %v301
                %v303 = vld [vmem:[%s201 + $0x310] sm:$0xff]
                %304 = vst [vmem:[%s202 + $0x190] sm:$0xff] %v303
                %v305 = vld [vmem:[%s201 + $0x318] sm:$0xff]
                %306 = vst [vmem:[%s202 + $0x198] sm:$0xff] %v305
                %v307 = vld [vmem:[%s201 + $0x340] sm:$0xff]
                %308 = vst [vmem:[%s202 + $0x1a0] sm:$0xff] %v307
                %v309 = vld [vmem:[%s201 + $0x348] sm:$0xff]
                %310 = vst [vmem:[%s202 + $0x1a8] sm:$0xff] %v309
                %v311 = vld [vmem:[%s201 + $0x350] sm:$0xff]
                %312 = vst [vmem:[%s202 + $0x1b0] sm:$0xff] %v311
                %v313 = vld [vmem:[%s201 + $0x358] sm:$0xff]
                %314 = vst [vmem:[%s202 + $0x1b8] sm:$0xff] %v313
                %v315 = vld [vmem:[%s201 + $0x380] sm:$0xff]
                %316 = vst [vmem:[%s202 + $0x1c0] sm:$0xff] %v315
                %v317 = vld [vmem:[%s201 + $0x388] sm:$0xff]
                %318 = vst [vmem:[%s202 + $0x1c8] sm:$0xff] %v317
                %v319 = vld [vmem:[%s201 + $0x390] sm:$0xff]
                %320 = vst [vmem:[%s202 + $0x1d0] sm:$0xff] %v319
                %v321 = vld [vmem:[%s201 + $0x398] sm:$0xff]
                %322 = vst [vmem:[%s202 + $0x1d8] sm:$0xff] %v321
                %v323 = vld [vmem:[%s201 + $0x3c0] sm:$0xff]
                %324 = vst [vmem:[%s202 + $0x1e0] sm:$0xff] %v323
                %v325 = vld [vmem:[%s201 + $0x3c8] sm:$0xff]
                %326 = vst [vmem:[%s202 + $0x1e8] sm:$0xff] %v325
                %v327 = vld [vmem:[%s201 + $0x3d0] sm:$0xff]
                %328 = vst [vmem:[%s202 + $0x1f0] sm:$0xff] %v327
                %v329 = vld [vmem:[%s201 + $0x3d8] sm:$0xff]
                %330 = vst [vmem:[%s202 + $0x1f8] sm:$0xff] %v329
              $region41: #{enhanced_bilstm_forward.4} parent=35 // loop_footer
                %s200 = sadd.s32 1, %s196
              $region42: #{enhanced_bilstm_forward.4} parent=35 // loop_footer_branch
                %195 = sbr.rel target = $region38
              $region43: #{enhanced_bilstm_forward.4} parent=35 // loop_exit
                _
            $region36: #{enhanced_bilstm_forward.4} parent=31 // pred_fallthru
              _
            // Predicated region
            $region44: #{enhanced_bilstm_forward.4} parent=31 // pred_check
              _
            $region45: #{enhanced_bilstm_forward.4} parent=31 // pred_check_branch
              %332 = sbr.rel target = $region47
            $region46: #{enhanced_bilstm_forward.4} parent=31 // pred_region
              _
            $region47: #{enhanced_bilstm_forward.4} parent=31 // pred_fallthru
              _
          $region32: #{enhanced_bilstm_forward.4} parent=27 // pred_fallthru
            _
          %333 = vnop
        $region28: #{enhanced_bilstm_forward.4} parent=19 // pred_fallthru
          _
        // Predicated region
        $region48: #{enhanced_bilstm_forward.4} parent=19 // pred_check
          %p334 = pneg %p106
        $region49: #{enhanced_bilstm_forward.4} parent=19 // pred_check_branch
          %336 = sbr.rel (%p334) target = $region51
        $region50: #{enhanced_bilstm_forward.4} parent=19 // pred_region
          %s337 = smul.u32 4, %s13
          %p338 = scmp.lt.s32.totalorder %s337, 7
          %s339 = scalar_select %p338, %s337, 7
          %s340 = scalar_lea.vmem %s3, %s339
          %s341 = smul.u32 4, %s13
        $region51: #{enhanced_bilstm_forward.4} parent=19 // pred_fallthru
          _
      $region20: #{enhanced_bilstm_forward.4} parent=5 // pred_fallthru
        _
      %p342 = scmp.le.s32.totalorder 1, %s13
      %p343 = scmp.lt.s32.totalorder %s13, 3
      %p344 = pnand %p342, %p343
      %p345 = pneg %p344
      // Predicated region
      $region52: #{enhanced_bilstm_forward.4} parent=5 // pred_check
        _
      $region53: #{enhanced_bilstm_forward.4} parent=5 // pred_check_branch
        %347 = sbr.rel (%p344) target = $region55
      $region54: #{enhanced_bilstm_forward.4} parent=5 // pred_region
        %s348 = ssub.s32 %s13, 1
        %s349 = sand.u32 %s47, 1
        %s350 = scalar_lea.sflag [#allocation4], %s349
        %s351 = sand.u32 %s47, 1
        %s352 = smul.addr %s351, 1024
        %s353 = scalar_lea.vmem [#allocation3], %s352
        // Predicated region
        $region56: #{enhanced_bilstm_forward.4} parent=54 // pred_check
          %p354 = pneg %p60
        $region57: #{enhanced_bilstm_forward.4} parent=54 // pred_check_branch
          %356 = sbr.rel (%p354) target = $region59
        $region58: #{enhanced_bilstm_forward.4} parent=54 // pred_region
          %357 = dma.done %s350, 16384
        $region59: #{enhanced_bilstm_forward.4} parent=54 // pred_fallthru
          _
        %s358 = sand.u32 %s73, 1
        %s359 = sand.u32 %s73, 1
        %s360 = smul.addr %s359, 512
        %s361 = scalar_lea.vmem [#allocation5], %s360
        // Predicated region
        $region60: #{enhanced_bilstm_forward.4} parent=54 // pred_check
          %p362 = pneg %p86
        $region61: #{enhanced_bilstm_forward.4} parent=54 // pred_check_branch
          %364 = sbr.rel (%p362) target = $region63
        $region62: #{enhanced_bilstm_forward.4} parent=54 // pred_region
          _
        $region63: #{enhanced_bilstm_forward.4} parent=54 // pred_fallthru
          _
        %p365 = pneg %p34
        %p366 = pneg %p31
        %s367 = sand.u32 %s47, 1
        %s368 = scalar_lea.sflag [#allocation4], %s367
        %s369 = sand.u32 %s47, 1
        %s370 = smul.addr %s369, 1024
        %s371 = scalar_lea.vmem [#allocation3], %s370
        %p372 = pneg %p60
        %p373 = pneg %p57
        %s374 = sand.u32 %s73, 1
        %s375 = sand.u32 %s73, 1
        %s376 = smul.addr %s375, 512
        %s377 = scalar_lea.vmem [#allocation5], %s376
        %p378 = pneg %p86
        %p379 = pneg %p83
        %s380 = smul.u32 4, %s18
        %p381 = scmp.lt.s32.totalorder %s380, 7
        %s382 = scalar_select %p381, %s380, 7
        %s383 = scalar_lea.vmem %s3, %s382
        %p384 = pneg %p112
        %p385 = pneg %p109
        %p386 = pneg %p138
        %p387 = pneg %p135
        %s388 = sand.u32 %s125, 1
        %s389 = sand.u32 %s125, 1
        %s390 = smul.addr %s389, 16
        %s391 = scalar_lea.vmem [#allocation6], %s390
        %s392 = smul.u32 4, %s18
        %s393 = smul.u32 4, %s18
        %s394 = smul.u32 4, %s18
        %p395 = scmp.lt.s32.totalorder %s394, 7
        %s396 = scalar_select %p395, %s394, 7
        %s397 = scalar_lea.vmem %s3, %s396
        %s398 = smul.u32 4, %s18
        %v399 = vld [vmem:[%s0] sm:$0xf]
        %v400 = vld [vmem:[%s0 + $0x4] sm:$0xf]
        %v401 = vld [vmem:[%s0 + $0x8] sm:$0xf]
        %v402 = vld [vmem:[%s0 + $0xc] sm:$0xf]
        %v403 = vld [vmem:[%s0 + $0x10] sm:$0xf]
        %v404 = vld [vmem:[%s0 + $0x14] sm:$0xf]
        %v405 = vld [vmem:[%s0 + $0x18] sm:$0xf]
        %v406 = vld [vmem:[%s0 + $0x1c] sm:$0xf]
        %v407 = vld [vmem:[%s353] sm:$0xff]
        %v408 = vld [vmem:[%s353 + $0x8] sm:$0xff]
        %v409 = vld [vmem:[%s353 + $0x10] sm:$0xff]
        %v410 = vld [vmem:[%s353 + $0x18] sm:$0xff]
        %v411 = vld [vmem:[%s353 + $0x20] sm:$0xff]
        %v412 = vld [vmem:[%s353 + $0x28] sm:$0xff]
        %v413 = vld [vmem:[%s353 + $0x30] sm:$0xff]
        %v414 = vld [vmem:[%s353 + $0x38] sm:$0xff]
        %v415 = vld [vmem:[%s353 + $0x40] sm:$0xff]
        %v416 = vld [vmem:[%s353 + $0x48] sm:$0xff]
        %v417 = vld [vmem:[%s353 + $0x50] sm:$0xff]
        %v418 = vld [vmem:[%s353 + $0x58] sm:$0xff]
        %v419 = vld [vmem:[%s353 + $0x60] sm:$0xff]
        %v420 = vld [vmem:[%s353 + $0x68] sm:$0xff]
        %v421 = vld [vmem:[%s353 + $0x70] sm:$0xff]
        %v422 = vld [vmem:[%s353 + $0x78] sm:$0xff]
        %v423 = vld [vmem:[%s353 + $0x80] sm:$0xff]
        %v424 = vld [vmem:[%s353 + $0x88] sm:$0xff]
        %v425 = vld [vmem:[%s353 + $0x90] sm:$0xff]
        %v426 = vld [vmem:[%s353 + $0x98] sm:$0xff]
        %v427 = vld [vmem:[%s353 + $0xa0] sm:$0xff]
        %v428 = vld [vmem:[%s353 + $0xa8] sm:$0xff]
        %v429 = vld [vmem:[%s353 + $0xb0] sm:$0xff]
        %v430 = vld [vmem:[%s353 + $0xb8] sm:$0xff]
        %v431 = vld [vmem:[%s353 + $0xc0] sm:$0xff]
        %v432 = vld [vmem:[%s353 + $0xc8] sm:$0xff]
        %v433 = vld [vmem:[%s353 + $0xd0] sm:$0xff]
        %v434 = vld [vmem:[%s353 + $0xd8] sm:$0xff]
        %v435 = vld [vmem:[%s353 + $0xe0] sm:$0xff]
        %v436 = vld [vmem:[%s353 + $0xe8] sm:$0xff]
        %v437 = vld [vmem:[%s353 + $0xf0] sm:$0xff]
        %v438 = vld [vmem:[%s353 + $0xf8] sm:$0xff]
        %v439 = vld [vmem:[%s353 + $0x100] sm:$0xff]
        %v440 = vld [vmem:[%s353 + $0x108] sm:$0xff]
        %v441 = vld [vmem:[%s353 + $0x110] sm:$0xff]
        %v442 = vld [vmem:[%s353 + $0x118] sm:$0xff]
        %v443 = vld [vmem:[%s353 + $0x120] sm:$0xff]
        %v444 = vld [vmem:[%s353 + $0x128] sm:$0xff]
        %v445 = vld [vmem:[%s353 + $0x130] sm:$0xff]
        %v446 = vld [vmem:[%s353 + $0x138] sm:$0xff]
        %v447 = vld [vmem:[%s353 + $0x140] sm:$0xff]
        %v448 = vld [vmem:[%s353 + $0x148] sm:$0xff]
        %v449 = vld [vmem:[%s353 + $0x150] sm:$0xff]
        %v450 = vld [vmem:[%s353 + $0x158] sm:$0xff]
        %v451 = vld [vmem:[%s353 + $0x160] sm:$0xff]
        %v452 = vld [vmem:[%s353 + $0x168] sm:$0xff]
        %v453 = vld [vmem:[%s353 + $0x170] sm:$0xff]
        %v454 = vld [vmem:[%s353 + $0x178] sm:$0xff]
        %v455 = vld [vmem:[%s353 + $0x180] sm:$0xff]
        %v456 = vld [vmem:[%s353 + $0x188] sm:$0xff]
        %v457 = vld [vmem:[%s353 + $0x190] sm:$0xff]
        %v458 = vld [vmem:[%s353 + $0x198] sm:$0xff]
        %v459 = vld [vmem:[%s353 + $0x1a0] sm:$0xff]
        %v460 = vld [vmem:[%s353 + $0x1a8] sm:$0xff]
        %v461 = vld [vmem:[%s353 + $0x1b0] sm:$0xff]
        %v462 = vld [vmem:[%s353 + $0x1b8] sm:$0xff]
        %v463 = vld [vmem:[%s353 + $0x1c0] sm:$0xff]
        %v464 = vld [vmem:[%s353 + $0x1c8] sm:$0xff]
        %v465 = vld [vmem:[%s353 + $0x1d0] sm:$0xff]
        %v466 = vld [vmem:[%s353 + $0x1d8] sm:$0xff]
        %v467 = vld [vmem:[%s353 + $0x1e0] sm:$0xff]
        %v468 = vld [vmem:[%s353 + $0x1e8] sm:$0xff]
        %v469 = vld [vmem:[%s353 + $0x1f0] sm:$0xff]
        %v470 = vld [vmem:[%s353 + $0x1f8] sm:$0xff]
        %v471 = vld [vmem:[%s353 + $0x200] sm:$0xff]
        %v472 = vld [vmem:[%s353 + $0x208] sm:$0xff]
        %v473 = vld [vmem:[%s353 + $0x210] sm:$0xff]
        %v474 = vld [vmem:[%s353 + $0x218] sm:$0xff]
        %v475 = vld [vmem:[%s353 + $0x220] sm:$0xff]
        %v476 = vld [vmem:[%s353 + $0x228] sm:$0xff]
        %v477 = vld [vmem:[%s353 + $0x230] sm:$0xff]
        %v478 = vld [vmem:[%s353 + $0x238] sm:$0xff]
        %v479 = vld [vmem:[%s353 + $0x240] sm:$0xff]
        %v480 = vld [vmem:[%s353 + $0x248] sm:$0xff]
        %v481 = vld [vmem:[%s353 + $0x250] sm:$0xff]
        %v482 = vld [vmem:[%s353 + $0x258] sm:$0xff]
        %v483 = vld [vmem:[%s353 + $0x260] sm:$0xff]
        %v484 = vld [vmem:[%s353 + $0x268] sm:$0xff]
        %v485 = vld [vmem:[%s353 + $0x270] sm:$0xff]
        %v486 = vld [vmem:[%s353 + $0x278] sm:$0xff]
        %v487 = vld [vmem:[%s353 + $0x280] sm:$0xff]
        %v488 = vld [vmem:[%s353 + $0x288] sm:$0xff]
        %v489 = vld [vmem:[%s353 + $0x290] sm:$0xff]
        %v490 = vld [vmem:[%s353 + $0x298] sm:$0xff]
        %v491 = vld [vmem:[%s353 + $0x2a0] sm:$0xff]
        %v492 = vld [vmem:[%s353 + $0x2a8] sm:$0xff]
        %v493 = vld [vmem:[%s353 + $0x2b0] sm:$0xff]
        %v494 = vld [vmem:[%s353 + $0x2b8] sm:$0xff]
        %v495 = vld [vmem:[%s353 + $0x2c0] sm:$0xff]
        %v496 = vld [vmem:[%s353 + $0x2c8] sm:$0xff]
        %v497 = vld [vmem:[%s353 + $0x2d0] sm:$0xff]
        %v498 = vld [vmem:[%s353 + $0x2d8] sm:$0xff]
        %v499 = vld [vmem:[%s353 + $0x2e0] sm:$0xff]
        %v500 = vld [vmem:[%s353 + $0x2e8] sm:$0xff]
        %v501 = vld [vmem:[%s353 + $0x2f0] sm:$0xff]
        %v502 = vld [vmem:[%s353 + $0x2f8] sm:$0xff]
        %v503 = vld [vmem:[%s353 + $0x300] sm:$0xff]
        %v504 = vld [vmem:[%s353 + $0x308] sm:$0xff]
        %v505 = vld [vmem:[%s353 + $0x310] sm:$0xff]
        %v506 = vld [vmem:[%s353 + $0x318] sm:$0xff]
        %v507 = vld [vmem:[%s353 + $0x320] sm:$0xff]
        %v508 = vld [vmem:[%s353 + $0x328] sm:$0xff]
        %v509 = vld [vmem:[%s353 + $0x330] sm:$0xff]
        %v510 = vld [vmem:[%s353 + $0x338] sm:$0xff]
        %v511 = vld [vmem:[%s353 + $0x340] sm:$0xff]
        %v512 = vld [vmem:[%s353 + $0x348] sm:$0xff]
        %v513 = vld [vmem:[%s353 + $0x350] sm:$0xff]
        %v514 = vld [vmem:[%s353 + $0x358] sm:$0xff]
        %v515 = vld [vmem:[%s353 + $0x360] sm:$0xff]
        %v516 = vld [vmem:[%s353 + $0x368] sm:$0xff]
        %v517 = vld [vmem:[%s353 + $0x370] sm:$0xff]
        %v518 = vld [vmem:[%s353 + $0x378] sm:$0xff]
        %v519 = vld [vmem:[%s353 + $0x380] sm:$0xff]
        %v520 = vld [vmem:[%s353 + $0x388] sm:$0xff]
        %v521 = vld [vmem:[%s353 + $0x390] sm:$0xff]
        %v522 = vld [vmem:[%s353 + $0x398] sm:$0xff]
        %v523 = vld [vmem:[%s353 + $0x3a0] sm:$0xff]
        %v524 = vld [vmem:[%s353 + $0x3a8] sm:$0xff]
        %v525 = vld [vmem:[%s353 + $0x3b0] sm:$0xff]
        %v526 = vld [vmem:[%s353 + $0x3b8] sm:$0xff]
        %v527 = vld [vmem:[%s353 + $0x3c0] sm:$0xff]
        %v528 = vld [vmem:[%s353 + $0x3c8] sm:$0xff]
        %v529 = vld [vmem:[%s353 + $0x3d0] sm:$0xff]
        %v530 = vld [vmem:[%s353 + $0x3d8] sm:$0xff]
        %v531 = vld [vmem:[%s353 + $0x3e0] sm:$0xff]
        %v532 = vld [vmem:[%s353 + $0x3e8] sm:$0xff]
        %v533 = vld [vmem:[%s353 + $0x3f0] sm:$0xff]
        %v534 = vld [vmem:[%s353 + $0x3f8] sm:$0xff]
        %v535 = vld [vmem:[%s397] sm:$0xf]
        %v537 = vlaneseq
        %v538 = vshrl.u32 %v537, 7
        %v539 = vsub.s32 0, %v538
        %v540 = vrot.slane %v535, %v539
        %v541 = vlaneseq
        %v542 = vshrl.u32 %v541, 7
        %v543 = vsub.s32 1, %v542
        %v544 = vrot.slane %v535, %v543
        %v545 = vlaneseq
        %v546 = vshrl.u32 %v545, 7
        %v547 = vsub.s32 2, %v546
        %v548 = vrot.slane %v535, %v547
        %v549 = vlaneseq
        %v550 = vshrl.u32 %v549, 7
        %v551 = vsub.s32 3, %v550
        %v552 = vrot.slane %v535, %v551
        %v553 = vcombine.low %v540, %v544
        %v554 = vcombine.low %v548, %v552
        %v556 = vunpack.c.l.s4 1983009808
        %v557 = vunpack.c.0.s8 %v556
        %v558 = vlaneseq
        %v559 = vshrl.u32 %v558, 7
        %v560 = vsub.s32 %v557, %v559
        %v561 = vrot.slane %v553, %v560
        %v563 = vunpack.c.l.s4 1983009808
        %v564 = vunpack.c.0.s8 %v563
        %v565 = vlaneseq
        %v566 = vshrl.u32 %v565, 7
        %v567 = vsub.s32 %v564, %v566
        %v568 = vrot.slane %v554, %v567
        %v569 = vcombine.low %v561, %v568
        %v578 = vcombine.low %v399, %v400
        %v579 = vcombine.low %v401, %v402
        %v581 = vunpack.c.l.s4 1983009808
        %v582 = vunpack.c.0.s8 %v581
        %v583 = vlaneseq
        %v584 = vshrl.u32 %v583, 7
        %v585 = vsub.s32 %v582, %v584
        %v586 = vrot.slane %v578, %v585
        %v588 = vunpack.c.l.s4 1983009808
        %v589 = vunpack.c.0.s8 %v588
        %v590 = vlaneseq
        %v591 = vshrl.u32 %v590, 7
        %v592 = vsub.s32 %v589, %v591
        %v593 = vrot.slane %v579, %v592
        %v594 = vcombine.low %v586, %v593
        %v595 = vcombine.high %v586, %v593
        %v596 = vcombine.low %v403, %v404
        %v597 = vcombine.low %v405, %v406
        %v599 = vunpack.c.l.s4 1983009808
        %v600 = vunpack.c.0.s8 %v599
        %v601 = vlaneseq
        %v602 = vshrl.u32 %v601, 7
        %v603 = vsub.s32 %v600, %v602
        %v604 = vrot.slane %v596, %v603
        %v606 = vunpack.c.l.s4 1983009808
        %v607 = vunpack.c.0.s8 %v606
        %v608 = vlaneseq
        %v609 = vshrl.u32 %v608, 7
        %v610 = vsub.s32 %v607, %v609
        %v611 = vrot.slane %v597, %v610
        %v612 = vcombine.low %v604, %v611
        %v613 = vcombine.high %v604, %v611
        %v618 = vcombine.low %v569, %v569
        %v619 = vcombine.high %v569, %v569
        %v621 = vunpack.c.l.s4 1983009808
        %v622 = vunpack.c.0.s8 %v621
        %v623 = vlaneseq
        %v624 = vshrl.u32 %v623, 7
        %v625 = vsub.s32 %v622, %v624
        %v626 = vrot.slane %v618, %v625
        %v628 = vunpack.c.l.s4 1983009808
        %v629 = vunpack.c.0.s8 %v628
        %v630 = vlaneseq
        %v631 = vshrl.u32 %v630, 7
        %v632 = vsub.s32 %v629, %v631
        %v633 = vrot.slane %v619, %v632
        %v634 = vcombine.low %v626, %v626
        %v635 = vcombine.high %v626, %v626
        %v636 = vcombine.low %v633, %v633
        %v637 = vcombine.high %v633, %v633
        %642 = vmatprep.subr.mxu0 %v468
        %643 = vmatpush1.msra.mxu0 %v467
        %644 = vmatprep.subr.mxu0 %v464
        %645 = vmatpush1.msra.mxu0 %v463
        %646 = vmatprep.subr.mxu0 %v460
        %647 = vmatpush1.msra.mxu0 %v459
        %648 = vmatprep.subr.mxu0 %v456
        %649 = vmatpush1.msra.mxu0 %v455
        %650 = vmatprep.subr.mxu0 %v452
        %651 = vmatpush1.msra.mxu0 %v451
        %652 = vmatprep.subr.mxu0 %v448
        %653 = vmatpush1.msra.mxu0 %v447
        %654 = vmatprep.subr.mxu0 %v444
        %655 = vmatpush1.msra.mxu0 %v443
        %656 = vmatprep.subr.mxu0 %v440
        %657 = vmatpush1.msra.mxu0 %v439
        %658 = vmatprep.subr.mxu0 %v436
        %659 = vmatpush1.msra.mxu0 %v435
        %660 = vmatprep.subr.mxu0 %v432
        %661 = vmatpush1.msra.mxu0 %v431
        %662 = vmatprep.subr.mxu0 %v428
        %663 = vmatpush1.msra.mxu0 %v427
        %664 = vmatprep.subr.mxu0 %v424
        %665 = vmatpush1.msra.mxu0 %v423
        %666 = vmatprep.subr.mxu0 %v420
        %667 = vmatpush1.msra.mxu0 %v419
        %668 = vmatprep.subr.mxu0 %v416
        %669 = vmatpush1.msra.mxu0 %v415
        %670 = vmatprep.subr.mxu0 %v412
        %671 = vmatpush1.msra.mxu0 %v411
        %672 = vmatprep.subr.mxu0 %v408
        %673 = vmatpush1.msra.mxu0 %v407
        %674 = vmatprep.subr.mxu0 %v532
        %675 = vmatpush2.msra.mxu0 %v531
        %676 = vmatprep.subr.mxu0 %v528
        %677 = vmatpush2.msra.mxu0 %v527
        %678 = vmatprep.subr.mxu0 %v524
        %679 = vmatpush2.msra.mxu0 %v523
        %680 = vmatprep.subr.mxu0 %v520
        %681 = vmatpush2.msra.mxu0 %v519
        %682 = vmatprep.subr.mxu0 %v516
        %683 = vmatpush2.msra.mxu0 %v515
        %684 = vmatprep.subr.mxu0 %v512
        %685 = vmatpush2.msra.mxu0 %v511
        %686 = vmatprep.subr.mxu0 %v508
        %687 = vmatpush2.msra.mxu0 %v507
        %688 = vmatprep.subr.mxu0 %v504
        %689 = vmatpush2.msra.mxu0 %v503
        %690 = vmatprep.subr.mxu0 %v500
        %691 = vmatpush2.msra.mxu0 %v499
        %692 = vmatprep.subr.mxu0 %v496
        %693 = vmatpush2.msra.mxu0 %v495
        %694 = vmatprep.subr.mxu0 %v492
        %695 = vmatpush2.msra.mxu0 %v491
        %696 = vmatprep.subr.mxu0 %v488
        %697 = vmatpush2.msra.mxu0 %v487
        %698 = vmatprep.subr.mxu0 %v484
        %699 = vmatpush2.msra.mxu0 %v483
        %700 = vmatprep.subr.mxu0 %v480
        %701 = vmatpush2.msra.mxu0 %v479
        %702 = vmatprep.subr.mxu0 %v476
        %703 = vmatpush2.msra.mxu0 %v475
        %704 = vmatprep.subr.mxu0 %v472
        %705 = vmatpush2.msra.mxu0 %v471
        %706 = vmatprep.mubr.f32.mxu0 %v595
        %707 = vmatmul.mubr.f32.gmra.mxu0 %v594
        %v708 = vpop.f32.mrf.mxu0
        %v709 = vadd.f32 %v634, %v708
        %v710 = vpop.f32.mrf.mxu0
        %v711 = vadd.f32 %v635, %v710
        %712 = vmatprep.mubr.f32.mxu0 %v613
        %713 = vmatmul.mubr.f32.gmra.mxu0 %v612
        %v714 = vpop.f32.mrf.mxu0
        %v715 = vadd.f32 %v634, %v714
        %v716 = vpop.f32.mrf.mxu0
        %v717 = vadd.f32 %v635, %v716
        %718 = vdwg.mxu0
        %719 = vmatprep.subr.mxu0 %v470
        %720 = vmatpush1.msra.mxu0 %v469
        %721 = vmatprep.subr.mxu0 %v466
        %722 = vmatpush1.msra.mxu0 %v465
        %723 = vmatprep.subr.mxu0 %v462
        %724 = vmatpush1.msra.mxu0 %v461
        %725 = vmatprep.subr.mxu0 %v458
        %726 = vmatpush1.msra.mxu0 %v457
        %727 = vmatprep.subr.mxu0 %v454
        %728 = vmatpush1.msra.mxu0 %v453
        %729 = vmatprep.subr.mxu0 %v450
        %730 = vmatpush1.msra.mxu0 %v449
        %731 = vmatprep.subr.mxu0 %v446
        %732 = vmatpush1.msra.mxu0 %v445
        %733 = vmatprep.subr.mxu0 %v442
        %734 = vmatpush1.msra.mxu0 %v441
        %735 = vmatprep.subr.mxu0 %v438
        %736 = vmatpush1.msra.mxu0 %v437
        %737 = vmatprep.subr.mxu0 %v434
        %738 = vmatpush1.msra.mxu0 %v433
        %739 = vmatprep.subr.mxu0 %v430
        %740 = vmatpush1.msra.mxu0 %v429
        %741 = vmatprep.subr.mxu0 %v426
        %742 = vmatpush1.msra.mxu0 %v425
        %743 = vmatprep.subr.mxu0 %v422
        %744 = vmatpush1.msra.mxu0 %v421
        %745 = vmatprep.subr.mxu0 %v418
        %746 = vmatpush1.msra.mxu0 %v417
        %747 = vmatprep.subr.mxu0 %v414
        %748 = vmatpush1.msra.mxu0 %v413
        %749 = vmatprep.subr.mxu0 %v410
        %750 = vmatpush1.msra.mxu0 %v409
        %751 = vmatprep.subr.mxu0 %v534
        %752 = vmatpush2.msra.mxu0 %v533
        %753 = vmatprep.subr.mxu0 %v530
        %754 = vmatpush2.msra.mxu0 %v529
        %755 = vmatprep.subr.mxu0 %v526
        %756 = vmatpush2.msra.mxu0 %v525
        %757 = vmatprep.subr.mxu0 %v522
        %758 = vmatpush2.msra.mxu0 %v521
        %759 = vmatprep.subr.mxu0 %v518
        %760 = vmatpush2.msra.mxu0 %v517
        %761 = vmatprep.subr.mxu0 %v514
        %762 = vmatpush2.msra.mxu0 %v513
        %763 = vmatprep.subr.mxu0 %v510
        %764 = vmatpush2.msra.mxu0 %v509
        %765 = vmatprep.subr.mxu0 %v506
        %766 = vmatpush2.msra.mxu0 %v505
        %767 = vmatprep.subr.mxu0 %v502
        %768 = vmatpush2.msra.mxu0 %v501
        %769 = vmatprep.subr.mxu0 %v498
        %770 = vmatpush2.msra.mxu0 %v497
        %771 = vmatprep.subr.mxu0 %v494
        %772 = vmatpush2.msra.mxu0 %v493
        %773 = vmatprep.subr.mxu0 %v490
        %774 = vmatpush2.msra.mxu0 %v489
        %775 = vmatprep.subr.mxu0 %v486
        %776 = vmatpush2.msra.mxu0 %v485
        %777 = vmatprep.subr.mxu0 %v482
        %778 = vmatpush2.msra.mxu0 %v481
        %779 = vmatprep.subr.mxu0 %v478
        %780 = vmatpush2.msra.mxu0 %v477
        %781 = vmatprep.subr.mxu0 %v474
        %782 = vmatpush2.msra.mxu0 %v473
        %783 = vmatprep.mubr.f32.mxu0 %v595
        %784 = vmatmul.mubr.f32.gmra.mxu0 %v594
        %v785 = vpop.f32.mrf.mxu0
        %v786 = vadd.f32 %v636, %v785
        %v787 = vpop.f32.mrf.mxu0
        %v788 = vadd.f32 %v637, %v787
        %789 = vmatprep.mubr.f32.mxu0 %v613
        %790 = vmatmul.mubr.f32.gmra.mxu0 %v612
        %v791 = vpop.f32.mrf.mxu0
        %v792 = vadd.f32 %v636, %v791
        %v793 = vpop.f32.mrf.mxu0
        %v794 = vadd.f32 %v637, %v793
        %795 = vdwg.mxu0
        %v804 = vcombine.low %v709, %v711
        %v805 = vcombine.high %v709, %v711
        %v806 = vcombine.low %v786, %v788
        %v807 = vcombine.high %v786, %v788
        %v809 = vunpack.c.l.s4 1983009808
        %v810 = vunpack.c.0.s8 %v809
        %v811 = vlaneseq
        %v812 = vshrl.u32 %v811, 7
        %v813 = vsub.s32 %v810, %v812
        %v814 = vrot.slane %v804, %v813
        %v816 = vunpack.c.l.s4 1983009808
        %v817 = vunpack.c.0.s8 %v816
        %v818 = vlaneseq
        %v819 = vshrl.u32 %v818, 7
        %v820 = vsub.s32 %v817, %v819
        %v821 = vrot.slane %v805, %v820
        %v823 = vunpack.c.l.s4 1983009808
        %v824 = vunpack.c.0.s8 %v823
        %v825 = vlaneseq
        %v826 = vshrl.u32 %v825, 7
        %v827 = vsub.s32 %v824, %v826
        %v828 = vrot.slane %v806, %v827
        %v830 = vunpack.c.l.s4 1983009808
        %v831 = vunpack.c.0.s8 %v830
        %v832 = vlaneseq
        %v833 = vshrl.u32 %v832, 7
        %v834 = vsub.s32 %v831, %v833
        %v835 = vrot.slane %v807, %v834
        %v836 = vcombine.low %v814, %v828
        %v837 = vcombine.high %v814, %v828
        %v838 = vcombine.low %v821, %v835
        %v839 = vcombine.high %v821, %v835
        %v840 = vcombine.low %v715, %v717
        %v841 = vcombine.high %v715, %v717
        %v842 = vcombine.low %v792, %v794
        %v843 = vcombine.high %v792, %v794
        %v845 = vunpack.c.l.s4 1983009808
        %v846 = vunpack.c.0.s8 %v845
        %v847 = vlaneseq
        %v848 = vshrl.u32 %v847, 7
        %v849 = vsub.s32 %v846, %v848
        %v850 = vrot.slane %v840, %v849
        %v852 = vunpack.c.l.s4 1983009808
        %v853 = vunpack.c.0.s8 %v852
        %v854 = vlaneseq
        %v855 = vshrl.u32 %v854, 7
        %v856 = vsub.s32 %v853, %v855
        %v857 = vrot.slane %v841, %v856
        %v859 = vunpack.c.l.s4 1983009808
        %v860 = vunpack.c.0.s8 %v859
        %v861 = vlaneseq
        %v862 = vshrl.u32 %v861, 7
        %v863 = vsub.s32 %v860, %v862
        %v864 = vrot.slane %v842, %v863
        %v866 = vunpack.c.l.s4 1983009808
        %v867 = vunpack.c.0.s8 %v866
        %v868 = vlaneseq
        %v869 = vshrl.u32 %v868, 7
        %v870 = vsub.s32 %v867, %v869
        %v871 = vrot.slane %v843, %v870
        %v872 = vcombine.low %v850, %v864
        %v873 = vcombine.high %v850, %v864
        %v874 = vcombine.low %v857, %v871
        %v875 = vcombine.high %v857, %v871
        %884 = vst [vmem:[#allocation2] sm:$0xff] %v836
        %885 = vst [vmem:[#allocation2 + $0x8] sm:$0xff] %v837
        %886 = vst [vmem:[#allocation2 + $0x10] sm:$0xff] %v838
        %887 = vst [vmem:[#allocation2 + $0x18] sm:$0xff] %v839
        %888 = vst [vmem:[#allocation2 + $0x20] sm:$0xff] %v872
        %889 = vst [vmem:[#allocation2 + $0x28] sm:$0xff] %v873
        %890 = vst [vmem:[#allocation2 + $0x30] sm:$0xff] %v874
        %891 = vst [vmem:[#allocation2 + $0x38] sm:$0xff] %v875
        %v892 = vld [vmem:[%s361] sm:$0xff]
        %v893 = vld [vmem:[%s361 + $0x8] sm:$0xff]
        %v894 = vld [vmem:[%s361 + $0x10] sm:$0xff]
        %v895 = vld [vmem:[%s361 + $0x18] sm:$0xff]
        %v896 = vld [vmem:[%s361 + $0x20] sm:$0xff]
        %v897 = vld [vmem:[%s361 + $0x28] sm:$0xff]
        %v898 = vld [vmem:[%s361 + $0x30] sm:$0xff]
        %v899 = vld [vmem:[%s361 + $0x38] sm:$0xff]
        %v900 = vld [vmem:[%s361 + $0x40] sm:$0xff]
        %v901 = vld [vmem:[%s361 + $0x48] sm:$0xff]
        %v902 = vld [vmem:[%s361 + $0x50] sm:$0xff]
        %v903 = vld [vmem:[%s361 + $0x58] sm:$0xff]
        %v904 = vld [vmem:[%s361 + $0x60] sm:$0xff]
        %v905 = vld [vmem:[%s361 + $0x68] sm:$0xff]
        %v906 = vld [vmem:[%s361 + $0x70] sm:$0xff]
        %v907 = vld [vmem:[%s361 + $0x78] sm:$0xff]
        %v908 = vld [vmem:[%s361 + $0x80] sm:$0xff]
        %v909 = vld [vmem:[%s361 + $0x88] sm:$0xff]
        %v910 = vld [vmem:[%s361 + $0x90] sm:$0xff]
        %v911 = vld [vmem:[%s361 + $0x98] sm:$0xff]
        %v912 = vld [vmem:[%s361 + $0xa0] sm:$0xff]
        %v913 = vld [vmem:[%s361 + $0xa8] sm:$0xff]
        %v914 = vld [vmem:[%s361 + $0xb0] sm:$0xff]
        %v915 = vld [vmem:[%s361 + $0xb8] sm:$0xff]
        %v916 = vld [vmem:[%s361 + $0xc0] sm:$0xff]
        %v917 = vld [vmem:[%s361 + $0xc8] sm:$0xff]
        %v918 = vld [vmem:[%s361 + $0xd0] sm:$0xff]
        %v919 = vld [vmem:[%s361 + $0xd8] sm:$0xff]
        %v920 = vld [vmem:[%s361 + $0xe0] sm:$0xff]
        %v921 = vld [vmem:[%s361 + $0xe8] sm:$0xff]
        %v922 = vld [vmem:[%s361 + $0xf0] sm:$0xff]
        %v923 = vld [vmem:[%s361 + $0xf8] sm:$0xff]
        %v924 = vld [vmem:[%s361 + $0x100] sm:$0xff]
        %v925 = vld [vmem:[%s361 + $0x108] sm:$0xff]
        %v926 = vld [vmem:[%s361 + $0x110] sm:$0xff]
        %v927 = vld [vmem:[%s361 + $0x118] sm:$0xff]
        %v928 = vld [vmem:[%s361 + $0x120] sm:$0xff]
        %v929 = vld [vmem:[%s361 + $0x128] sm:$0xff]
        %v930 = vld [vmem:[%s361 + $0x130] sm:$0xff]
        %v931 = vld [vmem:[%s361 + $0x138] sm:$0xff]
        %v932 = vld [vmem:[%s361 + $0x140] sm:$0xff]
        %v933 = vld [vmem:[%s361 + $0x148] sm:$0xff]
        %v934 = vld [vmem:[%s361 + $0x150] sm:$0xff]
        %v935 = vld [vmem:[%s361 + $0x158] sm:$0xff]
        %v936 = vld [vmem:[%s361 + $0x160] sm:$0xff]
        %v937 = vld [vmem:[%s361 + $0x168] sm:$0xff]
        %v938 = vld [vmem:[%s361 + $0x170] sm:$0xff]
        %v939 = vld [vmem:[%s361 + $0x178] sm:$0xff]
        %v940 = vld [vmem:[%s361 + $0x180] sm:$0xff]
        %v941 = vld [vmem:[%s361 + $0x188] sm:$0xff]
        %v942 = vld [vmem:[%s361 + $0x190] sm:$0xff]
        %v943 = vld [vmem:[%s361 + $0x198] sm:$0xff]
        %v944 = vld [vmem:[%s361 + $0x1a0] sm:$0xff]
        %v945 = vld [vmem:[%s361 + $0x1a8] sm:$0xff]
        %v946 = vld [vmem:[%s361 + $0x1b0] sm:$0xff]
        %v947 = vld [vmem:[%s361 + $0x1b8] sm:$0xff]
        %v948 = vld [vmem:[%s361 + $0x1c0] sm:$0xff]
        %v949 = vld [vmem:[%s361 + $0x1c8] sm:$0xff]
        %v950 = vld [vmem:[%s361 + $0x1d0] sm:$0xff]
        %v951 = vld [vmem:[%s361 + $0x1d8] sm:$0xff]
        %v952 = vld [vmem:[%s361 + $0x1e0] sm:$0xff]
        %v953 = vld [vmem:[%s361 + $0x1e8] sm:$0xff]
        %v954 = vld [vmem:[%s361 + $0x1f0] sm:$0xff]
        %v955 = vld [vmem:[%s361 + $0x1f8] sm:$0xff]
        loop: start=0, step=1, limit=8
        $region64: #{enhanced_bilstm_forward.4} parent=54 // loop_pre_header
          _
        $region65: #{enhanced_bilstm_forward.4} parent=54 // loop_header
          %s957 = sphi 0, %s961
          %p958 = scmp.ge.s32.totalorder %s957, 8
          %v962 = vphi 0.0, %v1166
          %v963 = vphi 0.0, %v1164
        $region66: #{enhanced_bilstm_forward.4} parent=54 // loop_header_branch
          %960 = sbr.rel (%p958) target = $region70
        $region67: #{enhanced_bilstm_forward.4} parent=54 // loop_body
          %p964 = scmp.eq.s32.totalorder %s18, 0
          %s965 = ssub.s32 7, %s957
          %s966 = scalar_select %p964, %s957, %s965
          %s967 = smul.u32 %s966, 4
          %s968 = smul.addr %s967, 2
          %s969 = scalar_lea.vmem [#allocation2], %s968
          %v970 = vld [vmem:[%s969] sm:$0xff]
          %971 = vmatprep.subr.mxu0 %v953
          %972 = vmatpush1.msra.mxu0 %v952
          %973 = vmatprep.subr.mxu0 %v949
          %974 = vmatpush1.msra.mxu0 %v948
          %975 = vmatprep.subr.mxu0 %v945
          %976 = vmatpush1.msra.mxu0 %v944
          %977 = vmatprep.subr.mxu0 %v941
          %978 = vmatpush1.msra.mxu0 %v940
          %979 = vmatprep.subr.mxu0 %v937
          %980 = vmatpush1.msra.mxu0 %v936
          %981 = vmatprep.subr.mxu0 %v933
          %982 = vmatpush1.msra.mxu0 %v932
          %983 = vmatprep.subr.mxu0 %v929
          %984 = vmatpush1.msra.mxu0 %v928
          %985 = vmatprep.subr.mxu0 %v925
          %986 = vmatpush1.msra.mxu0 %v924
          %987 = vmatprep.subr.mxu0 %v921
          %988 = vmatpush1.msra.mxu0 %v920
          %989 = vmatprep.subr.mxu0 %v917
          %990 = vmatpush1.msra.mxu0 %v916
          %991 = vmatprep.subr.mxu0 %v913
          %992 = vmatpush1.msra.mxu0 %v912
          %993 = vmatprep.subr.mxu0 %v909
          %994 = vmatpush1.msra.mxu0 %v908
          %995 = vmatprep.subr.mxu0 %v905
          %996 = vmatpush1.msra.mxu0 %v904
          %997 = vmatprep.subr.mxu0 %v901
          %998 = vmatpush1.msra.mxu0 %v900
          %999 = vmatprep.subr.mxu0 %v897
          %1000 = vmatpush1.msra.mxu0 %v896
          %1001 = vmatprep.subr.mxu0 %v893
          %1002 = vmatpush1.msra.mxu0 %v892
          %1003 = vmatprep.subr.mxu0 0.0
          %1004 = vmatpush2.msra.mxu0 0.0
          %1005 = vmatprep.subr.mxu0 0.0
          %1006 = vmatpush2.msra.mxu0 0.0
          %1007 = vmatprep.subr.mxu0 0.0
          %1008 = vmatpush2.msra.mxu0 0.0
          %1009 = vmatprep.subr.mxu0 0.0
          %1010 = vmatpush2.msra.mxu0 0.0
          %1011 = vmatprep.subr.mxu0 0.0
          %1012 = vmatpush2.msra.mxu0 0.0
          %1013 = vmatprep.subr.mxu0 0.0
          %1014 = vmatpush2.msra.mxu0 0.0
          %1015 = vmatprep.subr.mxu0 0.0
          %1016 = vmatpush2.msra.mxu0 0.0
          %1017 = vmatprep.subr.mxu0 0.0
          %1018 = vmatpush2.msra.mxu0 0.0
          %1019 = vmatprep.subr.mxu0 0.0
          %1020 = vmatpush2.msra.mxu0 0.0
          %1021 = vmatprep.subr.mxu0 0.0
          %1022 = vmatpush2.msra.mxu0 0.0
          %1023 = vmatprep.subr.mxu0 0.0
          %1024 = vmatpush2.msra.mxu0 0.0
          %1025 = vmatprep.subr.mxu0 0.0
          %1026 = vmatpush2.msra.mxu0 0.0
          %1027 = vmatprep.subr.mxu0 0.0
          %1028 = vmatpush2.msra.mxu0 0.0
          %1029 = vmatprep.subr.mxu0 0.0
          %1030 = vmatpush2.msra.mxu0 0.0
          %1031 = vmatprep.subr.mxu0 0.0
          %1032 = vmatpush2.msra.mxu0 0.0
          %1033 = vmatprep.subr.mxu0 0.0
          %1034 = vmatpush2.msra.mxu0 0.0
          %1035 = vmatprep.mubr.f32.mxu0 0.0
          %1036 = vmatmul.mubr.f32.gmra.mxu0 %v962
          %v1037 = vpop.f32.mrf.mxu0
          %v1038 = vadd.f32 0.0, %v1037
          %v1039 = vpop.f32.mrf.mxu0
          %v1040 = vadd.f32 0.0, %v1039
          %1041 = vdwg.mxu0
          %1042 = vmatprep.subr.mxu0 %v955
          %1043 = vmatpush1.msra.mxu0 %v954
          %1044 = vmatprep.subr.mxu0 %v951
          %1045 = vmatpush1.msra.mxu0 %v950
          %1046 = vmatprep.subr.mxu0 %v947
          %1047 = vmatpush1.msra.mxu0 %v946
          %1048 = vmatprep.subr.mxu0 %v943
          %1049 = vmatpush1.msra.mxu0 %v942
          %1050 = vmatprep.subr.mxu0 %v939
          %1051 = vmatpush1.msra.mxu0 %v938
          %1052 = vmatprep.subr.mxu0 %v935
          %1053 = vmatpush1.msra.mxu0 %v934
          %1054 = vmatprep.subr.mxu0 %v931
          %1055 = vmatpush1.msra.mxu0 %v930
          %1056 = vmatprep.subr.mxu0 %v927
          %1057 = vmatpush1.msra.mxu0 %v926
          %1058 = vmatprep.subr.mxu0 %v923
          %1059 = vmatpush1.msra.mxu0 %v922
          %1060 = vmatprep.subr.mxu0 %v919
          %1061 = vmatpush1.msra.mxu0 %v918
          %1062 = vmatprep.subr.mxu0 %v915
          %1063 = vmatpush1.msra.mxu0 %v914
          %1064 = vmatprep.subr.mxu0 %v911
          %1065 = vmatpush1.msra.mxu0 %v910
          %1066 = vmatprep.subr.mxu0 %v907
          %1067 = vmatpush1.msra.mxu0 %v906
          %1068 = vmatprep.subr.mxu0 %v903
          %1069 = vmatpush1.msra.mxu0 %v902
          %1070 = vmatprep.subr.mxu0 %v899
          %1071 = vmatpush1.msra.mxu0 %v898
          %1072 = vmatprep.subr.mxu0 %v895
          %1073 = vmatpush1.msra.mxu0 %v894
          %1074 = vmatprep.subr.mxu0 0.0
          %1075 = vmatpush2.msra.mxu0 0.0
          %1076 = vmatprep.subr.mxu0 0.0
          %1077 = vmatpush2.msra.mxu0 0.0
          %1078 = vmatprep.subr.mxu0 0.0
          %1079 = vmatpush2.msra.mxu0 0.0
          %1080 = vmatprep.subr.mxu0 0.0
          %1081 = vmatpush2.msra.mxu0 0.0
          %1082 = vmatprep.subr.mxu0 0.0
          %1083 = vmatpush2.msra.mxu0 0.0
          %1084 = vmatprep.subr.mxu0 0.0
          %1085 = vmatpush2.msra.mxu0 0.0
          %1086 = vmatprep.subr.mxu0 0.0
          %1087 = vmatpush2.msra.mxu0 0.0
          %1088 = vmatprep.subr.mxu0 0.0
          %1089 = vmatpush2.msra.mxu0 0.0
          %1090 = vmatprep.subr.mxu0 0.0
          %1091 = vmatpush2.msra.mxu0 0.0
          %1092 = vmatprep.subr.mxu0 0.0
          %1093 = vmatpush2.msra.mxu0 0.0
          %1094 = vmatprep.subr.mxu0 0.0
          %1095 = vmatpush2.msra.mxu0 0.0
          %1096 = vmatprep.subr.mxu0 0.0
          %1097 = vmatpush2.msra.mxu0 0.0
          %1098 = vmatprep.subr.mxu0 0.0
          %1099 = vmatpush2.msra.mxu0 0.0
          %1100 = vmatprep.subr.mxu0 0.0
          %1101 = vmatpush2.msra.mxu0 0.0
          %1102 = vmatprep.subr.mxu0 0.0
          %1103 = vmatpush2.msra.mxu0 0.0
          %1104 = vmatprep.subr.mxu0 0.0
          %1105 = vmatpush2.msra.mxu0 0.0
          %1106 = vmatprep.mubr.f32.mxu0 0.0
          %1107 = vmatmul.mubr.f32.gmra.mxu0 %v962
          %v1108 = vpop.f32.mrf.mxu0
          %v1109 = vadd.f32 0.0, %v1108
          %v1110 = vpop.f32.mrf.mxu0
          %v1111 = vadd.f32 0.0, %v1110
          %1112 = vdwg.mxu0
          %v1117 = vcombine.low %v1038, %v1040
          %v1118 = vcombine.low %v1109, %v1111
          %v1120 = vunpack.c.l.s4 1983009808
          %v1121 = vunpack.c.0.s8 %v1120
          %v1122 = vlaneseq
          %v1123 = vshrl.u32 %v1122, 7
          %v1124 = vsub.s32 %v1121, %v1123
          %v1125 = vrot.slane %v1117, %v1124
          %v1127 = vunpack.c.l.s4 1983009808
          %v1128 = vunpack.c.0.s8 %v1127
          %v1129 = vlaneseq
          %v1130 = vshrl.u32 %v1129, 7
          %v1131 = vsub.s32 %v1128, %v1130
          %v1132 = vrot.slane %v1118, %v1131
          %v1133 = vcombine.low %v1125, %v1132
          %v1135 = vadd.f32 %v970, %v1133
          %v1136 = vxor.u32 %v1135, 2147483648
          %v1137 = vmul.f32 %v1136, 1.442695
          %v1138 = vpow.pop %v1137
          %v1139 = vadd.f32 %v1138, 1.0
          %v1140 = vrcp.pop %v1139
          %v1141 = vmul.f32 1.0, %v1140
          %v1143 = vrot.slane %v1135, 2
          %v1145 = vxor.u32 %v1143, 2147483648
          %v1146 = vmul.f32 %v1145, 1.442695
          %v1147 = vpow.pop %v1146
          %v1148 = vadd.f32 %v1147, 1.0
          %v1149 = vrcp.pop %v1148
          %v1150 = vmul.f32 1.0, %v1149
          %v1151 = vrot.slane %v1135, 4
          %v1153 = vtanh.pop %v1151
          %v1154 = vrot.slane %v1135, 6
          %v1156 = vxor.u32 %v1154, 2147483648
          %v1157 = vmul.f32 %v1156, 1.442695
          %v1158 = vpow.pop %v1157
          %v1159 = vadd.f32 %v1158, 1.0
          %v1160 = vrcp.pop %v1159
          %v1161 = vmul.f32 1.0, %v1160
          %v1162 = vmul.f32 %v1150, %v963
          %v1163 = vmul.f32 %v1141, %v1153
          %v1164 = vadd.f32 %v1162, %v1163
          %v1165 = vtanh.pop %v1164
          %v1166 = vmul.f32 %v1161, %v1165
          %s1167 = smul.u32 %s966, 2
          %s1168 = scalar_lea.vmem %s391, %s1167 [#allocation6]
          %1169 = vst [vmem:[%s1168] sm:$0x3] %v1166
        $region68: #{enhanced_bilstm_forward.4} parent=54 // loop_footer
          %s961 = sadd.s32 1, %s957
        $region69: #{enhanced_bilstm_forward.4} parent=54 // loop_footer_branch
          %956 = sbr.rel target = $region65
        $region70: #{enhanced_bilstm_forward.4} parent=54 // loop_exit
          _
        %s1170 = sand.u32 %s125, 1
        %s1171 = sand.u32 %s125, 1
        %s1172 = smul.addr %s1171, 16
        %s1173 = scalar_lea.vmem [#allocation6], %s1172
        // Predicated region
        $region71: #{enhanced_bilstm_forward.4} parent=54 // pred_check
          %p1174 = pneg %p135
        $region72: #{enhanced_bilstm_forward.4} parent=54 // pred_check_branch
          %1176 = sbr.rel (%p1174) target = $region74
        $region73: #{enhanced_bilstm_forward.4} parent=54 // pred_region
          %s1177 = smul.addr %s18, 2
          %s1178 = scalar_lea.vmem %s4, %s1177
          // Predicated region
          $region75: #{enhanced_bilstm_forward.4} parent=73 // pred_check
            _
          $region76: #{enhanced_bilstm_forward.4} parent=73 // pred_check_branch
            %1180 = sbr.rel (0) target = $region78
          $region77: #{enhanced_bilstm_forward.4} parent=73 // pred_region
            // Predicated region
            $region79: #{enhanced_bilstm_forward.4} parent=77 // pred_check
              _
            $region80: #{enhanced_bilstm_forward.4} parent=77 // pred_check_branch
              %1182 = sbr.rel target = $region82
            $region81: #{enhanced_bilstm_forward.4} parent=77 // pred_region
              // Predicated region
              $region94: #{enhanced_bilstm_forward.4} parent=81 // pred_check
                _
              $region95: #{enhanced_bilstm_forward.4} parent=81 // pred_check_branch
                %1212 = sbr.rel (0) target = $region97
              $region96: #{enhanced_bilstm_forward.4} parent=81 // pred_region
                loop: start=0, step=1, limit=1
                $region98: #{enhanced_bilstm_forward.4} parent=96 // loop_pre_header
                  _
                $region99: #{enhanced_bilstm_forward.4} parent=96 // loop_header
                  %s1214 = sphi 0, %s1218
                  %p1215 = scmp.ge.s32.totalorder %s1214, 1
                  %s1219 = sphi %s1173, %s1173
                  %s1220 = sphi %s1178, %s1178
                $region100: #{enhanced_bilstm_forward.4} parent=96 // loop_header_branch
                  %1217 = sbr.rel (%p1215) target = $region104
                $region101: #{enhanced_bilstm_forward.4} parent=96 // loop_body
                  _
                $region102: #{enhanced_bilstm_forward.4} parent=96 // loop_footer
                  %s1218 = sadd.s32 1, %s1214
                $region103: #{enhanced_bilstm_forward.4} parent=96 // loop_footer_branch
                  %1213 = sbr.rel target = $region99
                $region104: #{enhanced_bilstm_forward.4} parent=96 // loop_exit
                  _
                %s1222 = ssub.s32 4, 1
                loop: start=0, step=1, limit=1
                $region105: #{enhanced_bilstm_forward.4} parent=96 // loop_pre_header
                  _
                $region106: #{enhanced_bilstm_forward.4} parent=96 // loop_header
                  %s1224 = sphi 0, %s1228
                  %p1225 = scmp.ge.s32.totalorder %s1224, 1
                  %s1229 = sphi %s1173, %s1173
                  %s1230 = sphi %s1178, %s1178
                $region107: #{enhanced_bilstm_forward.4} parent=96 // loop_header_branch
                  %1227 = sbr.rel (%p1225) target = $region111
                $region108: #{enhanced_bilstm_forward.4} parent=96 // loop_body
                  %v1231 = vld [vmem:[%s1229] sm:%s1222]
                  %1232 = vst [vmem:[%s1230] sm:%s1222] %v1231
                  %v1233 = vld [vmem:[%s1229 + $0x2] sm:%s1222]
                  %1234 = vst [vmem:[%s1230 + $0x4] sm:%s1222] %v1233
                  %v1235 = vld [vmem:[%s1229 + $0x4] sm:%s1222]
                  %1236 = vst [vmem:[%s1230 + $0x8] sm:%s1222] %v1235
                  %v1237 = vld [vmem:[%s1229 + $0x6] sm:%s1222]
                  %1238 = vst [vmem:[%s1230 + $0xc] sm:%s1222] %v1237
                  %v1239 = vld [vmem:[%s1229 + $0x8] sm:%s1222]
                  %1240 = vst [vmem:[%s1230 + $0x10] sm:%s1222] %v1239
                  %v1241 = vld [vmem:[%s1229 + $0xa] sm:%s1222]
                  %1242 = vst [vmem:[%s1230 + $0x14] sm:%s1222] %v1241
                  %v1243 = vld [vmem:[%s1229 + $0xc] sm:%s1222]
                  %1244 = vst [vmem:[%s1230 + $0x18] sm:%s1222] %v1243
                  %v1245 = vld [vmem:[%s1229 + $0xe] sm:%s1222]
                  %1246 = vst [vmem:[%s1230 + $0x1c] sm:%s1222] %v1245
                $region109: #{enhanced_bilstm_forward.4} parent=96 // loop_footer
                  %s1228 = sadd.s32 1, %s1224
                $region110: #{enhanced_bilstm_forward.4} parent=96 // loop_footer_branch
                  %1223 = sbr.rel target = $region106
                $region111: #{enhanced_bilstm_forward.4} parent=96 // loop_exit
                  _
              $region97: #{enhanced_bilstm_forward.4} parent=81 // pred_fallthru
                _
            $region82: #{enhanced_bilstm_forward.4} parent=77 // pred_fallthru
              _
            // Predicated region
            $region83: #{enhanced_bilstm_forward.4} parent=77 // pred_check
              _
            $region84: #{enhanced_bilstm_forward.4} parent=77 // pred_check_branch
              %1184 = sbr.rel (0) target = $region86
            $region85: #{enhanced_bilstm_forward.4} parent=77 // pred_region
              %s1186 = ssub.s32 4, 1
              loop: start=0, step=1, limit=1
              $region87: #{enhanced_bilstm_forward.4} parent=85 // loop_pre_header
                _
              $region88: #{enhanced_bilstm_forward.4} parent=85 // loop_header
                %s1188 = sphi 0, %s1192
                %p1189 = scmp.ge.s32.totalorder %s1188, 1
                %s1193 = sphi %s1173, %s1173
                %s1194 = sphi %s1178, %s1178
              $region89: #{enhanced_bilstm_forward.4} parent=85 // loop_header_branch
                %1191 = sbr.rel (%p1189) target = $region93
              $region90: #{enhanced_bilstm_forward.4} parent=85 // loop_body
                %v1195 = vld [vmem:[%s1193] sm:%s1186]
                %1196 = vst [vmem:[%s1194] sm:%s1186] %v1195
                %v1197 = vld [vmem:[%s1193 + $0x2] sm:%s1186]
                %1198 = vst [vmem:[%s1194 + $0x4] sm:%s1186] %v1197
                %v1199 = vld [vmem:[%s1193 + $0x4] sm:%s1186]
                %1200 = vst [vmem:[%s1194 + $0x8] sm:%s1186] %v1199
                %v1201 = vld [vmem:[%s1193 + $0x6] sm:%s1186]
                %1202 = vst [vmem:[%s1194 + $0xc] sm:%s1186] %v1201
                %v1203 = vld [vmem:[%s1193 + $0x8] sm:%s1186]
                %1204 = vst [vmem:[%s1194 + $0x10] sm:%s1186] %v1203
                %v1205 = vld [vmem:[%s1193 + $0xa] sm:%s1186]
                %1206 = vst [vmem:[%s1194 + $0x14] sm:%s1186] %v1205
                %v1207 = vld [vmem:[%s1193 + $0xc] sm:%s1186]
                %1208 = vst [vmem:[%s1194 + $0x18] sm:%s1186] %v1207
                %v1209 = vld [vmem:[%s1193 + $0xe] sm:%s1186]
                %1210 = vst [vmem:[%s1194 + $0x1c] sm:%s1186] %v1209
              $region91: #{enhanced_bilstm_forward.4} parent=85 // loop_footer
                %s1192 = sadd.s32 1, %s1188
              $region92: #{enhanced_bilstm_forward.4} parent=85 // loop_footer_branch
                %1187 = sbr.rel target = $region88
              $region93: #{enhanced_bilstm_forward.4} parent=85 // loop_exit
                _
            $region86: #{enhanced_bilstm_forward.4} parent=77 // pred_fallthru
              _
          $region78: #{enhanced_bilstm_forward.4} parent=73 // pred_fallthru
            _
          %1247 = vnop
        $region74: #{enhanced_bilstm_forward.4} parent=54 // pred_fallthru
          _
      $region55: #{enhanced_bilstm_forward.4} parent=5 // pred_fallthru
        _
      %p1248 = scmp.le.s32.totalorder 2, %s13
      // Predicated region
      $region112: #{enhanced_bilstm_forward.4} parent=5 // pred_check
        %p1249 = pneg %p1248
      $region113: #{enhanced_bilstm_forward.4} parent=5 // pred_check_branch
        %1251 = sbr.rel (%p1249) target = $region115
      $region114: #{enhanced_bilstm_forward.4} parent=5 // pred_region
        %s1252 = ssub.s32 %s13, 2
        // Predicated region
        $region116: #{enhanced_bilstm_forward.4} parent=114 // pred_check
          %p1253 = pneg %p141
        $region117: #{enhanced_bilstm_forward.4} parent=114 // pred_check_branch
          %1255 = sbr.rel (%p1253) target = $region119
        $region118: #{enhanced_bilstm_forward.4} parent=114 // pred_region
          %s1256 = sand.u32 %s126, 1
          %s1257 = sand.u32 %s126, 1
          %s1258 = smul.addr %s1257, 16
          %s1259 = scalar_lea.vmem [#allocation6], %s1258
        $region119: #{enhanced_bilstm_forward.4} parent=114 // pred_fallthru
          _
      $region115: #{enhanced_bilstm_forward.4} parent=5 // pred_fallthru
        _
    $region6: #{enhanced_bilstm_forward.4} parent=1 // loop_footer
      %s17 = sadd.s32 1, %s13
    $region7: #{enhanced_bilstm_forward.4} parent=1 // loop_footer_branch
      %12 = sbr.rel target = $region3
    $region8: #{enhanced_bilstm_forward.4} parent=1 // loop_exit
      _
    %1260 = vsyncpa [#allocation4], 1
    %s1261 = scalar_lea.sflag [#allocation4], 1
    %1262 = vsyncpa %s1261, 1

// kernel: enhanced_bilstm_forward.5
$region0: #{enhanced_bilstm_forward.5}
  #allocation0 [shape = 'u32[]', space=smem, size = 0x4, offset = 0x4, fixed_abs, tag = 'smem constant byte address 0x4 - core index']
  #allocation1 [shape = 'u32[144,128]{1,0:T(1,128)}', space=vmem, size = 0x12000, scoped, tag = 'internal scratch']
  %s0 = inlined_call_operand.vmem [shape: f32[8,2,256], index: 0, kind: input, shape index: {}]
  %s1 = inlined_call_operand.vmem [shape: f32[256,256], index: 1, kind: input, shape index: {}]
  %s2 = inlined_call_operand.vmem [shape: f32[1,256], index: 2, kind: input, shape index: {}]
  %s3 = inlined_call_operand.vmem [shape: f32[256,1], index: 3, kind: input, shape index: {}]
  %s4 = inlined_call_operand.vmem [shape: f32[768,2], index: 4, kind: input, shape index: {}]
  %s5 = inlined_call_operand.vmem [shape: f32[1,2], index: 5, kind: input, shape index: {}]
  %s6 = inlined_call_operand.hbm [shape: f32[2,2], index: 6, kind: output, shape index: {}]
  %s7 = sld [smem:[#allocation0]]
  $region34: #{enhanced_bilstm_forward.5} parent=0
    _
  %s9 = ssub.s32 1, %s7
  %s10 = scalar_select 0, %s9, %s7
  $region1: #{enhanced_bilstm_forward.5} parent=0
    #allocation2 [shape = 'u8[1024]{0}', space=vmem, size = 0x400, scoped, tag = 'output window, operand 0, single buffered']
    #allocation3 [shape = 's32[1]{0}', space=sflag, size = 0x4, scoped, tag = 'scoped memory for enhanced_bilstm_forward.5']
    %11 = vsyncpa [#allocation3], 0
    // Predicated region
    $region2: #{enhanced_bilstm_forward.5} parent=1 // pred_check
      _
    $region3: #{enhanced_bilstm_forward.5} parent=1 // pred_check_branch
      %13 = sbr.rel (0) target = $region5
    $region4: #{enhanced_bilstm_forward.5} parent=1 // pred_region
      _
    $region5: #{enhanced_bilstm_forward.5} parent=1 // pred_fallthru
      _
    // Predicated region
    $region6: #{enhanced_bilstm_forward.5} parent=1 // pred_check
      _
    $region7: #{enhanced_bilstm_forward.5} parent=1 // pred_check_branch
      %15 = sbr.rel (0) target = $region9
    $region8: #{enhanced_bilstm_forward.5} parent=1 // pred_region
      _
    $region9: #{enhanced_bilstm_forward.5} parent=1 // pred_fallthru
      _
    // Predicated region
    $region10: #{enhanced_bilstm_forward.5} parent=1 // pred_check
      _
    $region11: #{enhanced_bilstm_forward.5} parent=1 // pred_check_branch
      %17 = sbr.rel (0) target = $region13
    $region12: #{enhanced_bilstm_forward.5} parent=1 // pred_region
      _
    $region13: #{enhanced_bilstm_forward.5} parent=1 // pred_fallthru
      _
    // Predicated region
    $region14: #{enhanced_bilstm_forward.5} parent=1 // pred_check
      _
    $region15: #{enhanced_bilstm_forward.5} parent=1 // pred_check_branch
      %19 = sbr.rel (0) target = $region17
    $region16: #{enhanced_bilstm_forward.5} parent=1 // pred_region
      _
    $region17: #{enhanced_bilstm_forward.5} parent=1 // pred_fallthru
      _
    // Predicated region
    $region18: #{enhanced_bilstm_forward.5} parent=1 // pred_check
      _
    $region19: #{enhanced_bilstm_forward.5} parent=1 // pred_check_branch
      %21 = sbr.rel (0) target = $region21
    $region20: #{enhanced_bilstm_forward.5} parent=1 // pred_region
      _
    $region21: #{enhanced_bilstm_forward.5} parent=1 // pred_fallthru
      _
    // Predicated region
    $region22: #{enhanced_bilstm_forward.5} parent=1 // pred_check
      _
    $region23: #{enhanced_bilstm_forward.5} parent=1 // pred_check_branch
      %23 = sbr.rel (0) target = $region25
    $region24: #{enhanced_bilstm_forward.5} parent=1 // pred_region
      _
    $region25: #{enhanced_bilstm_forward.5} parent=1 // pred_fallthru
      _
    %v24 = vld [vmem:[%s0] sm:$0xf]
    %v25 = vld [vmem:[%s0 + $0x4] sm:$0xf]
    %v26 = vld [vmem:[%s0 + $0x8] sm:$0xf]
    %v27 = vld [vmem:[%s0 + $0xc] sm:$0xf]
    %v28 = vld [vmem:[%s0 + $0x10] sm:$0xf]
    %v29 = vld [vmem:[%s0 + $0x14] sm:$0xf]
    %v30 = vld [vmem:[%s0 + $0x18] sm:$0xf]
    %v31 = vld [vmem:[%s0 + $0x1c] sm:$0xf]
    %v32 = vld [vmem:[%s1] sm:$0xff]
    %v33 = vld [vmem:[%s1 + $0x8] sm:$0xff]
    %v34 = vld [vmem:[%s1 + $0x10] sm:$0xff]
    %v35 = vld [vmem:[%s1 + $0x18] sm:$0xff]
    %v36 = vld [vmem:[%s1 + $0x20] sm:$0xff]
    %v37 = vld [vmem:[%s1 + $0x28] sm:$0xff]
    %v38 = vld [vmem:[%s1 + $0x30] sm:$0xff]
    %v39 = vld [vmem:[%s1 + $0x38] sm:$0xff]
    %v40 = vld [vmem:[%s1 + $0x40] sm:$0xff]
    %v41 = vld [vmem:[%s1 + $0x48] sm:$0xff]
    %v42 = vld [vmem:[%s1 + $0x50] sm:$0xff]
    %v43 = vld [vmem:[%s1 + $0x58] sm:$0xff]
    %v44 = vld [vmem:[%s1 + $0x60] sm:$0xff]
    %v45 = vld [vmem:[%s1 + $0x68] sm:$0xff]
    %v46 = vld [vmem:[%s1 + $0x70] sm:$0xff]
    %v47 = vld [vmem:[%s1 + $0x78] sm:$0xff]
    %v48 = vld [vmem:[%s1 + $0x80] sm:$0xff]
    %v49 = vld [vmem:[%s1 + $0x88] sm:$0xff]
    %v50 = vld [vmem:[%s1 + $0x90] sm:$0xff]
    %v51 = vld [vmem:[%s1 + $0x98] sm:$0xff]
    %v52 = vld [vmem:[%s1 + $0xa0] sm:$0xff]
    %v53 = vld [vmem:[%s1 + $0xa8] sm:$0xff]
    %v54 = vld [vmem:[%s1 + $0xb0] sm:$0xff]
    %v55 = vld [vmem:[%s1 + $0xb8] sm:$0xff]
    %v56 = vld [vmem:[%s1 + $0xc0] sm:$0xff]
    %v57 = vld [vmem:[%s1 + $0xc8] sm:$0xff]
    %v58 = vld [vmem:[%s1 + $0xd0] sm:$0xff]
    %v59 = vld [vmem:[%s1 + $0xd8] sm:$0xff]
    %v60 = vld [vmem:[%s1 + $0xe0] sm:$0xff]
    %v61 = vld [vmem:[%s1 + $0xe8] sm:$0xff]
    %v62 = vld [vmem:[%s1 + $0xf0] sm:$0xff]
    %v63 = vld [vmem:[%s1 + $0xf8] sm:$0xff]
    %v64 = vld [vmem:[%s1 + $0x100] sm:$0xff]
    %v65 = vld [vmem:[%s1 + $0x108] sm:$0xff]
    %v66 = vld [vmem:[%s1 + $0x110] sm:$0xff]
    %v67 = vld [vmem:[%s1 + $0x118] sm:$0xff]
    %v68 = vld [vmem:[%s1 + $0x120] sm:$0xff]
    %v69 = vld [vmem:[%s1 + $0x128] sm:$0xff]
    %v70 = vld [vmem:[%s1 + $0x130] sm:$0xff]
    %v71 = vld [vmem:[%s1 + $0x138] sm:$0xff]
    %v72 = vld [vmem:[%s1 + $0x140] sm:$0xff]
    %v73 = vld [vmem:[%s1 + $0x148] sm:$0xff]
    %v74 = vld [vmem:[%s1 + $0x150] sm:$0xff]
    %v75 = vld [vmem:[%s1 + $0x158] sm:$0xff]
    %v76 = vld [vmem:[%s1 + $0x160] sm:$0xff]
    %v77 = vld [vmem:[%s1 + $0x168] sm:$0xff]
    %v78 = vld [vmem:[%s1 + $0x170] sm:$0xff]
    %v79 = vld [vmem:[%s1 + $0x178] sm:$0xff]
    %v80 = vld [vmem:[%s1 + $0x180] sm:$0xff]
    %v81 = vld [vmem:[%s1 + $0x188] sm:$0xff]
    %v82 = vld [vmem:[%s1 + $0x190] sm:$0xff]
    %v83 = vld [vmem:[%s1 + $0x198] sm:$0xff]
    %v84 = vld [vmem:[%s1 + $0x1a0] sm:$0xff]
    %v85 = vld [vmem:[%s1 + $0x1a8] sm:$0xff]
    %v86 = vld [vmem:[%s1 + $0x1b0] sm:$0xff]
    %v87 = vld [vmem:[%s1 + $0x1b8] sm:$0xff]
    %v88 = vld [vmem:[%s1 + $0x1c0] sm:$0xff]
    %v89 = vld [vmem:[%s1 + $0x1c8] sm:$0xff]
    %v90 = vld [vmem:[%s1 + $0x1d0] sm:$0xff]
    %v91 = vld [vmem:[%s1 + $0x1d8] sm:$0xff]
    %v92 = vld [vmem:[%s1 + $0x1e0] sm:$0xff]
    %v93 = vld [vmem:[%s1 + $0x1e8] sm:$0xff]
    %v94 = vld [vmem:[%s1 + $0x1f0] sm:$0xff]
    %v95 = vld [vmem:[%s1 + $0x1f8] sm:$0xff]
    %v96 = vld [vmem:[%s2] sm:$0x3]
    %v98 = vlaneseq
    %v99 = vshrl.u32 %v98, 7
    %v100 = vsub.s32 0, %v99
    %v101 = vrot.slane %v96, %v100
    %v102 = vlaneseq
    %v103 = vshrl.u32 %v102, 7
    %v104 = vsub.s32 1, %v103
    %v105 = vrot.slane %v96, %v104
    %v106 = vcombine.low %v101, %v105
    %v108 = vunpack.c.l.s4 1983009808
    %v109 = vunpack.c.0.s8 %v108
    %v110 = vlaneseq
    %v111 = vshrl.u32 %v110, 7
    %v112 = vsub.s32 %v109, %v111
    %v113 = vrot.slane %v106, %v112
    %v122 = vcombine.low %v24, %v25
    %v123 = vcombine.low %v26, %v27
    %v125 = vunpack.c.l.s4 1983009808
    %v126 = vunpack.c.0.s8 %v125
    %v127 = vlaneseq
    %v128 = vshrl.u32 %v127, 7
    %v129 = vsub.s32 %v126, %v128
    %v130 = vrot.slane %v122, %v129
    %v132 = vunpack.c.l.s4 1983009808
    %v133 = vunpack.c.0.s8 %v132
    %v134 = vlaneseq
    %v135 = vshrl.u32 %v134, 7
    %v136 = vsub.s32 %v133, %v135
    %v137 = vrot.slane %v123, %v136
    %v138 = vcombine.low %v130, %v137
    %v139 = vcombine.high %v130, %v137
    %v140 = vcombine.low %v28, %v29
    %v141 = vcombine.low %v30, %v31
    %v143 = vunpack.c.l.s4 1983009808
    %v144 = vunpack.c.0.s8 %v143
    %v145 = vlaneseq
    %v146 = vshrl.u32 %v145, 7
    %v147 = vsub.s32 %v144, %v146
    %v148 = vrot.slane %v140, %v147
    %v150 = vunpack.c.l.s4 1983009808
    %v151 = vunpack.c.0.s8 %v150
    %v152 = vlaneseq
    %v153 = vshrl.u32 %v152, 7
    %v154 = vsub.s32 %v151, %v153
    %v155 = vrot.slane %v141, %v154
    %v156 = vcombine.low %v148, %v155
    %v157 = vcombine.high %v148, %v155
    %v162 = vcombine.low %v113, %v113
    %v164 = vunpack.c.l.s4 1983009808
    %v165 = vunpack.c.0.s8 %v164
    %v166 = vlaneseq
    %v167 = vshrl.u32 %v166, 7
    %v168 = vsub.s32 %v165, %v167
    %v169 = vrot.slane %v162, %v168
    %v170 = vcombine.low %v169, %v169
    %v171 = vcombine.high %v169, %v169
    %174 = vmatprep.subr.mxu0 %v63
    %175 = vmatpush1.msra.mxu0 %v62
    %176 = vmatprep.subr.mxu0 %v61
    %177 = vmatpush1.msra.mxu0 %v60
    %178 = vmatprep.subr.mxu0 %v59
    %179 = vmatpush1.msra.mxu0 %v58
    %180 = vmatprep.subr.mxu0 %v57
    %181 = vmatpush1.msra.mxu0 %v56
    %182 = vmatprep.subr.mxu0 %v55
    %183 = vmatpush1.msra.mxu0 %v54
    %184 = vmatprep.subr.mxu0 %v53
    %185 = vmatpush1.msra.mxu0 %v52
    %186 = vmatprep.subr.mxu0 %v51
    %187 = vmatpush1.msra.mxu0 %v50
    %188 = vmatprep.subr.mxu0 %v49
    %189 = vmatpush1.msra.mxu0 %v48
    %190 = vmatprep.subr.mxu0 %v47
    %191 = vmatpush1.msra.mxu0 %v46
    %192 = vmatprep.subr.mxu0 %v45
    %193 = vmatpush1.msra.mxu0 %v44
    %194 = vmatprep.subr.mxu0 %v43
    %195 = vmatpush1.msra.mxu0 %v42
    %196 = vmatprep.subr.mxu0 %v41
    %197 = vmatpush1.msra.mxu0 %v40
    %198 = vmatprep.subr.mxu0 %v39
    %199 = vmatpush1.msra.mxu0 %v38
    %200 = vmatprep.subr.mxu0 %v37
    %201 = vmatpush1.msra.mxu0 %v36
    %202 = vmatprep.subr.mxu0 %v35
    %203 = vmatpush1.msra.mxu0 %v34
    %204 = vmatprep.subr.mxu0 %v33
    %205 = vmatpush1.msra.mxu0 %v32
    %206 = vmatprep.subr.mxu0 %v95
    %207 = vmatpush2.msra.mxu0 %v94
    %208 = vmatprep.subr.mxu0 %v93
    %209 = vmatpush2.msra.mxu0 %v92
    %210 = vmatprep.subr.mxu0 %v91
    %211 = vmatpush2.msra.mxu0 %v90
    %212 = vmatprep.subr.mxu0 %v89
    %213 = vmatpush2.msra.mxu0 %v88
    %214 = vmatprep.subr.mxu0 %v87
    %215 = vmatpush2.msra.mxu0 %v86
    %216 = vmatprep.subr.mxu0 %v85
    %217 = vmatpush2.msra.mxu0 %v84
    %218 = vmatprep.subr.mxu0 %v83
    %219 = vmatpush2.msra.mxu0 %v82
    %220 = vmatprep.subr.mxu0 %v81
    %221 = vmatpush2.msra.mxu0 %v80
    %222 = vmatprep.subr.mxu0 %v79
    %223 = vmatpush2.msra.mxu0 %v78
    %224 = vmatprep.subr.mxu0 %v77
    %225 = vmatpush2.msra.mxu0 %v76
    %226 = vmatprep.subr.mxu0 %v75
    %227 = vmatpush2.msra.mxu0 %v74
    %228 = vmatprep.subr.mxu0 %v73
    %229 = vmatpush2.msra.mxu0 %v72
    %230 = vmatprep.subr.mxu0 %v71
    %231 = vmatpush2.msra.mxu0 %v70
    %232 = vmatprep.subr.mxu0 %v69
    %233 = vmatpush2.msra.mxu0 %v68
    %234 = vmatprep.subr.mxu0 %v67
    %235 = vmatpush2.msra.mxu0 %v66
    %236 = vmatprep.subr.mxu0 %v65
    %237 = vmatpush2.msra.mxu0 %v64
    %238 = vmatprep.mubr.f32.mxu0 %v139
    %239 = vmatmul.mubr.f32.gmra.mxu0 %v138
    %v240 = vpop.f32.mrf.mxu0
    %v241 = vadd.f32 %v170, %v240
    %v242 = vpop.f32.mrf.mxu0
    %v243 = vadd.f32 %v171, %v242
    %244 = vmatprep.mubr.f32.mxu0 %v157
    %245 = vmatmul.mubr.f32.gmra.mxu0 %v156
    %v246 = vpop.f32.mrf.mxu0
    %v247 = vadd.f32 %v170, %v246
    %v248 = vpop.f32.mrf.mxu0
    %v249 = vadd.f32 %v171, %v248
    %250 = vdwg.mxu0
    %v255 = vcombine.low %v241, %v243
    %v256 = vcombine.high %v241, %v243
    %v258 = vunpack.c.l.s4 1983009808
    %v259 = vunpack.c.0.s8 %v258
    %v260 = vlaneseq
    %v261 = vshrl.u32 %v260, 7
    %v262 = vsub.s32 %v259, %v261
    %v263 = vrot.slane %v255, %v262
    %v265 = vunpack.c.l.s4 1983009808
    %v266 = vunpack.c.0.s8 %v265
    %v267 = vlaneseq
    %v268 = vshrl.u32 %v267, 7
    %v269 = vsub.s32 %v266, %v268
    %v270 = vrot.slane %v256, %v269
    %v271 = vcombine.high %v263, %v263
    %v272 = vcombine.high %v270, %v270
    %v273 = vcombine.low %v247, %v249
    %v274 = vcombine.high %v247, %v249
    %v276 = vunpack.c.l.s4 1983009808
    %v277 = vunpack.c.0.s8 %v276
    %v278 = vlaneseq
    %v279 = vshrl.u32 %v278, 7
    %v280 = vsub.s32 %v277, %v279
    %v281 = vrot.slane %v273, %v280
    %v283 = vunpack.c.l.s4 1983009808
    %v284 = vunpack.c.0.s8 %v283
    %v285 = vlaneseq
    %v286 = vshrl.u32 %v285, 7
    %v287 = vsub.s32 %v284, %v286
    %v288 = vrot.slane %v274, %v287
    %v289 = vcombine.high %v281, %v281
    %v290 = vcombine.high %v288, %v288
    %v299 = vtanh.pop %v263
    %v300 = vtanh.pop %v271
    %v301 = vtanh.pop %v270
    %v302 = vtanh.pop %v272
    %v303 = vtanh.pop %v281
    %v304 = vtanh.pop %v289
    %v305 = vtanh.pop %v288
    %v306 = vtanh.pop %v290
    %v307 = vld [vmem:[%s3] sm:$0xff]
    %v308 = vld [vmem:[%s3 + $0x8] sm:$0xff]
    %v309 = vld [vmem:[%s3 + $0x10] sm:$0xff]
    %v310 = vld [vmem:[%s3 + $0x18] sm:$0xff]
    %v311 = vld [vmem:[%s3 + $0x20] sm:$0xff]
    %v312 = vld [vmem:[%s3 + $0x28] sm:$0xff]
    %v313 = vld [vmem:[%s3 + $0x30] sm:$0xff]
    %v314 = vld [vmem:[%s3 + $0x38] sm:$0xff]
    %v315 = vld [vmem:[%s3 + $0x40] sm:$0xff]
    %v316 = vld [vmem:[%s3 + $0x48] sm:$0xff]
    %v317 = vld [vmem:[%s3 + $0x50] sm:$0xff]
    %v318 = vld [vmem:[%s3 + $0x58] sm:$0xff]
    %v319 = vld [vmem:[%s3 + $0x60] sm:$0xff]
    %v320 = vld [vmem:[%s3 + $0x68] sm:$0xff]
    %v321 = vld [vmem:[%s3 + $0x70] sm:$0xff]
    %v322 = vld [vmem:[%s3 + $0x78] sm:$0xff]
    %v323 = vld [vmem:[%s3 + $0x80] sm:$0xff]
    %v324 = vld [vmem:[%s3 + $0x88] sm:$0xff]
    %v325 = vld [vmem:[%s3 + $0x90] sm:$0xff]
    %v326 = vld [vmem:[%s3 + $0x98] sm:$0xff]
    %v327 = vld [vmem:[%s3 + $0xa0] sm:$0xff]
    %v328 = vld [vmem:[%s3 + $0xa8] sm:$0xff]
    %v329 = vld [vmem:[%s3 + $0xb0] sm:$0xff]
    %v330 = vld [vmem:[%s3 + $0xb8] sm:$0xff]
    %v331 = vld [vmem:[%s3 + $0xc0] sm:$0xff]
    %v332 = vld [vmem:[%s3 + $0xc8] sm:$0xff]
    %v333 = vld [vmem:[%s3 + $0xd0] sm:$0xff]
    %v334 = vld [vmem:[%s3 + $0xd8] sm:$0xff]
    %v335 = vld [vmem:[%s3 + $0xe0] sm:$0xff]
    %v336 = vld [vmem:[%s3 + $0xe8] sm:$0xff]
    %v337 = vld [vmem:[%s3 + $0xf0] sm:$0xff]
    %v338 = vld [vmem:[%s3 + $0xf8] sm:$0xff]
    %v347 = vcombine.low %v299, %v300
    %v348 = vcombine.low %v301, %v302
    %v350 = vunpack.c.l.s4 1983009808
    %v351 = vunpack.c.0.s8 %v350
    %v352 = vlaneseq
    %v353 = vshrl.u32 %v352, 7
    %v354 = vsub.s32 %v351, %v353
    %v355 = vrot.slane %v347, %v354
    %v357 = vunpack.c.l.s4 1983009808
    %v358 = vunpack.c.0.s8 %v357
    %v359 = vlaneseq
    %v360 = vshrl.u32 %v359, 7
    %v361 = vsub.s32 %v358, %v360
    %v362 = vrot.slane %v348, %v361
    %v363 = vcombine.low %v355, %v362
    %v364 = vcombine.high %v355, %v362
    %v365 = vcombine.low %v303, %v304
    %v366 = vcombine.low %v305, %v306
    %v368 = vunpack.c.l.s4 1983009808
    %v369 = vunpack.c.0.s8 %v368
    %v370 = vlaneseq
    %v371 = vshrl.u32 %v370, 7
    %v372 = vsub.s32 %v369, %v371
    %v373 = vrot.slane %v365, %v372
    %v375 = vunpack.c.l.s4 1983009808
    %v376 = vunpack.c.0.s8 %v375
    %v377 = vlaneseq
    %v378 = vshrl.u32 %v377, 7
    %v379 = vsub.s32 %v376, %v378
    %v380 = vrot.slane %v366, %v379
    %v381 = vcombine.low %v373, %v380
    %v382 = vcombine.high %v373, %v380
    %387 = vmatprep.subr.mxu0 0.0
    %388 = vmatpush1.msra.mxu0 %v322
    %389 = vmatprep.subr.mxu0 0.0
    %390 = vmatpush1.msra.mxu0 %v321
    %391 = vmatprep.subr.mxu0 0.0
    %392 = vmatpush1.msra.mxu0 %v320
    %393 = vmatprep.subr.mxu0 0.0
    %394 = vmatpush1.msra.mxu0 %v319
    %395 = vmatprep.subr.mxu0 0.0
    %396 = vmatpush1.msra.mxu0 %v318
    %397 = vmatprep.subr.mxu0 0.0
    %398 = vmatpush1.msra.mxu0 %v317
    %399 = vmatprep.subr.mxu0 0.0
    %400 = vmatpush1.msra.mxu0 %v316
    %401 = vmatprep.subr.mxu0 0.0
    %402 = vmatpush1.msra.mxu0 %v315
    %403 = vmatprep.subr.mxu0 0.0
    %404 = vmatpush1.msra.mxu0 %v314
    %405 = vmatprep.subr.mxu0 0.0
    %406 = vmatpush1.msra.mxu0 %v313
    %407 = vmatprep.subr.mxu0 0.0
    %408 = vmatpush1.msra.mxu0 %v312
    %409 = vmatprep.subr.mxu0 0.0
    %410 = vmatpush1.msra.mxu0 %v311
    %411 = vmatprep.subr.mxu0 0.0
    %412 = vmatpush1.msra.mxu0 %v310
    %413 = vmatprep.subr.mxu0 0.0
    %414 = vmatpush1.msra.mxu0 %v309
    %415 = vmatprep.subr.mxu0 0.0
    %416 = vmatpush1.msra.mxu0 %v308
    %417 = vmatprep.subr.mxu0 0.0
    %418 = vmatpush1.msra.mxu0 %v307
    %419 = vmatprep.subr.mxu0 0.0
    %420 = vmatpush2.msra.mxu0 %v338
    %421 = vmatprep.subr.mxu0 0.0
    %422 = vmatpush2.msra.mxu0 %v337
    %423 = vmatprep.subr.mxu0 0.0
    %424 = vmatpush2.msra.mxu0 %v336
    %425 = vmatprep.subr.mxu0 0.0
    %426 = vmatpush2.msra.mxu0 %v335
    %427 = vmatprep.subr.mxu0 0.0
    %428 = vmatpush2.msra.mxu0 %v334
    %429 = vmatprep.subr.mxu0 0.0
    %430 = vmatpush2.msra.mxu0 %v333
    %431 = vmatprep.subr.mxu0 0.0
    %432 = vmatpush2.msra.mxu0 %v332
    %433 = vmatprep.subr.mxu0 0.0
    %434 = vmatpush2.msra.mxu0 %v331
    %435 = vmatprep.subr.mxu0 0.0
    %436 = vmatpush2.msra.mxu0 %v330
    %437 = vmatprep.subr.mxu0 0.0
    %438 = vmatpush2.msra.mxu0 %v329
    %439 = vmatprep.subr.mxu0 0.0
    %440 = vmatpush2.msra.mxu0 %v328
    %441 = vmatprep.subr.mxu0 0.0
    %442 = vmatpush2.msra.mxu0 %v327
    %443 = vmatprep.subr.mxu0 0.0
    %444 = vmatpush2.msra.mxu0 %v326
    %445 = vmatprep.subr.mxu0 0.0
    %446 = vmatpush2.msra.mxu0 %v325
    %447 = vmatprep.subr.mxu0 0.0
    %448 = vmatpush2.msra.mxu0 %v324
    %449 = vmatprep.subr.mxu0 0.0
    %450 = vmatpush2.msra.mxu0 %v323
    %451 = vmatprep.mubr.f32.mxu0 %v364
    %452 = vmatmul.mubr.f32.gmra.mxu0 %v363
    %v453 = vpop.f32.mrf.mxu0
    %v454 = vadd.f32 0.0, %v453
    %v455 = vpop.f32.mrf.mxu0
    %456 = vmatprep.mubr.f32.mxu0 %v382
    %457 = vmatmul.mubr.f32.gmra.mxu0 %v381
    %v458 = vpop.f32.mrf.mxu0
    %v459 = vadd.f32 0.0, %v458
    %v460 = vpop.f32.mrf.mxu0
    %461 = vdwg.mxu0
    %v464 = vcombine.high %v454, %v454
    %v466 = vunpack.c.l.s4 1983009808
    %v467 = vunpack.c.0.s8 %v466
    %v468 = vlaneseq
    %v469 = vshrl.u32 %v468, 7
    %v470 = vsub.s32 %v467, %v469
    %v471 = vrot.slane %v454, %v470
    %v473 = vunpack.c.l.s4 1983009808
    %v474 = vunpack.c.0.s8 %v473
    %v475 = vlaneseq
    %v476 = vshrl.u32 %v475, 7
    %v477 = vsub.s32 %v474, %v476
    %v478 = vrot.slane %v464, %v477
    %v479 = vcombine.high %v471, %v471
    %v480 = vcombine.high %v478, %v478
    %v481 = vcombine.high %v459, %v459
    %v483 = vunpack.c.l.s4 1983009808
    %v484 = vunpack.c.0.s8 %v483
    %v485 = vlaneseq
    %v486 = vshrl.u32 %v485, 7
    %v487 = vsub.s32 %v484, %v486
    %v488 = vrot.slane %v459, %v487
    %v490 = vunpack.c.l.s4 1983009808
    %v491 = vunpack.c.0.s8 %v490
    %v492 = vlaneseq
    %v493 = vshrl.u32 %v492, 7
    %v494 = vsub.s32 %v491, %v493
    %v495 = vrot.slane %v481, %v494
    %v496 = vcombine.high %v488, %v488
    %v497 = vcombine.high %v495, %v495
    %vm506 = vcmask 1024
    %v507 = vsel %vm506, %v471, -inf
    %v508 = vsel %vm506, %v479, -inf
    %v509 = vsel %vm506, %v478, -inf
    %v510 = vsel %vm506, %v480, -inf
    %v511 = vsel %vm506, %v488, -inf
    %v512 = vmax.f32 %v507, %v511
    %v513 = vsel %vm506, %v496, -inf
    %v514 = vmax.f32 %v508, %v513
    %v515 = vsel %vm506, %v495, -inf
    %v516 = vmax.f32 %v509, %v515
    %v517 = vsel %vm506, %v497, -inf
    %v518 = vmax.f32 %v510, %v517
    %v519 = vmax.f32 %v512, %v514
    %v520 = vmax.f32 %v516, %v518
    %v521 = vmax.f32 %v519, %v520
    %v522 = vsub.f32 %v471, %v521
    %v523 = vsub.f32 %v479, %v521
    %v524 = vsub.f32 %v478, %v521
    %v525 = vsub.f32 %v480, %v521
    %v526 = vsub.f32 %v488, %v521
    %v527 = vsub.f32 %v496, %v521
    %v528 = vsub.f32 %v495, %v521
    %v529 = vsub.f32 %v497, %v521
    %v530 = vmul.f32 %v522, 1.442695
    %v531 = vpow.pop %v530
    %v532 = vmul.f32 %v523, 1.442695
    %v533 = vpow.pop %v532
    %v534 = vmul.f32 %v524, 1.442695
    %v535 = vpow.pop %v534
    %v536 = vmul.f32 %v525, 1.442695
    %v537 = vpow.pop %v536
    %v538 = vmul.f32 %v526, 1.442695
    %v539 = vpow.pop %v538
    %v540 = vmul.f32 %v527, 1.442695
    %v541 = vpow.pop %v540
    %v542 = vmul.f32 %v528, 1.442695
    %v543 = vpow.pop %v542
    %v544 = vmul.f32 %v529, 1.442695
    %v545 = vpow.pop %v544
    %v546 = vsel %vm506, %v531, 0.0
    %v547 = vsel %vm506, %v533, 0.0
    %v548 = vadd.f32 %v546, %v547
    %v549 = vsel %vm506, %v535, 0.0
    %v550 = vadd.f32 %v548, %v549
    %v551 = vsel %vm506, %v537, 0.0
    %v552 = vadd.f32 %v550, %v551
    %v553 = vsel %vm506, %v539, 0.0
    %v554 = vadd.f32 %v552, %v553
    %v555 = vsel %vm506, %v541, 0.0
    %v556 = vadd.f32 %v554, %v555
    %v557 = vsel %vm506, %v543, 0.0
    %v558 = vadd.f32 %v556, %v557
    %v559 = vsel %vm506, %v545, 0.0
    %v560 = vadd.f32 %v558, %v559
    %v561 = vrcp.pop %v560
    %v562 = vmul.f32 %v531, %v561
    %v563 = vmul.f32 %v533, %v561
    %v564 = vmul.f32 %v535, %v561
    %v565 = vmul.f32 %v537, %v561
    %v566 = vmul.f32 %v539, %v561
    %v567 = vmul.f32 %v541, %v561
    %v568 = vmul.f32 %v543, %v561
    %v569 = vmul.f32 %v545, %v561
    %571 = vset.pattern.permute.xlu0 0
    %572 = vperm.xlu0 %571, %v562
    %v573 = vpop.permute.xlu0 %572
    %v576 = vunpack.c.l.s4 269488144
    %v577 = vunpack.c.0.s8 %v576
    %v578 = vlaneseq
    %v579 = vshrl.u32 %v578, 7
    %v580 = vsub.s32 %v577, %v579
    %v581 = vrot.slane %v573, %v580
    %583 = vset.pattern.permute.xlu0 0
    %584 = vperm.xlu0 %583, %v563
    %v585 = vpop.permute.xlu0 %584
    %v588 = vunpack.c.l.s4 269488144
    %v589 = vunpack.c.0.s8 %v588
    %v590 = vlaneseq
    %v591 = vshrl.u32 %v590, 7
    %v592 = vsub.s32 %v589, %v591
    %v593 = vrot.slane %v585, %v592
    %595 = vset.pattern.permute.xlu0 0
    %596 = vperm.xlu0 %595, %v564
    %v597 = vpop.permute.xlu0 %596
    %v600 = vunpack.c.l.s4 269488144
    %v601 = vunpack.c.0.s8 %v600
    %v602 = vlaneseq
    %v603 = vshrl.u32 %v602, 7
    %v604 = vsub.s32 %v601, %v603
    %v605 = vrot.slane %v597, %v604
    %607 = vset.pattern.permute.xlu0 0
    %608 = vperm.xlu0 %607, %v565
    %v609 = vpop.permute.xlu0 %608
    %v612 = vunpack.c.l.s4 269488144
    %v613 = vunpack.c.0.s8 %v612
    %v614 = vlaneseq
    %v615 = vshrl.u32 %v614, 7
    %v616 = vsub.s32 %v613, %v615
    %v617 = vrot.slane %v609, %v616
    %619 = vset.pattern.permute.xlu0 0
    %620 = vperm.xlu0 %619, %v566
    %v621 = vpop.permute.xlu0 %620
    %v624 = vunpack.c.l.s4 269488144
    %v625 = vunpack.c.0.s8 %v624
    %v626 = vlaneseq
    %v627 = vshrl.u32 %v626, 7
    %v628 = vsub.s32 %v625, %v627
    %v629 = vrot.slane %v621, %v628
    %631 = vset.pattern.permute.xlu0 0
    %632 = vperm.xlu0 %631, %v567
    %v633 = vpop.permute.xlu0 %632
    %v636 = vunpack.c.l.s4 269488144
    %v637 = vunpack.c.0.s8 %v636
    %v638 = vlaneseq
    %v639 = vshrl.u32 %v638, 7
    %v640 = vsub.s32 %v637, %v639
    %v641 = vrot.slane %v633, %v640
    %643 = vset.pattern.permute.xlu0 0
    %644 = vperm.xlu0 %643, %v568
    %v645 = vpop.permute.xlu0 %644
    %v648 = vunpack.c.l.s4 269488144
    %v649 = vunpack.c.0.s8 %v648
    %v650 = vlaneseq
    %v651 = vshrl.u32 %v650, 7
    %v652 = vsub.s32 %v649, %v651
    %v653 = vrot.slane %v645, %v652
    %655 = vset.pattern.permute.xlu0 0
    %656 = vperm.xlu0 %655, %v569
    %v657 = vpop.permute.xlu0 %656
    %v660 = vunpack.c.l.s4 269488144
    %v661 = vunpack.c.0.s8 %v660
    %v662 = vlaneseq
    %v663 = vshrl.u32 %v662, 7
    %v664 = vsub.s32 %v661, %v663
    %v665 = vrot.slane %v657, %v664
    %v666 = vmul.f32 %v24, %v581
    %v667 = vmul.f32 %v25, %v593
    %v668 = vmul.f32 %v26, %v605
    %v669 = vmul.f32 %v27, %v617
    %v670 = vmul.f32 %v28, %v629
    %v671 = vmul.f32 %v29, %v641
    %v672 = vmul.f32 %v30, %v653
    %v673 = vmul.f32 %v31, %v665
    %v683 = vunpack.c.l.s4 1983009808
    %v684 = vunpack.c.0.s8 %v683
    %v685 = vlaneseq
    %v686 = vshrl.u32 %v685, 7
    %v687 = vsub.s32 %v684, %v686
    %v688 = vrot.slane %v666, %v687
    %v689 = vcombine.high %v688, %v688
    %v691 = vunpack.c.l.s4 1983009808
    %v692 = vunpack.c.0.s8 %v691
    %v693 = vlaneseq
    %v694 = vshrl.u32 %v693, 7
    %v695 = vsub.s32 %v692, %v694
    %v696 = vrot.slane %v667, %v695
    %v697 = vcombine.high %v696, %v696
    %v699 = vunpack.c.l.s4 1983009808
    %v700 = vunpack.c.0.s8 %v699
    %v701 = vlaneseq
    %v702 = vshrl.u32 %v701, 7
    %v703 = vsub.s32 %v700, %v702
    %v704 = vrot.slane %v668, %v703
    %v705 = vcombine.high %v704, %v704
    %v707 = vunpack.c.l.s4 1983009808
    %v708 = vunpack.c.0.s8 %v707
    %v709 = vlaneseq
    %v710 = vshrl.u32 %v709, 7
    %v711 = vsub.s32 %v708, %v710
    %v712 = vrot.slane %v669, %v711
    %v713 = vcombine.high %v712, %v712
    %v715 = vunpack.c.l.s4 1983009808
    %v716 = vunpack.c.0.s8 %v715
    %v717 = vlaneseq
    %v718 = vshrl.u32 %v717, 7
    %v719 = vsub.s32 %v716, %v718
    %v720 = vrot.slane %v670, %v719
    %v721 = vcombine.high %v720, %v720
    %v723 = vunpack.c.l.s4 1983009808
    %v724 = vunpack.c.0.s8 %v723
    %v725 = vlaneseq
    %v726 = vshrl.u32 %v725, 7
    %v727 = vsub.s32 %v724, %v726
    %v728 = vrot.slane %v671, %v727
    %v729 = vcombine.high %v728, %v728
    %v731 = vunpack.c.l.s4 1983009808
    %v732 = vunpack.c.0.s8 %v731
    %v733 = vlaneseq
    %v734 = vshrl.u32 %v733, 7
    %v735 = vsub.s32 %v732, %v734
    %v736 = vrot.slane %v672, %v735
    %v737 = vcombine.high %v736, %v736
    %v739 = vunpack.c.l.s4 1983009808
    %v740 = vunpack.c.0.s8 %v739
    %v741 = vlaneseq
    %v742 = vshrl.u32 %v741, 7
    %v743 = vsub.s32 %v740, %v742
    %v744 = vrot.slane %v673, %v743
    %v745 = vcombine.high %v744, %v744
    %vm762 = vcmask 1041408
    %v763 = vsel %vm762, %v688, 0.0
    %v764 = vsel %vm762, %v696, 0.0
    %v765 = vadd.f32 %v763, %v764
    %v766 = vsel %vm762, %v704, 0.0
    %v767 = vadd.f32 %v765, %v766
    %v768 = vsel %vm762, %v712, 0.0
    %v769 = vadd.f32 %v767, %v768
    %v770 = vsel %vm762, %v720, 0.0
    %v771 = vadd.f32 %v769, %v770
    %v772 = vsel %vm762, %v728, 0.0
    %v773 = vadd.f32 %v771, %v772
    %v774 = vsel %vm762, %v736, 0.0
    %v775 = vadd.f32 %v773, %v774
    %v776 = vsel %vm762, %v744, 0.0
    %v777 = vadd.f32 %v775, %v776
    %v778 = vsel %vm762, %v689, 0.0
    %v779 = vsel %vm762, %v697, 0.0
    %v780 = vadd.f32 %v778, %v779
    %v781 = vsel %vm762, %v705, 0.0
    %v782 = vadd.f32 %v780, %v781
    %v783 = vsel %vm762, %v713, 0.0
    %v784 = vadd.f32 %v782, %v783
    %v785 = vsel %vm762, %v721, 0.0
    %v786 = vadd.f32 %v784, %v785
    %v787 = vsel %vm762, %v729, 0.0
    %v788 = vadd.f32 %v786, %v787
    %v789 = vsel %vm762, %v737, 0.0
    %v790 = vadd.f32 %v788, %v789
    %v791 = vsel %vm762, %v745, 0.0
    %v792 = vadd.f32 %v790, %v791
    %v794 = vunpack.c.l.s4 1983009808
    %v795 = vunpack.c.0.s8 %v794
    %v796 = vlaneseq
    %v797 = vshrl.u32 %v796, 7
    %v798 = vsub.s32 %v795, %v797
    %v799 = vrot.slane %v24, %v798
    %v800 = vcombine.high %v799, %v799
    %v802 = vunpack.c.l.s4 1983009808
    %v803 = vunpack.c.0.s8 %v802
    %v804 = vlaneseq
    %v805 = vshrl.u32 %v804, 7
    %v806 = vsub.s32 %v803, %v805
    %v807 = vrot.slane %v25, %v806
    %v808 = vcombine.high %v807, %v807
    %v810 = vunpack.c.l.s4 1983009808
    %v811 = vunpack.c.0.s8 %v810
    %v812 = vlaneseq
    %v813 = vshrl.u32 %v812, 7
    %v814 = vsub.s32 %v811, %v813
    %v815 = vrot.slane %v26, %v814
    %v816 = vcombine.high %v815, %v815
    %v818 = vunpack.c.l.s4 1983009808
    %v819 = vunpack.c.0.s8 %v818
    %v820 = vlaneseq
    %v821 = vshrl.u32 %v820, 7
    %v822 = vsub.s32 %v819, %v821
    %v823 = vrot.slane %v27, %v822
    %v824 = vcombine.high %v823, %v823
    %v826 = vunpack.c.l.s4 1983009808
    %v827 = vunpack.c.0.s8 %v826
    %v828 = vlaneseq
    %v829 = vshrl.u32 %v828, 7
    %v830 = vsub.s32 %v827, %v829
    %v831 = vrot.slane %v28, %v830
    %v832 = vcombine.high %v831, %v831
    %v834 = vunpack.c.l.s4 1983009808
    %v835 = vunpack.c.0.s8 %v834
    %v836 = vlaneseq
    %v837 = vshrl.u32 %v836, 7
    %v838 = vsub.s32 %v835, %v837
    %v839 = vrot.slane %v29, %v838
    %v840 = vcombine.high %v839, %v839
    %v842 = vunpack.c.l.s4 1983009808
    %v843 = vunpack.c.0.s8 %v842
    %v844 = vlaneseq
    %v845 = vshrl.u32 %v844, 7
    %v846 = vsub.s32 %v843, %v845
    %v847 = vrot.slane %v30, %v846
    %v848 = vcombine.high %v847, %v847
    %v850 = vunpack.c.l.s4 1983009808
    %v851 = vunpack.c.0.s8 %v850
    %v852 = vlaneseq
    %v853 = vshrl.u32 %v852, 7
    %v854 = vsub.s32 %v851, %v853
    %v855 = vrot.slane %v31, %v854
    %v856 = vcombine.high %v855, %v855
    %v873 = vsel %vm762, %v799, 0.0
    %v874 = vsel %vm762, %v807, 0.0
    %v875 = vadd.f32 %v873, %v874
    %v876 = vsel %vm762, %v815, 0.0
    %v877 = vadd.f32 %v875, %v876
    %v878 = vsel %vm762, %v823, 0.0
    %v879 = vadd.f32 %v877, %v878
    %v880 = vsel %vm762, %v831, 0.0
    %v881 = vadd.f32 %v879, %v880
    %v882 = vsel %vm762, %v839, 0.0
    %v883 = vadd.f32 %v881, %v882
    %v884 = vsel %vm762, %v847, 0.0
    %v885 = vadd.f32 %v883, %v884
    %v886 = vsel %vm762, %v855, 0.0
    %v887 = vadd.f32 %v885, %v886
    %v888 = vsel %vm762, %v800, 0.0
    %v889 = vsel %vm762, %v808, 0.0
    %v890 = vadd.f32 %v888, %v889
    %v891 = vsel %vm762, %v816, 0.0
    %v892 = vadd.f32 %v890, %v891
    %v893 = vsel %vm762, %v824, 0.0
    %v894 = vadd.f32 %v892, %v893
    %v895 = vsel %vm762, %v832, 0.0
    %v896 = vadd.f32 %v894, %v895
    %v897 = vsel %vm762, %v840, 0.0
    %v898 = vadd.f32 %v896, %v897
    %v899 = vsel %vm762, %v848, 0.0
    %v900 = vadd.f32 %v898, %v899
    %v901 = vsel %vm762, %v856, 0.0
    %v902 = vadd.f32 %v900, %v901
    %v903 = vmul.f32 %v887, 0.125
    %v904 = vmul.f32 %v902, 0.125
    %vm905 = vcmask 1043458
    %vm906 = vmor %vm905, %vm762
    %v907 = vsel %vm906, %v24, -inf
    %v908 = vsel %vm906, %v25, -inf
    %v909 = vsel %vm906, %v26, -inf
    %v910 = vsel %vm906, %v27, -inf
    %v911 = vsel %vm906, %v28, -inf
    %v912 = vmax.f32 %v907, %v911
    %v913 = vsel %vm906, %v29, -inf
    %v914 = vmax.f32 %v908, %v913
    %v915 = vsel %vm906, %v30, -inf
    %v916 = vmax.f32 %v909, %v915
    %v917 = vsel %vm906, %v31, -inf
    %v918 = vmax.f32 %v910, %v917
    %v919 = vmax.f32 %v912, %v914
    %v920 = vmax.f32 %v916, %v918
    %v921 = vmax.f32 %v919, %v920
    %v922 = vld [vmem:[%s4] sm:$0xff]
    %v923 = vld [vmem:[%s4 + $0x8] sm:$0xff]
    %v924 = vld [vmem:[%s4 + $0x10] sm:$0xff]
    %v925 = vld [vmem:[%s4 + $0x18] sm:$0xff]
    %v926 = vld [vmem:[%s4 + $0x20] sm:$0xff]
    %v927 = vld [vmem:[%s4 + $0x28] sm:$0xff]
    %v928 = vld [vmem:[%s4 + $0x30] sm:$0xff]
    %v929 = vld [vmem:[%s4 + $0x38] sm:$0xff]
    %v930 = vld [vmem:[%s4 + $0x40] sm:$0xff]
    %v931 = vld [vmem:[%s4 + $0x48] sm:$0xff]
    %v932 = vld [vmem:[%s4 + $0x50] sm:$0xff]
    %v933 = vld [vmem:[%s4 + $0x58] sm:$0xff]
    %v934 = vld [vmem:[%s4 + $0x60] sm:$0xff]
    %v935 = vld [vmem:[%s4 + $0x68] sm:$0xff]
    %v936 = vld [vmem:[%s4 + $0x70] sm:$0xff]
    %v937 = vld [vmem:[%s4 + $0x78] sm:$0xff]
    %v938 = vld [vmem:[%s4 + $0x80] sm:$0xff]
    %v939 = vld [vmem:[%s4 + $0x88] sm:$0xff]
    %v940 = vld [vmem:[%s4 + $0x90] sm:$0xff]
    %v941 = vld [vmem:[%s4 + $0x98] sm:$0xff]
    %v942 = vld [vmem:[%s4 + $0xa0] sm:$0xff]
    %v943 = vld [vmem:[%s4 + $0xa8] sm:$0xff]
    %v944 = vld [vmem:[%s4 + $0xb0] sm:$0xff]
    %v945 = vld [vmem:[%s4 + $0xb8] sm:$0xff]
    %v946 = vld [vmem:[%s4 + $0xc0] sm:$0xff]
    %v947 = vld [vmem:[%s4 + $0xc8] sm:$0xff]
    %v948 = vld [vmem:[%s4 + $0xd0] sm:$0xff]
    %v949 = vld [vmem:[%s4 + $0xd8] sm:$0xff]
    %v950 = vld [vmem:[%s4 + $0xe0] sm:$0xff]
    %v951 = vld [vmem:[%s4 + $0xe8] sm:$0xff]
    %v952 = vld [vmem:[%s4 + $0xf0] sm:$0xff]
    %v953 = vld [vmem:[%s4 + $0xf8] sm:$0xff]
    %v954 = vld [vmem:[%s4 + $0x100] sm:$0xff]
    %v955 = vld [vmem:[%s4 + $0x108] sm:$0xff]
    %v956 = vld [vmem:[%s4 + $0x110] sm:$0xff]
    %v957 = vld [vmem:[%s4 + $0x118] sm:$0xff]
    %v958 = vld [vmem:[%s4 + $0x120] sm:$0xff]
    %v959 = vld [vmem:[%s4 + $0x128] sm:$0xff]
    %v960 = vld [vmem:[%s4 + $0x130] sm:$0xff]
    %v961 = vld [vmem:[%s4 + $0x138] sm:$0xff]
    %v962 = vld [vmem:[%s4 + $0x140] sm:$0xff]
    %v963 = vld [vmem:[%s4 + $0x148] sm:$0xff]
    %v964 = vld [vmem:[%s4 + $0x150] sm:$0xff]
    %v965 = vld [vmem:[%s4 + $0x158] sm:$0xff]
    %v966 = vld [vmem:[%s4 + $0x160] sm:$0xff]
    %v967 = vld [vmem:[%s4 + $0x168] sm:$0xff]
    %v968 = vld [vmem:[%s4 + $0x170] sm:$0xff]
    %v969 = vld [vmem:[%s4 + $0x178] sm:$0xff]
    %v970 = vld [vmem:[%s4 + $0x180] sm:$0xff]
    %v971 = vld [vmem:[%s4 + $0x188] sm:$0xff]
    %v972 = vld [vmem:[%s4 + $0x190] sm:$0xff]
    %v973 = vld [vmem:[%s4 + $0x198] sm:$0xff]
    %v974 = vld [vmem:[%s4 + $0x1a0] sm:$0xff]
    %v975 = vld [vmem:[%s4 + $0x1a8] sm:$0xff]
    %v976 = vld [vmem:[%s4 + $0x1b0] sm:$0xff]
    %v977 = vld [vmem:[%s4 + $0x1b8] sm:$0xff]
    %v978 = vld [vmem:[%s4 + $0x1c0] sm:$0xff]
    %v979 = vld [vmem:[%s4 + $0x1c8] sm:$0xff]
    %v980 = vld [vmem:[%s4 + $0x1d0] sm:$0xff]
    %v981 = vld [vmem:[%s4 + $0x1d8] sm:$0xff]
    %v982 = vld [vmem:[%s4 + $0x1e0] sm:$0xff]
    %v983 = vld [vmem:[%s4 + $0x1e8] sm:$0xff]
    %v984 = vld [vmem:[%s4 + $0x1f0] sm:$0xff]
    %v985 = vld [vmem:[%s4 + $0x1f8] sm:$0xff]
    %v986 = vld [vmem:[%s4 + $0x200] sm:$0xff]
    %v987 = vld [vmem:[%s4 + $0x208] sm:$0xff]
    %v988 = vld [vmem:[%s4 + $0x210] sm:$0xff]
    %v989 = vld [vmem:[%s4 + $0x218] sm:$0xff]
    %v990 = vld [vmem:[%s4 + $0x220] sm:$0xff]
    %v991 = vld [vmem:[%s4 + $0x228] sm:$0xff]
    %v992 = vld [vmem:[%s4 + $0x230] sm:$0xff]
    %v993 = vld [vmem:[%s4 + $0x238] sm:$0xff]
    %v994 = vld [vmem:[%s4 + $0x240] sm:$0xff]
    %v995 = vld [vmem:[%s4 + $0x248] sm:$0xff]
    %v996 = vld [vmem:[%s4 + $0x250] sm:$0xff]
    %v997 = vld [vmem:[%s4 + $0x258] sm:$0xff]
    %v998 = vld [vmem:[%s4 + $0x260] sm:$0xff]
    %v999 = vld [vmem:[%s4 + $0x268] sm:$0xff]
    %v1000 = vld [vmem:[%s4 + $0x270] sm:$0xff]
    %v1001 = vld [vmem:[%s4 + $0x278] sm:$0xff]
    %v1002 = vld [vmem:[%s4 + $0x280] sm:$0xff]
    %v1003 = vld [vmem:[%s4 + $0x288] sm:$0xff]
    %v1004 = vld [vmem:[%s4 + $0x290] sm:$0xff]
    %v1005 = vld [vmem:[%s4 + $0x298] sm:$0xff]
    %v1006 = vld [vmem:[%s4 + $0x2a0] sm:$0xff]
    %v1007 = vld [vmem:[%s4 + $0x2a8] sm:$0xff]
    %v1008 = vld [vmem:[%s4 + $0x2b0] sm:$0xff]
    %v1009 = vld [vmem:[%s4 + $0x2b8] sm:$0xff]
    %v1010 = vld [vmem:[%s4 + $0x2c0] sm:$0xff]
    %v1011 = vld [vmem:[%s4 + $0x2c8] sm:$0xff]
    %v1012 = vld [vmem:[%s4 + $0x2d0] sm:$0xff]
    %v1013 = vld [vmem:[%s4 + $0x2d8] sm:$0xff]
    %v1014 = vld [vmem:[%s4 + $0x2e0] sm:$0xff]
    %v1015 = vld [vmem:[%s4 + $0x2e8] sm:$0xff]
    %v1016 = vld [vmem:[%s4 + $0x2f0] sm:$0xff]
    %v1017 = vld [vmem:[%s4 + $0x2f8] sm:$0xff]
    %1018 = vmatprep.subr.mxu0 0.0
    %1019 = vmatpush1.msra.mxu0 %v969
    %1020 = vmatprep.subr.mxu0 0.0
    %1021 = vmatpush1.msra.mxu0 %v968
    %1022 = vmatprep.subr.mxu0 0.0
    %1023 = vmatpush1.msra.mxu0 %v967
    %1024 = vmatprep.subr.mxu0 0.0
    %1025 = vmatpush1.msra.mxu0 %v966
    %1026 = vmatprep.subr.mxu0 0.0
    %1027 = vmatpush1.msra.mxu0 %v965
    %1028 = vmatprep.subr.mxu0 0.0
    %1029 = vmatpush1.msra.mxu0 %v964
    %1030 = vmatprep.subr.mxu0 0.0
    %1031 = vmatpush1.msra.mxu0 %v963
    %1032 = vmatprep.subr.mxu0 0.0
    %1033 = vmatpush1.msra.mxu0 %v962
    %1034 = vmatprep.subr.mxu0 0.0
    %1035 = vmatpush1.msra.mxu0 %v961
    %1036 = vmatprep.subr.mxu0 0.0
    %1037 = vmatpush1.msra.mxu0 %v960
    %1038 = vmatprep.subr.mxu0 0.0
    %1039 = vmatpush1.msra.mxu0 %v959
    %1040 = vmatprep.subr.mxu0 0.0
    %1041 = vmatpush1.msra.mxu0 %v958
    %1042 = vmatprep.subr.mxu0 0.0
    %1043 = vmatpush1.msra.mxu0 %v957
    %1044 = vmatprep.subr.mxu0 0.0
    %1045 = vmatpush1.msra.mxu0 %v956
    %1046 = vmatprep.subr.mxu0 0.0
    %1047 = vmatpush1.msra.mxu0 %v955
    %1048 = vmatprep.subr.mxu0 0.0
    %1049 = vmatpush1.msra.mxu0 %v954
    %1050 = vmatprep.subr.mxu0 0.0
    %1051 = vmatpush2.msra.mxu0 %v985
    %1052 = vmatprep.subr.mxu0 0.0
    %1053 = vmatpush2.msra.mxu0 %v984
    %1054 = vmatprep.subr.mxu0 0.0
    %1055 = vmatpush2.msra.mxu0 %v983
    %1056 = vmatprep.subr.mxu0 0.0
    %1057 = vmatpush2.msra.mxu0 %v982
    %1058 = vmatprep.subr.mxu0 0.0
    %1059 = vmatpush2.msra.mxu0 %v981
    %1060 = vmatprep.subr.mxu0 0.0
    %1061 = vmatpush2.msra.mxu0 %v980
    %1062 = vmatprep.subr.mxu0 0.0
    %1063 = vmatpush2.msra.mxu0 %v979
    %1064 = vmatprep.subr.mxu0 0.0
    %1065 = vmatpush2.msra.mxu0 %v978
    %1066 = vmatprep.subr.mxu0 0.0
    %1067 = vmatpush2.msra.mxu0 %v977
    %1068 = vmatprep.subr.mxu0 0.0
    %1069 = vmatpush2.msra.mxu0 %v976
    %1070 = vmatprep.subr.mxu0 0.0
    %1071 = vmatpush2.msra.mxu0 %v975
    %1072 = vmatprep.subr.mxu0 0.0
    %1073 = vmatpush2.msra.mxu0 %v974
    %1074 = vmatprep.subr.mxu0 0.0
    %1075 = vmatpush2.msra.mxu0 %v973
    %1076 = vmatprep.subr.mxu0 0.0
    %1077 = vmatpush2.msra.mxu0 %v972
    %1078 = vmatprep.subr.mxu0 0.0
    %1079 = vmatpush2.msra.mxu0 %v971
    %1080 = vmatprep.subr.mxu0 0.0
    %1081 = vmatpush2.msra.mxu0 %v970
    %1082 = vmatprep.mubr.f32.mxu0 %v904
    %1083 = vmatmul.mubr.f32.gmra.mxu0 %v903
    %v1084 = vpop.f32.mrf.mxu0
    %v1085 = vadd.f32 0.0, %v1084
    %v1086 = vpop.f32.mrf.mxu0
    %1087 = vdwg.mxu0
    %1088 = vmatprep.subr.mxu0 0.0
    %1089 = vmatpush1.msra.mxu0 %v937
    %1090 = vmatprep.subr.mxu0 0.0
    %1091 = vmatpush1.msra.mxu0 %v936
    %1092 = vmatprep.subr.mxu0 0.0
    %1093 = vmatpush1.msra.mxu0 %v935
    %1094 = vmatprep.subr.mxu0 0.0
    %1095 = vmatpush1.msra.mxu0 %v934
    %1096 = vmatprep.subr.mxu0 0.0
    %1097 = vmatpush1.msra.mxu0 %v933
    %1098 = vmatprep.subr.mxu0 0.0
    %1099 = vmatpush1.msra.mxu0 %v932
    %1100 = vmatprep.subr.mxu0 0.0
    %1101 = vmatpush1.msra.mxu0 %v931
    %1102 = vmatprep.subr.mxu0 0.0
    %1103 = vmatpush1.msra.mxu0 %v930
    %1104 = vmatprep.subr.mxu0 0.0
    %1105 = vmatpush1.msra.mxu0 %v929
    %1106 = vmatprep.subr.mxu0 0.0
    %1107 = vmatpush1.msra.mxu0 %v928
    %1108 = vmatprep.subr.mxu0 0.0
    %1109 = vmatpush1.msra.mxu0 %v927
    %1110 = vmatprep.subr.mxu0 0.0
    %1111 = vmatpush1.msra.mxu0 %v926
    %1112 = vmatprep.subr.mxu0 0.0
    %1113 = vmatpush1.msra.mxu0 %v925
    %1114 = vmatprep.subr.mxu0 0.0
    %1115 = vmatpush1.msra.mxu0 %v924
    %1116 = vmatprep.subr.mxu0 0.0
    %1117 = vmatpush1.msra.mxu0 %v923
    %1118 = vmatprep.subr.mxu0 0.0
    %1119 = vmatpush1.msra.mxu0 %v922
    %1120 = vmatprep.subr.mxu0 0.0
    %1121 = vmatpush2.msra.mxu0 %v953
    %1122 = vmatprep.subr.mxu0 0.0
    %1123 = vmatpush2.msra.mxu0 %v952
    %1124 = vmatprep.subr.mxu0 0.0
    %1125 = vmatpush2.msra.mxu0 %v951
    %1126 = vmatprep.subr.mxu0 0.0
    %1127 = vmatpush2.msra.mxu0 %v950
    %1128 = vmatprep.subr.mxu0 0.0
    %1129 = vmatpush2.msra.mxu0 %v949
    %1130 = vmatprep.subr.mxu0 0.0
    %1131 = vmatpush2.msra.mxu0 %v948
    %1132 = vmatprep.subr.mxu0 0.0
    %1133 = vmatpush2.msra.mxu0 %v947
    %1134 = vmatprep.subr.mxu0 0.0
    %1135 = vmatpush2.msra.mxu0 %v946
    %1136 = vmatprep.subr.mxu0 0.0
    %1137 = vmatpush2.msra.mxu0 %v945
    %1138 = vmatprep.subr.mxu0 0.0
    %1139 = vmatpush2.msra.mxu0 %v944
    %1140 = vmatprep.subr.mxu0 0.0
    %1141 = vmatpush2.msra.mxu0 %v943
    %1142 = vmatprep.subr.mxu0 0.0
    %1143 = vmatpush2.msra.mxu0 %v942
    %1144 = vmatprep.subr.mxu0 0.0
    %1145 = vmatpush2.msra.mxu0 %v941
    %1146 = vmatprep.subr.mxu0 0.0
    %1147 = vmatpush2.msra.mxu0 %v940
    %1148 = vmatprep.subr.mxu0 0.0
    %1149 = vmatpush2.msra.mxu0 %v939
    %1150 = vmatprep.subr.mxu0 0.0
    %1151 = vmatpush2.msra.mxu0 %v938
    %1152 = vmatprep.mubr.f32.mxu0 %v792
    %1153 = vmatmul.mubr.f32.gmra.mxu0 %v777
    %v1154 = vpop.f32.mrf.mxu0
    %v1155 = vadd.f32 %v1085, %v1154
    %v1156 = vpop.f32.mrf.mxu0
    %1157 = vdwg.mxu0
    %v1160 = vunpack.c.l.s4 1983009808
    %v1161 = vunpack.c.0.s8 %v1160
    %v1162 = vlaneseq
    %v1163 = vshrl.u32 %v1162, 7
    %v1164 = vsub.s32 %v1161, %v1163
    %v1165 = vrot.slane %v921, %v1164
    %v1166 = vcombine.high %v1165, %v1165
    %1169 = vmatprep.subr.mxu0 0.0
    %1170 = vmatpush1.msra.mxu0 %v1001
    %1171 = vmatprep.subr.mxu0 0.0
    %1172 = vmatpush1.msra.mxu0 %v1000
    %1173 = vmatprep.subr.mxu0 0.0
    %1174 = vmatpush1.msra.mxu0 %v999
    %1175 = vmatprep.subr.mxu0 0.0
    %1176 = vmatpush1.msra.mxu0 %v998
    %1177 = vmatprep.subr.mxu0 0.0
    %1178 = vmatpush1.msra.mxu0 %v997
    %1179 = vmatprep.subr.mxu0 0.0
    %1180 = vmatpush1.msra.mxu0 %v996
    %1181 = vmatprep.subr.mxu0 0.0
    %1182 = vmatpush1.msra.mxu0 %v995
    %1183 = vmatprep.subr.mxu0 0.0
    %1184 = vmatpush1.msra.mxu0 %v994
    %1185 = vmatprep.subr.mxu0 0.0
    %1186 = vmatpush1.msra.mxu0 %v993
    %1187 = vmatprep.subr.mxu0 0.0
    %1188 = vmatpush1.msra.mxu0 %v992
    %1189 = vmatprep.subr.mxu0 0.0
    %1190 = vmatpush1.msra.mxu0 %v991
    %1191 = vmatprep.subr.mxu0 0.0
    %1192 = vmatpush1.msra.mxu0 %v990
    %1193 = vmatprep.subr.mxu0 0.0
    %1194 = vmatpush1.msra.mxu0 %v989
    %1195 = vmatprep.subr.mxu0 0.0
    %1196 = vmatpush1.msra.mxu0 %v988
    %1197 = vmatprep.subr.mxu0 0.0
    %1198 = vmatpush1.msra.mxu0 %v987
    %1199 = vmatprep.subr.mxu0 0.0
    %1200 = vmatpush1.msra.mxu0 %v986
    %1201 = vmatprep.subr.mxu0 0.0
    %1202 = vmatpush2.msra.mxu0 %v1017
    %1203 = vmatprep.subr.mxu0 0.0
    %1204 = vmatpush2.msra.mxu0 %v1016
    %1205 = vmatprep.subr.mxu0 0.0
    %1206 = vmatpush2.msra.mxu0 %v1015
    %1207 = vmatprep.subr.mxu0 0.0
    %1208 = vmatpush2.msra.mxu0 %v1014
    %1209 = vmatprep.subr.mxu0 0.0
    %1210 = vmatpush2.msra.mxu0 %v1013
    %1211 = vmatprep.subr.mxu0 0.0
    %1212 = vmatpush2.msra.mxu0 %v1012
    %1213 = vmatprep.subr.mxu0 0.0
    %1214 = vmatpush2.msra.mxu0 %v1011
    %1215 = vmatprep.subr.mxu0 0.0
    %1216 = vmatpush2.msra.mxu0 %v1010
    %1217 = vmatprep.subr.mxu0 0.0
    %1218 = vmatpush2.msra.mxu0 %v1009
    %1219 = vmatprep.subr.mxu0 0.0
    %1220 = vmatpush2.msra.mxu0 %v1008
    %1221 = vmatprep.subr.mxu0 0.0
    %1222 = vmatpush2.msra.mxu0 %v1007
    %1223 = vmatprep.subr.mxu0 0.0
    %1224 = vmatpush2.msra.mxu0 %v1006
    %1225 = vmatprep.subr.mxu0 0.0
    %1226 = vmatpush2.msra.mxu0 %v1005
    %1227 = vmatprep.subr.mxu0 0.0
    %1228 = vmatpush2.msra.mxu0 %v1004
    %1229 = vmatprep.subr.mxu0 0.0
    %1230 = vmatpush2.msra.mxu0 %v1003
    %1231 = vmatprep.subr.mxu0 0.0
    %1232 = vmatpush2.msra.mxu0 %v1002
    %1233 = vmatprep.mubr.f32.mxu0 %v1166
    %1234 = vmatmul.mubr.f32.gmra.mxu0 %v1165
    %v1235 = vpop.f32.mrf.mxu0
    %v1236 = vadd.f32 0.0, %v1235
    %v1237 = vpop.f32.mrf.mxu0
    %1238 = vdwg.mxu0
    %v1239 = vadd.f32 %v1155, %v1236
    %v1240 = vld [vmem:[%s5] sm:$0x1]
    %v1242 = vlaneseq
    %v1243 = vshrl.u32 %v1242, 7
    %v1244 = vsub.s32 0, %v1243
    %v1245 = vrot.slane %v1240, %v1244
    %v1247 = vadd.f32 %v1239, %v1245
    %vm1248 = vcmask 9216
    %1249 = vst.msk [vmem:[#allocation2] sm:$0x3] %vm1248, %v1247
    // Predicated region
    $region26: #{enhanced_bilstm_forward.5} parent=1 // pred_check
      _
    $region27: #{enhanced_bilstm_forward.5} parent=1 // pred_check_branch
      %1251 = sbr.rel (0) target = $region29
    $region28: #{enhanced_bilstm_forward.5} parent=1 // pred_region
      %s1253 = ssub.s32 32, 32
      %1254 = vsyncadd [#allocation3], %s1253
      %s1256 = sshll.u32 [#allocation2], 4
      %s1257 = int_to_ptr.vmem [resolvable:$true] %s1256
      %1259 = dma.vmem_to_hbm [thread:$0]  %s1257, 32, %s6, [#allocation3]
    $region29: #{enhanced_bilstm_forward.5} parent=1 // pred_fallthru
      _
    // Predicated region
    $region30: #{enhanced_bilstm_forward.5} parent=1 // pred_check
      _
    $region31: #{enhanced_bilstm_forward.5} parent=1 // pred_check_branch
      %1261 = sbr.rel (0) target = $region33
    $region32: #{enhanced_bilstm_forward.5} parent=1 // pred_region
      %1262 = dma.done [#allocation3], 32
    $region33: #{enhanced_bilstm_forward.5} parent=1 // pred_fallthru
      _
    %1263 = vsyncpa [#allocation3], 1

</llo_original>
